<compile_context>
chip_gen: v7x
topology: tpu7x:2x2x1
jax: 0.10.0
libtpu: 0.0.40
codegen_flags: <defaults>
</compile_context>

<pallas_src>
import functools

import jax
import jax.numpy as jnp
from jax import lax
from jax.experimental import pallas as pl
from jax.experimental.pallas import tpu as pltpu

D = 512       # hardcoded by nn.Linear(512, 512) in the module
EPS = 1e-12   # F.normalize default eps


def graphnet_kernel(thr_ref, emb1_ref, emb2_ref, iou_ref, kf_ref, wt_ref, b_ref,
                    mp_ref, thrflag_ref, e1n_ref, e2n_ref, *, is_static):
    emb1 = emb1_ref[...]   # (n1p, D) f32 (zero-padded rows)
    emb2 = emb2_ref[...]   # (n2p, D) f32 (zero-padded rows)
    iou = iou_ref[...]     # (n1p, n2p) f32

    # Mp0 = emb1 @ emb2^T: contract the D axes directly (no operand transpose).
    mp0 = lax.dot_general(emb1, emb2, (((1,), (1,)), ((), ())),
                          preferred_element_type=jnp.float32)      # (n1p, n2p)
    if is_static:          # trace-time specialization (seq_name in STATIC set)
        mp0 = mp0 + iou

    # Cross-graph message passing.
    m_emb1 = lax.dot_general(mp0, emb2, (((1,), (0,)), ((), ())),
                             preferred_element_type=jnp.float32)   # (n1p, D)
    m_emb2 = lax.dot_general(mp0, emb1, (((0,), (0,)), ((), ())),
                             preferred_element_type=jnp.float32)   # Mp0^T @ emb1 -> (n2p, D)

    # lambda_i = ||emb_i||_2 / ||m_emb_i||_2 (sqrt * rsqrt -> EUP, no vector divide).
    # Padded (all-zero) rows give NaN here, exactly as 0/0 would in the
    # original; those rows/cols are sliced off in the wrapper.
    s_e1 = jnp.sum(emb1 * emb1, axis=1, keepdims=True)
    s_m1 = jnp.sum(m_emb1 * m_emb1, axis=1, keepdims=True)
    lam1 = jnp.sqrt(s_e1) * lax.rsqrt(s_m1)
    s_e2 = jnp.sum(emb2 * emb2, axis=1, keepdims=True)
    s_m2 = jnp.sum(m_emb2 * m_emb2, axis=1, keepdims=True)
    lam2 = jnp.sqrt(s_e2) * lax.rsqrt(s_m2)

    x1 = emb1 + lam1 * m_emb1          # (n1p, D)
    x2 = emb2 + lam2 * m_emb2          # (n2p, D)

    # Fused shared Linear(512,512): one (n1p+n2p, 512) x (512, 512) matmul,
    # bf16 operands / f32 accumulate; W already transposed to (in, out).
    x_cat = jnp.concatenate([x1, x2], axis=0).astype(jnp.bfloat16)
    wt = wt_ref[...]                    # (D, D) bf16
    b = b_ref[...]                      # (1, D) f32
    y = jnp.dot(x_cat, wt, preferred_element_type=jnp.float32) + b
    e_cat = jnp.maximum(y, 0.0)

    # F.normalize(p=2, dim=1, eps=1e-12): x / max(||x||, eps) == x * rsqrt(max(s, eps^2))
    s = jnp.sum(e_cat * e_cat, axis=1, keepdims=True)
    inv = lax.rsqrt(jnp.maximum(s, EPS * EPS))
    en_cat = e_cat * inv

    n1p = emb1_ref.shape[0]
    e1n = en_cat[:n1p]                  # (n1p, D), split on a sublane boundary (n1p % 8 == 0)
    e2n = en_cat[n1p:]                  # (n2p, D)

    # Mp_before = emb1_new @ emb2_new^T
    mp_before = lax.dot_general(e1n, e2n, (((1,), (1,)), ((), ())),
                                preferred_element_type=jnp.float32)

    # thr_flag[i,j] = 1 iff kf_gate==-1 or iou==0 or Mp_before < reid_thr
    reid_thr = thr_ref[0, 0]
    kf = kf_ref[...]
    flag = (kf == -1.0) | (iou == 0.0) | (mp_before < reid_thr)

    mp_ref[...] = mp_before
    thrflag_ref[...] = flag.astype(jnp.float32)
    e1n_ref[...] = e1n
    e2n_ref[...] = e2n


def _round_up(x, m):
    return ((x + m - 1) // m) * m


@functools.partial(jax.jit, static_argnames=("is_static",))
def graphnet_forward(U_src, U_tgt, iou, kf_gate, W, b, reid_thr, *, is_static):
    """Glue: transpose NCL inputs to (N, D), pad to lane-dense, call kernel."""
    # U_src: (1, 512, n_src), U_tgt: (1, 512, n_tgt)  (torch convention)
    emb1 = jnp.transpose(U_src[0]).astype(jnp.float32)   # (n_src, 512)
    emb2 = jnp.transpose(U_tgt[0]).astype(jnp.float32)   # (n_tgt, 512)
    n1, n2 = emb1.shape[0], emb2.shape[0]
    # TODO(synk): n_src == 0 or n_tgt == 0 must be handled on the host.

    # Pad so (n1p, n2p) outputs are lane/sublane dense (unmasked vst) and the
    # concatenated Linear operand splits on a sublane boundary.
    n1p = max(_round_up(n1, 8), 8)
    n2p = max(_round_up(n2, 128), 128)

    emb1p = jnp.pad(emb1, ((0, n1p - n1), (0, 0)))
    emb2p = jnp.pad(emb2, ((0, n2p - n2), (0, 0)))
    ioup = jnp.pad(iou.astype(jnp.float32), ((0, n1p - n1), (0, n2p - n2)))
    kfp = jnp.pad(kf_gate.astype(jnp.float32), ((0, n1p - n1), (0, n2p - n2)))

    # Pre-transposed bf16 weight: (in=512, out=512). Halves weight DMA; MXU
    # runs native bf16 x bf16 -> f32 accumulate.
    wt = jnp.transpose(W).astype(jnp.bfloat16)
    b2 = jnp.asarray(b, jnp.float32).reshape(1, D)

    thr = jnp.asarray(reid_thr, jnp.float32).reshape(1, 1)

    smem = pl.BlockSpec(memory_space=pltpu.MemorySpace.SMEM)
    vmem = pl.BlockSpec(memory_space=pltpu.MemorySpace.VMEM)

    kernel = functools.partial(graphnet_kernel, is_static=is_static)

    mp_p, flag_p, e1n_p, e2n_p = pl.pallas_call(
        kernel,
        out_shape=(
            jax.ShapeDtypeStruct((n1p, n2p), jnp.float32),   # Mp_before (padded)
            jax.ShapeDtypeStruct((n1p, n2p), jnp.float32),   # thr_flag  (padded)
            jax.ShapeDtypeStruct((n1p, D), jnp.float32),     # emb1_new  (padded)
            jax.ShapeDtypeStruct((n2p, D), jnp.float32),     # emb2_new  (padded)
        ),
        in_specs=[smem, vmem, vmem, vmem, vmem, vmem, vmem],
        out_specs=(vmem, vmem, vmem, vmem),
        compiler_params=pltpu.CompilerParams(vmem_limit_bytes=32 * 1024 * 1024),
    )(thr, emb1p, emb2p, ioup, kfp, wt, b2)

    # Strip padding (padded rows/cols may contain NaN sentinels by design).
    return (mp_p[:n1, :n2], flag_p[:n1, :n2], e1n_p[:n1], e2n_p[:n2])


if __name__ == "__main__":
    key = jax.random.PRNGKey(0)
    k1, k2, k3, k4, k5, k6 = jax.random.split(key, 6)

    n_src, n_tgt = 8, 16  # small detection / track counts

    # Inputs implied by the forward: U_src (1, 512, n_src), U_tgt (1, 512, n_tgt)
    U_src = jax.random.normal(k1, (1, D, n_src), dtype=jnp.float32)
    U_tgt = jax.random.normal(k2, (1, D, n_tgt), dtype=jnp.float32)
    iou = jax.random.uniform(k3, (n_src, n_tgt), dtype=jnp.float32)
    # kf_gate entries are either valid (0) or gated (-1)
    kf_gate = jnp.where(jax.random.uniform(k4, (n_src, n_tgt)) < 0.1, -1.0, 0.0)

    # Deterministic parameters for cross_graph = nn.Linear(512, 512)
    bound = 1.0 / (D ** 0.5)
    W = jax.random.uniform(k5, (D, D), minval=-bound, maxval=bound, dtype=jnp.float32)
    b = jax.random.uniform(k6, (D,), minval=-bound, maxval=bound, dtype=jnp.float32)

    reid_thr = 0.3
    is_static = True  # seq_name in cfg.DATA.STATIC

    outs = graphnet_forward(U_src, U_tgt, iou, kf_gate, W, b, reid_thr,
                            is_static=is_static)
    outs = jax.block_until_ready(outs)

    mp_before, thr_flag, e1n, e2n = outs
    assert mp_before.shape == (n_src, n_tgt)
    assert thr_flag.shape == (n_src, n_tgt)
    assert e1n.shape == (n_src, D) and e2n.shape == (n_tgt, D)
    assert bool(jnp.all(jnp.isfinite(mp_before)))
    print("KERNEL_OK")
</pallas_src>

<mosaic_0001>
module attributes {stable_mosaic.version = 11 : i64} {
  func.func @graphnet_kernel(%arg0: memref<1x1xf32, #tpu.memory_space<smem>>, %arg1: memref<8x512xf32, #tpu.memory_space<vmem>>, %arg2: memref<128x512xf32, #tpu.memory_space<vmem>>, %arg3: memref<8x128xf32, #tpu.memory_space<vmem>>, %arg4: memref<8x128xf32, #tpu.memory_space<vmem>>, %arg5: memref<512x512xbf16, #tpu.memory_space<vmem>>, %arg6: memref<1x512xf32, #tpu.memory_space<vmem>>, %arg7: memref<8x128xf32, #tpu.memory_space<vmem>>, %arg8: memref<8x128xf32, #tpu.memory_space<vmem>>, %arg9: memref<8x512xf32, #tpu.memory_space<vmem>>, %arg10: memref<128x512xf32, #tpu.memory_space<vmem>>) attributes {dimension_semantics = [], scalar_prefetch = 0 : i64, scratch_operands = 0 : i64, tpu.core_type = #tpu.core_type<tc>} {
    %c0 = arith.constant 0 : index
    %c0_0 = arith.constant 0 : index
    %0 = vector.load %arg1[%c0, %c0_0] : memref<8x512xf32, #tpu.memory_space<vmem>>, vector<8x512xf32>
    %c0_1 = arith.constant 0 : index
    %c0_2 = arith.constant 0 : index
    %1 = vector.load %arg2[%c0_1, %c0_2] : memref<128x512xf32, #tpu.memory_space<vmem>>, vector<128x512xf32>
    %c0_3 = arith.constant 0 : index
    %c0_4 = arith.constant 0 : index
    %2 = vector.load %arg3[%c0_3, %c0_4] : memref<8x128xf32, #tpu.memory_space<vmem>>, vector<8x128xf32>
    %cst = arith.constant dense<0.000000e+00> : vector<8x128xf32>
    %3 = tpu.matmul %0, %1, %cst {dimension_numbers = #tpu.dot_dimension_numbers<[1], [1], [0], [0], [0, 0, 1, 0], [], []>} : vector<8x512xf32>, vector<128x512xf32>, vector<8x128xf32> -> vector<8x128xf32>
    %4 = arith.addf %3, %2 : vector<8x128xf32>
    %cst_5 = arith.constant dense<0.000000e+00> : vector<8x512xf32>
    %5 = tpu.matmul %4, %1, %cst_5 {dimension_numbers = #tpu.dot_dimension_numbers<[1], [0], [0], [1], [0, 0, 1, 1], [], []>} : vector<8x128xf32>, vector<128x512xf32>, vector<8x512xf32> -> vector<8x512xf32>
    %cst_6 = arith.constant dense<0.000000e+00> : vector<128x512xf32>
    %6 = tpu.matmul %4, %0, %cst_6 {dimension_numbers = #tpu.dot_dimension_numbers<[0], [0], [1], [1], [0, 1, 1, 1], [], []>} : vector<8x128xf32>, vector<8x512xf32>, vector<128x512xf32> -> vector<128x512xf32>
    %7 = arith.mulf %0, %0 : vector<8x512xf32>
    %cst_7 = arith.constant dense<0.000000e+00> : vector<8xf32>
    %8 = vector.multi_reduction <add>, %7, %cst_7 [1] : vector<8x512xf32> to vector<8xf32>
    %9 = vector.shape_cast %8 : vector<8xf32> to vector<8x1xf32>
    %10 = arith.mulf %5, %5 : vector<8x512xf32>
    %cst_8 = arith.constant dense<0.000000e+00> : vector<8xf32>
    %11 = vector.multi_reduction <add>, %10, %cst_8 [1] : vector<8x512xf32> to vector<8xf32>
    %12 = vector.shape_cast %11 : vector<8xf32> to vector<8x1xf32>
    %13 = math.sqrt %9 : vector<8x1xf32>
    %14 = math.rsqrt %12 : vector<8x1xf32>
    %15 = arith.mulf %13, %14 : vector<8x1xf32>
    %16 = arith.mulf %1, %1 : vector<128x512xf32>
    %cst_9 = arith.constant dense<0.000000e+00> : vector<128xf32>
    %17 = vector.multi_reduction <add>, %16, %cst_9 [1] : vector<128x512xf32> to vector<128xf32>
    %18 = vector.shape_cast %17 : vector<128xf32> to vector<128x1xf32>
    %19 = arith.mulf %6, %6 : vector<128x512xf32>
    %cst_10 = arith.constant dense<0.000000e+00> : vector<128xf32>
    %20 = vector.multi_reduction <add>, %19, %cst_10 [1] : vector<128x512xf32> to vector<128xf32>
    %21 = vector.shape_cast %20 : vector<128xf32> to vector<128x1xf32>
    %22 = math.sqrt %18 : vector<128x1xf32>
    %23 = math.rsqrt %21 : vector<128x1xf32>
    %24 = arith.mulf %22, %23 : vector<128x1xf32>
    %25 = vector.broadcast %15 : vector<8x1xf32> to vector<8x512xf32>
    %26 = arith.mulf %25, %5 : vector<8x512xf32>
    %27 = arith.addf %0, %26 : vector<8x512xf32>
    %28 = vector.broadcast %24 : vector<128x1xf32> to vector<128x512xf32>
    %29 = arith.mulf %28, %6 : vector<128x512xf32>
    %30 = arith.addf %1, %29 : vector<128x512xf32>
    %31 = tpu.concatenate %27, %30 in 0 : vector<8x512xf32>, vector<128x512xf32> -> vector<136x512xf32>
    %32 = arith.truncf %31 : vector<136x512xf32> to vector<136x512xbf16>
    %c0_11 = arith.constant 0 : index
    %c0_12 = arith.constant 0 : index
    %33 = vector.load %arg5[%c0_11, %c0_12] : memref<512x512xbf16, #tpu.memory_space<vmem>>, vector<512x512xbf16>
    %c0_13 = arith.constant 0 : index
    %c0_14 = arith.constant 0 : index
    %34 = vector.load %arg6[%c0_13, %c0_14] : memref<1x512xf32, #tpu.memory_space<vmem>>, vector<1x512xf32>
    %cst_15 = arith.constant dense<0.000000e+00> : vector<136x512xf32>
    %35 = tpu.matmul %32, %33, %cst_15 {dimension_numbers = #tpu.dot_dimension_numbers<[1], [0], [0], [1], [0, 0, 1, 1], [], []>} : vector<136x512xbf16>, vector<512x512xbf16>, vector<136x512xf32> -> vector<136x512xf32>
    %36 = vector.broadcast %34 : vector<1x512xf32> to vector<136x512xf32>
    %37 = arith.addf %35, %36 : vector<136x512xf32>
    %cst_16 = arith.constant 0.000000e+00 : f32
    %38 = vector.broadcast %cst_16 : f32 to vector<136x512xf32>
    %39 = arith.maximumf %37, %38 : vector<136x512xf32>
    %40 = arith.mulf %39, %39 : vector<136x512xf32>
    %cst_17 = arith.constant dense<0.000000e+00> : vector<136xf32>
    %41 = vector.multi_reduction <add>, %40, %cst_17 [1] : vector<136x512xf32> to vector<136xf32>
    %42 = vector.shape_cast %41 : vector<136xf32> to vector<136x1xf32>
    %cst_18 = arith.constant 1.000000e-24 : f32
    %43 = vector.broadcast %cst_18 : f32 to vector<136x1xf32>
    %44 = arith.maximumf %42, %43 : vector<136x1xf32>
    %45 = math.rsqrt %44 : vector<136x1xf32>
    %46 = vector.broadcast %45 : vector<136x1xf32> to vector<136x512xf32>
    %47 = arith.mulf %39, %46 : vector<136x512xf32>
    %48 = vector.extract_strided_slice %47 {offsets = [0, 0], sizes = [8, 512], strides = [1, 1]} : vector<136x512xf32> to vector<8x512xf32>
    %49 = vector.extract_strided_slice %47 {offsets = [8, 0], sizes = [128, 512], strides = [1, 1]} : vector<136x512xf32> to vector<128x512xf32>
    %cst_19 = arith.constant dense<0.000000e+00> : vector<8x128xf32>
    %50 = tpu.matmul %48, %49, %cst_19 {dimension_numbers = #tpu.dot_dimension_numbers<[1], [1], [0], [0], [0, 0, 1, 0], [], []>} : vector<8x512xf32>, vector<128x512xf32>, vector<8x128xf32> -> vector<8x128xf32>
    %c0_20 = arith.constant 0 : index
    %c0_21 = arith.constant 0 : index
    %51 = memref.load %arg0[%c0_20, %c0_21] : memref<1x1xf32, #tpu.memory_space<smem>>
    %c0_22 = arith.constant 0 : index
    %c0_23 = arith.constant 0 : index
    %52 = vector.load %arg4[%c0_22, %c0_23] : memref<8x128xf32, #tpu.memory_space<vmem>>, vector<8x128xf32>
    %cst_24 = arith.constant -1.000000e+00 : f32
    %53 = vector.broadcast %cst_24 : f32 to vector<8x128xf32>
    %54 = arith.cmpf oeq, %52, %53 : vector<8x128xf32>
    %cst_25 = arith.constant 0.000000e+00 : f32
    %55 = vector.broadcast %cst_25 : f32 to vector<8x128xf32>
    %56 = arith.cmpf oeq, %2, %55 : vector<8x128xf32>
    %57 = arith.ori %54, %56 : vector<8x128xi1>
    %58 = vector.broadcast %51 : f32 to vector<8x128xf32>
    %59 = arith.cmpf olt, %50, %58 : vector<8x128xf32>
    %60 = arith.ori %57, %59 : vector<8x128xi1>
    %c0_26 = arith.constant 0 : index
    %c0_27 = arith.constant 0 : index
    %61 = vector.load %arg7[%c0_26, %c0_27] : memref<8x128xf32, #tpu.memory_space<vmem>>, vector<8x128xf32>
    tpu.vector_store %arg7[%c0_26, %c0_27], %50 {strides = array<i32>} : memref<8x128xf32, #tpu.memory_space<vmem>>, vector<8x128xf32>,
    %62 = arith.extui %60 : vector<8x128xi1> to vector<8x128xi32>
    %63 = arith.sitofp %62 : vector<8x128xi32> to vector<8x128xf32>
    %c0_28 = arith.constant 0 : index
    %c0_29 = arith.constant 0 : index
    %64 = vector.load %arg8[%c0_28, %c0_29] : memref<8x128xf32, #tpu.memory_space<vmem>>, vector<8x128xf32>
    tpu.vector_store %arg8[%c0_28, %c0_29], %63 {strides = array<i32>} : memref<8x128xf32, #tpu.memory_space<vmem>>, vector<8x128xf32>,
    %c0_30 = arith.constant 0 : index
    %c0_31 = arith.constant 0 : index
    %65 = vector.load %arg9[%c0_30, %c0_31] : memref<8x512xf32, #tpu.memory_space<vmem>>, vector<8x512xf32>
    tpu.vector_store %arg9[%c0_30, %c0_31], %48 {strides = array<i32>} : memref<8x512xf32, #tpu.memory_space<vmem>>, vector<8x512xf32>,
    %c0_32 = arith.constant 0 : index
    %c0_33 = arith.constant 0 : index
    %66 = vector.load %arg10[%c0_32, %c0_33] : memref<128x512xf32, #tpu.memory_space<vmem>>, vector<128x512xf32>
    tpu.vector_store %arg10[%c0_32, %c0_33], %49 {strides = array<i32>} : memref<128x512xf32, #tpu.memory_space<vmem>>, vector<128x512xf32>,
    return
  }
}

</mosaic_0001>

<llo_original>
// kernel: graphnet_forward.1
$region0: #{graphnet_forward.1}
  #allocation0 [shape = 'u32[]', space=smem, size = 0x4, offset = 0x4, fixed_abs, tag = 'smem constant byte address 0x4 - core index']
  #allocation1 [shape = 'u32[144,128]{1,0:T(1,128)}', space=vmem, size = 0x12000, scoped, tag = 'internal scratch']
  #allocation2 [shape = 'f32[1,1]{1,0:T(1,128)S(6)}', space=smem, size = 0x200, scoped, tag = 'scoped memory for graphnet_forward.1']
  %s0 = inlined_call_operand.<no memory space> [shape: f32[1,1], index: 0, kind: input, shape index: {}]
  %s1 = inlined_call_operand.vmem [shape: f32[8,512], index: 1, kind: input, shape index: {}]
  %s2 = inlined_call_operand.vmem [shape: f32[128,512], index: 2, kind: input, shape index: {}]
  %s3 = inlined_call_operand.vmem [shape: f32[8,128], index: 3, kind: input, shape index: {}]
  %s4 = inlined_call_operand.vmem [shape: f32[8,128], index: 4, kind: input, shape index: {}]
  %s5 = inlined_call_operand.vmem [shape: bf16[512,512], index: 5, kind: input, shape index: {}]
  %s6 = inlined_call_operand.vmem [shape: f32[1,512], index: 6, kind: input, shape index: {}]
  %s7 = inlined_call_operand.hbm [shape: f32[8,128], index: 7, kind: output, shape index: {0}]
  %s8 = inlined_call_operand.hbm [shape: f32[8,128], index: 8, kind: output, shape index: {1}]
  %s9 = inlined_call_operand.hbm [shape: f32[8,512], index: 9, kind: output, shape index: {2}]
  %s10 = inlined_call_operand.vmem [shape: f32[128,512], index: 10, kind: output, shape index: {3}]
  %11 = xla_tuple %s7, %s8, %s9, %s10
  %s12 = sld [smem:[#allocation0]]
  $region62: #{graphnet_forward.1} parent=0
    _
  %s14 = ssub.s32 1, %s12
  %s15 = scalar_select 0, %s14, %s12
  %16 = sst [smem:[#allocation2]] %s0
  $region1: #{graphnet_forward.1} parent=0
    #allocation3 [shape = 'u8[4096]{0}', space=vmem, size = 0x1000, scoped, tag = 'output window, operand 0, single buffered']
    #allocation4 [shape = 's32[1]{0}', space=sflag, size = 0x4, scoped, tag = 'scoped memory for graphnet_forward.1']
    #allocation5 [shape = 'u8[4096]{0}', space=vmem, size = 0x1000, scoped, tag = 'output window, operand 1, single buffered']
    #allocation6 [shape = 's32[1]{0}', space=sflag, size = 0x4, scoped, tag = 'scoped memory for graphnet_forward.1']
    #allocation7 [shape = 'u8[16384]{0}', space=vmem, size = 0x4000, scoped, tag = 'output window, operand 2, single buffered']
    %17 = vsyncpa [#allocation4], 0
    %18 = vsyncpa [#allocation6], 0
    // Predicated region
    $region2: #{graphnet_forward.1} parent=1 // pred_check
      _
    $region3: #{graphnet_forward.1} parent=1 // pred_check_branch
      %20 = sbr.rel (0) target = $region5
    $region4: #{graphnet_forward.1} parent=1 // pred_region
      _
    $region5: #{graphnet_forward.1} parent=1 // pred_fallthru
      _
    // Predicated region
    $region6: #{graphnet_forward.1} parent=1 // pred_check
      _
    $region7: #{graphnet_forward.1} parent=1 // pred_check_branch
      %22 = sbr.rel (0) target = $region9
    $region8: #{graphnet_forward.1} parent=1 // pred_region
      _
    $region9: #{graphnet_forward.1} parent=1 // pred_fallthru
      _
    // Predicated region
    $region10: #{graphnet_forward.1} parent=1 // pred_check
      _
    $region11: #{graphnet_forward.1} parent=1 // pred_check_branch
      %24 = sbr.rel (0) target = $region13
    $region12: #{graphnet_forward.1} parent=1 // pred_region
      _
    $region13: #{graphnet_forward.1} parent=1 // pred_fallthru
      _
    // Predicated region
    $region14: #{graphnet_forward.1} parent=1 // pred_check
      _
    $region15: #{graphnet_forward.1} parent=1 // pred_check_branch
      %26 = sbr.rel (0) target = $region17
    $region16: #{graphnet_forward.1} parent=1 // pred_region
      _
    $region17: #{graphnet_forward.1} parent=1 // pred_fallthru
      _
    // Predicated region
    $region18: #{graphnet_forward.1} parent=1 // pred_check
      _
    $region19: #{graphnet_forward.1} parent=1 // pred_check_branch
      %28 = sbr.rel (0) target = $region21
    $region20: #{graphnet_forward.1} parent=1 // pred_region
      _
    $region21: #{graphnet_forward.1} parent=1 // pred_fallthru
      _
    // Predicated region
    $region22: #{graphnet_forward.1} parent=1 // pred_check
      _
    $region23: #{graphnet_forward.1} parent=1 // pred_check_branch
      %30 = sbr.rel (0) target = $region25
    $region24: #{graphnet_forward.1} parent=1 // pred_region
      _
    $region25: #{graphnet_forward.1} parent=1 // pred_fallthru
      _
    // Predicated region
    $region26: #{graphnet_forward.1} parent=1 // pred_check
      _
    $region27: #{graphnet_forward.1} parent=1 // pred_check_branch
      %32 = sbr.rel (0) target = $region29
    $region28: #{graphnet_forward.1} parent=1 // pred_region
      _
    $region29: #{graphnet_forward.1} parent=1 // pred_fallthru
      _
    %v33 = vld [vmem:[%s1] sm:$0xff]
    %v34 = vld [vmem:[%s1 + $0x8] sm:$0xff]
    %v35 = vld [vmem:[%s1 + $0x10] sm:$0xff]
    %v36 = vld [vmem:[%s1 + $0x18] sm:$0xff]
    %v37 = vld [vmem:[%s2] sm:$0xff]
    %v38 = vld [vmem:[%s2 + $0x8] sm:$0xff]
    %v39 = vld [vmem:[%s2 + $0x10] sm:$0xff]
    %v40 = vld [vmem:[%s2 + $0x18] sm:$0xff]
    %v41 = vld [vmem:[%s2 + $0x20] sm:$0xff]
    %v42 = vld [vmem:[%s2 + $0x28] sm:$0xff]
    %v43 = vld [vmem:[%s2 + $0x30] sm:$0xff]
    %v44 = vld [vmem:[%s2 + $0x38] sm:$0xff]
    %v45 = vld [vmem:[%s2 + $0x40] sm:$0xff]
    %v46 = vld [vmem:[%s2 + $0x48] sm:$0xff]
    %v47 = vld [vmem:[%s2 + $0x50] sm:$0xff]
    %v48 = vld [vmem:[%s2 + $0x58] sm:$0xff]
    %v49 = vld [vmem:[%s2 + $0x60] sm:$0xff]
    %v50 = vld [vmem:[%s2 + $0x68] sm:$0xff]
    %v51 = vld [vmem:[%s2 + $0x70] sm:$0xff]
    %v52 = vld [vmem:[%s2 + $0x78] sm:$0xff]
    %v53 = vld [vmem:[%s2 + $0x80] sm:$0xff]
    %v54 = vld [vmem:[%s2 + $0x88] sm:$0xff]
    %v55 = vld [vmem:[%s2 + $0x90] sm:$0xff]
    %v56 = vld [vmem:[%s2 + $0x98] sm:$0xff]
    %v57 = vld [vmem:[%s2 + $0xa0] sm:$0xff]
    %v58 = vld [vmem:[%s2 + $0xa8] sm:$0xff]
    %v59 = vld [vmem:[%s2 + $0xb0] sm:$0xff]
    %v60 = vld [vmem:[%s2 + $0xb8] sm:$0xff]
    %v61 = vld [vmem:[%s2 + $0xc0] sm:$0xff]
    %v62 = vld [vmem:[%s2 + $0xc8] sm:$0xff]
    %v63 = vld [vmem:[%s2 + $0xd0] sm:$0xff]
    %v64 = vld [vmem:[%s2 + $0xd8] sm:$0xff]
    %v65 = vld [vmem:[%s2 + $0xe0] sm:$0xff]
    %v66 = vld [vmem:[%s2 + $0xe8] sm:$0xff]
    %v67 = vld [vmem:[%s2 + $0xf0] sm:$0xff]
    %v68 = vld [vmem:[%s2 + $0xf8] sm:$0xff]
    %v69 = vld [vmem:[%s2 + $0x100] sm:$0xff]
    %v70 = vld [vmem:[%s2 + $0x108] sm:$0xff]
    %v71 = vld [vmem:[%s2 + $0x110] sm:$0xff]
    %v72 = vld [vmem:[%s2 + $0x118] sm:$0xff]
    %v73 = vld [vmem:[%s2 + $0x120] sm:$0xff]
    %v74 = vld [vmem:[%s2 + $0x128] sm:$0xff]
    %v75 = vld [vmem:[%s2 + $0x130] sm:$0xff]
    %v76 = vld [vmem:[%s2 + $0x138] sm:$0xff]
    %v77 = vld [vmem:[%s2 + $0x140] sm:$0xff]
    %v78 = vld [vmem:[%s2 + $0x148] sm:$0xff]
    %v79 = vld [vmem:[%s2 + $0x150] sm:$0xff]
    %v80 = vld [vmem:[%s2 + $0x158] sm:$0xff]
    %v81 = vld [vmem:[%s2 + $0x160] sm:$0xff]
    %v82 = vld [vmem:[%s2 + $0x168] sm:$0xff]
    %v83 = vld [vmem:[%s2 + $0x170] sm:$0xff]
    %v84 = vld [vmem:[%s2 + $0x178] sm:$0xff]
    %v85 = vld [vmem:[%s2 + $0x180] sm:$0xff]
    %v86 = vld [vmem:[%s2 + $0x188] sm:$0xff]
    %v87 = vld [vmem:[%s2 + $0x190] sm:$0xff]
    %v88 = vld [vmem:[%s2 + $0x198] sm:$0xff]
    %v89 = vld [vmem:[%s2 + $0x1a0] sm:$0xff]
    %v90 = vld [vmem:[%s2 + $0x1a8] sm:$0xff]
    %v91 = vld [vmem:[%s2 + $0x1b0] sm:$0xff]
    %v92 = vld [vmem:[%s2 + $0x1b8] sm:$0xff]
    %v93 = vld [vmem:[%s2 + $0x1c0] sm:$0xff]
    %v94 = vld [vmem:[%s2 + $0x1c8] sm:$0xff]
    %v95 = vld [vmem:[%s2 + $0x1d0] sm:$0xff]
    %v96 = vld [vmem:[%s2 + $0x1d8] sm:$0xff]
    %v97 = vld [vmem:[%s2 + $0x1e0] sm:$0xff]
    %v98 = vld [vmem:[%s2 + $0x1e8] sm:$0xff]
    %v99 = vld [vmem:[%s2 + $0x1f0] sm:$0xff]
    %v100 = vld [vmem:[%s2 + $0x1f8] sm:$0xff]
    %v101 = vld [vmem:[%s3] sm:$0xff]
    %102 = vmatprep.subr.mxu0 %v38
    %103 = vmatpush1.xpose.msra.mxu0 %v37
    %104 = vmatprep.subr.mxu0 %v42
    %105 = vmatpush1.xpose.msra.mxu0 %v41
    %106 = vmatprep.subr.mxu0 %v46
    %107 = vmatpush1.xpose.msra.mxu0 %v45
    %108 = vmatprep.subr.mxu0 %v50
    %109 = vmatpush1.xpose.msra.mxu0 %v49
    %110 = vmatprep.subr.mxu0 %v54
    %111 = vmatpush1.xpose.msra.mxu0 %v53
    %112 = vmatprep.subr.mxu0 %v58
    %113 = vmatpush1.xpose.msra.mxu0 %v57
    %114 = vmatprep.subr.mxu0 %v62
    %115 = vmatpush1.xpose.msra.mxu0 %v61
    %116 = vmatprep.subr.mxu0 %v66
    %117 = vmatpush1.xpose.msra.mxu0 %v65
    %118 = vmatprep.subr.mxu0 %v70
    %119 = vmatpush1.xpose.msra.mxu0 %v69
    %120 = vmatprep.subr.mxu0 %v74
    %121 = vmatpush1.xpose.msra.mxu0 %v73
    %122 = vmatprep.subr.mxu0 %v78
    %123 = vmatpush1.xpose.msra.mxu0 %v77
    %124 = vmatprep.subr.mxu0 %v82
    %125 = vmatpush1.xpose.msra.mxu0 %v81
    %126 = vmatprep.subr.mxu0 %v86
    %127 = vmatpush1.xpose.msra.mxu0 %v85
    %128 = vmatprep.subr.mxu0 %v90
    %129 = vmatpush1.xpose.msra.mxu0 %v89
    %130 = vmatprep.subr.mxu0 %v94
    %131 = vmatpush1.xpose.msra.mxu0 %v93
    %132 = vmatprep.subr.mxu0 %v98
    %133 = vmatpush1.xpose.msra.mxu0 %v97
    %134 = vmatprep.subr.mxu0 0.0
    %135 = vmatpush1.xpose.msra.mxu0 0.0
    %136 = vmatprep.subr.mxu0 0.0
    %137 = vmatpush1.xpose.msra.mxu0 0.0
    %138 = vmatprep.subr.mxu0 0.0
    %139 = vmatpush1.xpose.msra.mxu0 0.0
    %140 = vmatprep.subr.mxu0 0.0
    %141 = vmatpush1.xpose.msra.mxu0 0.0
    %142 = vmatprep.subr.mxu0 0.0
    %143 = vmatpush1.xpose.msra.mxu0 0.0
    %144 = vmatprep.subr.mxu0 0.0
    %145 = vmatpush1.xpose.msra.mxu0 0.0
    %146 = vmatprep.subr.mxu0 0.0
    %147 = vmatpush1.xpose.msra.mxu0 0.0
    %148 = vmatprep.subr.mxu0 0.0
    %149 = vmatpush1.xpose.msra.mxu0 0.0
    %150 = vmatprep.subr.mxu0 0.0
    %151 = vmatpush1.xpose.msra.mxu0 0.0
    %152 = vmatprep.subr.mxu0 0.0
    %153 = vmatpush1.xpose.msra.mxu0 0.0
    %154 = vmatprep.subr.mxu0 0.0
    %155 = vmatpush1.xpose.msra.mxu0 0.0
    %156 = vmatprep.subr.mxu0 0.0
    %157 = vmatpush1.xpose.msra.mxu0 0.0
    %158 = vmatprep.subr.mxu0 0.0
    %159 = vmatpush1.xpose.msra.mxu0 0.0
    %160 = vmatprep.subr.mxu0 0.0
    %161 = vmatpush1.xpose.msra.mxu0 0.0
    %162 = vmatprep.subr.mxu0 0.0
    %163 = vmatpush1.xpose.msra.mxu0 0.0
    %164 = vmatprep.subr.mxu0 0.0
    %165 = vmatpush1.xpose.msra.mxu0 0.0
    %166 = vmatprep.mubr.f32.mxu0 %v34
    %167 = vmatmul.mubr.f32.gmra.mrb[0].mxu0 %v33
    %v168 = vpop.f32.mrb[0].mxu0
    %v169 = vadd.f32 %v101, %v168
    %v170 = vpop.f32.mrb[0].mxu0
    %171 = vdwg.mxu0
    %172 = vmatprep.subr.mxu0 %v40
    %173 = vmatpush1.xpose.msra.mxu0 %v39
    %174 = vmatprep.subr.mxu0 %v44
    %175 = vmatpush1.xpose.msra.mxu0 %v43
    %176 = vmatprep.subr.mxu0 %v48
    %177 = vmatpush1.xpose.msra.mxu0 %v47
    %178 = vmatprep.subr.mxu0 %v52
    %179 = vmatpush1.xpose.msra.mxu0 %v51
    %180 = vmatprep.subr.mxu0 %v56
    %181 = vmatpush1.xpose.msra.mxu0 %v55
    %182 = vmatprep.subr.mxu0 %v60
    %183 = vmatpush1.xpose.msra.mxu0 %v59
    %184 = vmatprep.subr.mxu0 %v64
    %185 = vmatpush1.xpose.msra.mxu0 %v63
    %186 = vmatprep.subr.mxu0 %v68
    %187 = vmatpush1.xpose.msra.mxu0 %v67
    %188 = vmatprep.subr.mxu0 %v72
    %189 = vmatpush1.xpose.msra.mxu0 %v71
    %190 = vmatprep.subr.mxu0 %v76
    %191 = vmatpush1.xpose.msra.mxu0 %v75
    %192 = vmatprep.subr.mxu0 %v80
    %193 = vmatpush1.xpose.msra.mxu0 %v79
    %194 = vmatprep.subr.mxu0 %v84
    %195 = vmatpush1.xpose.msra.mxu0 %v83
    %196 = vmatprep.subr.mxu0 %v88
    %197 = vmatpush1.xpose.msra.mxu0 %v87
    %198 = vmatprep.subr.mxu0 %v92
    %199 = vmatpush1.xpose.msra.mxu0 %v91
    %200 = vmatprep.subr.mxu0 %v96
    %201 = vmatpush1.xpose.msra.mxu0 %v95
    %202 = vmatprep.subr.mxu0 %v100
    %203 = vmatpush1.xpose.msra.mxu0 %v99
    %204 = vmatprep.subr.mxu0 0.0
    %205 = vmatpush1.xpose.msra.mxu0 0.0
    %206 = vmatprep.subr.mxu0 0.0
    %207 = vmatpush1.xpose.msra.mxu0 0.0
    %208 = vmatprep.subr.mxu0 0.0
    %209 = vmatpush1.xpose.msra.mxu0 0.0
    %210 = vmatprep.subr.mxu0 0.0
    %211 = vmatpush1.xpose.msra.mxu0 0.0
    %212 = vmatprep.subr.mxu0 0.0
    %213 = vmatpush1.xpose.msra.mxu0 0.0
    %214 = vmatprep.subr.mxu0 0.0
    %215 = vmatpush1.xpose.msra.mxu0 0.0
    %216 = vmatprep.subr.mxu0 0.0
    %217 = vmatpush1.xpose.msra.mxu0 0.0
    %218 = vmatprep.subr.mxu0 0.0
    %219 = vmatpush1.xpose.msra.mxu0 0.0
    %220 = vmatprep.subr.mxu0 0.0
    %221 = vmatpush1.xpose.msra.mxu0 0.0
    %222 = vmatprep.subr.mxu0 0.0
    %223 = vmatpush1.xpose.msra.mxu0 0.0
    %224 = vmatprep.subr.mxu0 0.0
    %225 = vmatpush1.xpose.msra.mxu0 0.0
    %226 = vmatprep.subr.mxu0 0.0
    %227 = vmatpush1.xpose.msra.mxu0 0.0
    %228 = vmatprep.subr.mxu0 0.0
    %229 = vmatpush1.xpose.msra.mxu0 0.0
    %230 = vmatprep.subr.mxu0 0.0
    %231 = vmatpush1.xpose.msra.mxu0 0.0
    %232 = vmatprep.subr.mxu0 0.0
    %233 = vmatpush1.xpose.msra.mxu0 0.0
    %234 = vmatprep.subr.mxu0 0.0
    %235 = vmatpush1.xpose.msra.mxu0 0.0
    %236 = vmatprep.mubr.f32.mxu0 %v36
    %237 = vmatmul.mubr.f32.gmra.mrb[0].mxu0 %v35
    %v238 = vpop.f32.mrb[0].mxu0
    %v239 = vadd.f32 %v169, %v238
    %v240 = vpop.f32.mrb[0].mxu0
    %241 = vdwg.mxu0
    %242 = vmatprep.subr.mxu0 %v38
    %243 = vmatpush1.msra.mxu0 %v37
    %244 = vmatprep.subr.mxu0 %v42
    %245 = vmatpush1.msra.mxu0 %v41
    %246 = vmatprep.subr.mxu0 %v46
    %247 = vmatpush1.msra.mxu0 %v45
    %248 = vmatprep.subr.mxu0 %v50
    %249 = vmatpush1.msra.mxu0 %v49
    %250 = vmatprep.subr.mxu0 %v54
    %251 = vmatpush1.msra.mxu0 %v53
    %252 = vmatprep.subr.mxu0 %v58
    %253 = vmatpush1.msra.mxu0 %v57
    %254 = vmatprep.subr.mxu0 %v62
    %255 = vmatpush1.msra.mxu0 %v61
    %256 = vmatprep.subr.mxu0 %v66
    %257 = vmatpush1.msra.mxu0 %v65
    %258 = vmatprep.subr.mxu0 %v70
    %259 = vmatpush1.msra.mxu0 %v69
    %260 = vmatprep.subr.mxu0 %v74
    %261 = vmatpush1.msra.mxu0 %v73
    %262 = vmatprep.subr.mxu0 %v78
    %263 = vmatpush1.msra.mxu0 %v77
    %264 = vmatprep.subr.mxu0 %v82
    %265 = vmatpush1.msra.mxu0 %v81
    %266 = vmatprep.subr.mxu0 %v86
    %267 = vmatpush1.msra.mxu0 %v85
    %268 = vmatprep.subr.mxu0 %v90
    %269 = vmatpush1.msra.mxu0 %v89
    %270 = vmatprep.subr.mxu0 %v94
    %271 = vmatpush1.msra.mxu0 %v93
    %272 = vmatprep.subr.mxu0 %v98
    %273 = vmatpush1.msra.mxu0 %v97
    %274 = vmatprep.subr.mxu0 0.0
    %275 = vmatpush1.msra.mxu0 0.0
    %276 = vmatprep.subr.mxu0 0.0
    %277 = vmatpush1.msra.mxu0 0.0
    %278 = vmatprep.subr.mxu0 0.0
    %279 = vmatpush1.msra.mxu0 0.0
    %280 = vmatprep.subr.mxu0 0.0
    %281 = vmatpush1.msra.mxu0 0.0
    %282 = vmatprep.subr.mxu0 0.0
    %283 = vmatpush1.msra.mxu0 0.0
    %284 = vmatprep.subr.mxu0 0.0
    %285 = vmatpush1.msra.mxu0 0.0
    %286 = vmatprep.subr.mxu0 0.0
    %287 = vmatpush1.msra.mxu0 0.0
    %288 = vmatprep.subr.mxu0 0.0
    %289 = vmatpush1.msra.mxu0 0.0
    %290 = vmatprep.subr.mxu0 0.0
    %291 = vmatpush1.msra.mxu0 0.0
    %292 = vmatprep.subr.mxu0 0.0
    %293 = vmatpush1.msra.mxu0 0.0
    %294 = vmatprep.subr.mxu0 0.0
    %295 = vmatpush1.msra.mxu0 0.0
    %296 = vmatprep.subr.mxu0 0.0
    %297 = vmatpush1.msra.mxu0 0.0
    %298 = vmatprep.subr.mxu0 0.0
    %299 = vmatpush1.msra.mxu0 0.0
    %300 = vmatprep.subr.mxu0 0.0
    %301 = vmatpush1.msra.mxu0 0.0
    %302 = vmatprep.subr.mxu0 0.0
    %303 = vmatpush1.msra.mxu0 0.0
    %304 = vmatprep.subr.mxu0 0.0
    %305 = vmatpush1.msra.mxu0 0.0
    %306 = vmatprep.mubr.f32.mxu0 0.0
    %307 = vmatmul.mubr.f32.gmra.mrb[0].mxu0 %v239
    %v308 = vpop.f32.mrb[0].mxu0
    %v309 = vadd.f32 0.0, %v308
    %v310 = vpop.f32.mrb[0].mxu0
    %v311 = vadd.f32 0.0, %v310
    %312 = vdwg.mxu0
    %313 = vmatprep.subr.mxu0 %v40
    %314 = vmatpush1.msra.mxu0 %v39
    %315 = vmatprep.subr.mxu0 %v44
    %316 = vmatpush1.msra.mxu0 %v43
    %317 = vmatprep.subr.mxu0 %v48
    %318 = vmatpush1.msra.mxu0 %v47
    %319 = vmatprep.subr.mxu0 %v52
    %320 = vmatpush1.msra.mxu0 %v51
    %321 = vmatprep.subr.mxu0 %v56
    %322 = vmatpush1.msra.mxu0 %v55
    %323 = vmatprep.subr.mxu0 %v60
    %324 = vmatpush1.msra.mxu0 %v59
    %325 = vmatprep.subr.mxu0 %v64
    %326 = vmatpush1.msra.mxu0 %v63
    %327 = vmatprep.subr.mxu0 %v68
    %328 = vmatpush1.msra.mxu0 %v67
    %329 = vmatprep.subr.mxu0 %v72
    %330 = vmatpush1.msra.mxu0 %v71
    %331 = vmatprep.subr.mxu0 %v76
    %332 = vmatpush1.msra.mxu0 %v75
    %333 = vmatprep.subr.mxu0 %v80
    %334 = vmatpush1.msra.mxu0 %v79
    %335 = vmatprep.subr.mxu0 %v84
    %336 = vmatpush1.msra.mxu0 %v83
    %337 = vmatprep.subr.mxu0 %v88
    %338 = vmatpush1.msra.mxu0 %v87
    %339 = vmatprep.subr.mxu0 %v92
    %340 = vmatpush1.msra.mxu0 %v91
    %341 = vmatprep.subr.mxu0 %v96
    %342 = vmatpush1.msra.mxu0 %v95
    %343 = vmatprep.subr.mxu0 %v100
    %344 = vmatpush1.msra.mxu0 %v99
    %345 = vmatprep.subr.mxu0 0.0
    %346 = vmatpush1.msra.mxu0 0.0
    %347 = vmatprep.subr.mxu0 0.0
    %348 = vmatpush1.msra.mxu0 0.0
    %349 = vmatprep.subr.mxu0 0.0
    %350 = vmatpush1.msra.mxu0 0.0
    %351 = vmatprep.subr.mxu0 0.0
    %352 = vmatpush1.msra.mxu0 0.0
    %353 = vmatprep.subr.mxu0 0.0
    %354 = vmatpush1.msra.mxu0 0.0
    %355 = vmatprep.subr.mxu0 0.0
    %356 = vmatpush1.msra.mxu0 0.0
    %357 = vmatprep.subr.mxu0 0.0
    %358 = vmatpush1.msra.mxu0 0.0
    %359 = vmatprep.subr.mxu0 0.0
    %360 = vmatpush1.msra.mxu0 0.0
    %361 = vmatprep.subr.mxu0 0.0
    %362 = vmatpush1.msra.mxu0 0.0
    %363 = vmatprep.subr.mxu0 0.0
    %364 = vmatpush1.msra.mxu0 0.0
    %365 = vmatprep.subr.mxu0 0.0
    %366 = vmatpush1.msra.mxu0 0.0
    %367 = vmatprep.subr.mxu0 0.0
    %368 = vmatpush1.msra.mxu0 0.0
    %369 = vmatprep.subr.mxu0 0.0
    %370 = vmatpush1.msra.mxu0 0.0
    %371 = vmatprep.subr.mxu0 0.0
    %372 = vmatpush1.msra.mxu0 0.0
    %373 = vmatprep.subr.mxu0 0.0
    %374 = vmatpush1.msra.mxu0 0.0
    %375 = vmatprep.subr.mxu0 0.0
    %376 = vmatpush1.msra.mxu0 0.0
    %377 = vmatprep.mubr.f32.mxu0 0.0
    %378 = vmatmul.mubr.f32.gmra.mrb[0].mxu0 %v239
    %v379 = vpop.f32.mrb[0].mxu0
    %v380 = vadd.f32 0.0, %v379
    %v381 = vpop.f32.mrb[0].mxu0
    %v382 = vadd.f32 0.0, %v381
    %383 = vdwg.mxu0
    %384 = vxpose.xlu0.b32.start [1/16] %v239, 128
    %385 = vxpose.xlu0.b32.cont [2/16] 0.0, 128
    %386 = vxpose.xlu0.b32.cont [3/16] 0.0, 128
    %387 = vxpose.xlu0.b32.cont [4/16] 0.0, 128
    %388 = vxpose.xlu0.b32.cont [5/16] 0.0, 128
    %389 = vxpose.xlu0.b32.cont [6/16] 0.0, 128
    %390 = vxpose.xlu0.b32.cont [7/16] 0.0, 128
    %391 = vxpose.xlu0.b32.cont [8/16] 0.0, 128
    %392 = vxpose.xlu0.b32.cont [9/16] 0.0, 128
    %393 = vxpose.xlu0.b32.cont [10/16] 0.0, 128
    %394 = vxpose.xlu0.b32.cont [11/16] 0.0, 128
    %395 = vxpose.xlu0.b32.cont [12/16] 0.0, 128
    %396 = vxpose.xlu0.b32.cont [13/16] 0.0, 128
    %397 = vxpose.xlu0.b32.cont [14/16] 0.0, 128
    %398 = vxpose.xlu0.b32.cont [15/16] 0.0, 128
    %399 = vxpose.xlu0.b32.end [16/16] 0.0, 128
    %v400 = vpop.trf.xlu0
    %v401 = vpop.trf.xlu0
    %v402 = vpop.trf.xlu0
    %v403 = vpop.trf.xlu0
    %v404 = vpop.trf.xlu0
    %v405 = vpop.trf.xlu0
    %v406 = vpop.trf.xlu0
    %v407 = vpop.trf.xlu0
    %v408 = vpop.trf.xlu0
    %v409 = vpop.trf.xlu0
    %v410 = vpop.trf.xlu0
    %v411 = vpop.trf.xlu0
    %v412 = vpop.trf.xlu0
    %v413 = vpop.trf.xlu0
    %v414 = vpop.trf.xlu0
    %v415 = vpop.trf.xlu0
    %vm416 = vcmask 64512
    %v418 = vsel %vm416, %v400, 0
    %v421 = vsel %vm416, %v401, 0
    %v424 = vsel %vm416, %v402, 0
    %v427 = vsel %vm416, %v403, 0
    %v430 = vsel %vm416, %v404, 0
    %v433 = vsel %vm416, %v405, 0
    %v436 = vsel %vm416, %v406, 0
    %v439 = vsel %vm416, %v407, 0
    %v442 = vsel %vm416, %v408, 0
    %v445 = vsel %vm416, %v409, 0
    %v448 = vsel %vm416, %v410, 0
    %v451 = vsel %vm416, %v411, 0
    %v454 = vsel %vm416, %v412, 0
    %v457 = vsel %vm416, %v413, 0
    %v460 = vsel %vm416, %v414, 0
    %v463 = vsel %vm416, %v415, 0
    %465 = vmatprep.subr.mxu0 %v34
    %466 = vmatpush1.msra.mxu0 %v33
    %467 = vmatprep.subr.mxu0 0.0
    %468 = vmatpush1.msra.mxu0 0.0
    %469 = vmatprep.subr.mxu0 0.0
    %470 = vmatpush1.msra.mxu0 0.0
    %471 = vmatprep.subr.mxu0 0.0
    %472 = vmatpush1.msra.mxu0 0.0
    %473 = vmatprep.subr.mxu0 0.0
    %474 = vmatpush1.msra.mxu0 0.0
    %475 = vmatprep.subr.mxu0 0.0
    %476 = vmatpush1.msra.mxu0 0.0
    %477 = vmatprep.subr.mxu0 0.0
    %478 = vmatpush1.msra.mxu0 0.0
    %479 = vmatprep.subr.mxu0 0.0
    %480 = vmatpush1.msra.mxu0 0.0
    %481 = vmatprep.subr.mxu0 0.0
    %482 = vmatpush1.msra.mxu0 0.0
    %483 = vmatprep.subr.mxu0 0.0
    %484 = vmatpush1.msra.mxu0 0.0
    %485 = vmatprep.subr.mxu0 0.0
    %486 = vmatpush1.msra.mxu0 0.0
    %487 = vmatprep.subr.mxu0 0.0
    %488 = vmatpush1.msra.mxu0 0.0
    %489 = vmatprep.subr.mxu0 0.0
    %490 = vmatpush1.msra.mxu0 0.0
    %491 = vmatprep.subr.mxu0 0.0
    %492 = vmatpush1.msra.mxu0 0.0
    %493 = vmatprep.subr.mxu0 0.0
    %494 = vmatpush1.msra.mxu0 0.0
    %495 = vmatprep.subr.mxu0 0.0
    %496 = vmatpush1.msra.mxu0 0.0
    %497 = vmatprep.subr.mxu0 0.0
    %498 = vmatpush1.msra.mxu0 0.0
    %499 = vmatprep.subr.mxu0 0.0
    %500 = vmatpush1.msra.mxu0 0.0
    %501 = vmatprep.subr.mxu0 0.0
    %502 = vmatpush1.msra.mxu0 0.0
    %503 = vmatprep.subr.mxu0 0.0
    %504 = vmatpush1.msra.mxu0 0.0
    %505 = vmatprep.subr.mxu0 0.0
    %506 = vmatpush1.msra.mxu0 0.0
    %507 = vmatprep.subr.mxu0 0.0
    %508 = vmatpush1.msra.mxu0 0.0
    %509 = vmatprep.subr.mxu0 0.0
    %510 = vmatpush1.msra.mxu0 0.0
    %511 = vmatprep.subr.mxu0 0.0
    %512 = vmatpush1.msra.mxu0 0.0
    %513 = vmatprep.subr.mxu0 0.0
    %514 = vmatpush1.msra.mxu0 0.0
    %515 = vmatprep.subr.mxu0 0.0
    %516 = vmatpush1.msra.mxu0 0.0
    %517 = vmatprep.subr.mxu0 0.0
    %518 = vmatpush1.msra.mxu0 0.0
    %519 = vmatprep.subr.mxu0 0.0
    %520 = vmatpush1.msra.mxu0 0.0
    %521 = vmatprep.subr.mxu0 0.0
    %522 = vmatpush1.msra.mxu0 0.0
    %523 = vmatprep.subr.mxu0 0.0
    %524 = vmatpush1.msra.mxu0 0.0
    %525 = vmatprep.subr.mxu0 0.0
    %526 = vmatpush1.msra.mxu0 0.0
    %527 = vmatprep.subr.mxu0 0.0
    %528 = vmatpush1.msra.mxu0 0.0
    %529 = vmatprep.mubr.f32.mxu0 0.0
    %530 = vmatmul.mubr.f32.gmra.mrb[0].mxu0 %v418
    %v531 = vpop.f32.mrb[0].mxu0
    %v532 = vadd.f32 0.0, %v531
    %v533 = vpop.f32.mrb[0].mxu0
    %v534 = vadd.f32 0.0, %v533
    %535 = vmatprep.mubr.f32.mxu0 0.0
    %536 = vmatmul.mubr.f32.gmra.mrb[0].mxu0 %v421
    %v537 = vpop.f32.mrb[0].mxu0
    %v538 = vadd.f32 0.0, %v537
    %v539 = vpop.f32.mrb[0].mxu0
    %v540 = vadd.f32 0.0, %v539
    %541 = vmatprep.mubr.f32.mxu0 0.0
    %542 = vmatmul.mubr.f32.gmra.mrb[0].mxu0 %v424
    %v543 = vpop.f32.mrb[0].mxu0
    %v544 = vadd.f32 0.0, %v543
    %v545 = vpop.f32.mrb[0].mxu0
    %v546 = vadd.f32 0.0, %v545
    %547 = vmatprep.mubr.f32.mxu0 0.0
    %548 = vmatmul.mubr.f32.gmra.mrb[0].mxu0 %v427
    %v549 = vpop.f32.mrb[0].mxu0
    %v550 = vadd.f32 0.0, %v549
    %v551 = vpop.f32.mrb[0].mxu0
    %v552 = vadd.f32 0.0, %v551
    %553 = vmatprep.mubr.f32.mxu0 0.0
    %554 = vmatmul.mubr.f32.gmra.mrb[0].mxu0 %v430
    %v555 = vpop.f32.mrb[0].mxu0
    %v556 = vadd.f32 0.0, %v555
    %v557 = vpop.f32.mrb[0].mxu0
    %v558 = vadd.f32 0.0, %v557
    %559 = vmatprep.mubr.f32.mxu0 0.0
    %560 = vmatmul.mubr.f32.gmra.mrb[0].mxu0 %v433
    %v561 = vpop.f32.mrb[0].mxu0
    %v562 = vadd.f32 0.0, %v561
    %v563 = vpop.f32.mrb[0].mxu0
    %v564 = vadd.f32 0.0, %v563
    %565 = vmatprep.mubr.f32.mxu0 0.0
    %566 = vmatmul.mubr.f32.gmra.mrb[0].mxu0 %v436
    %v567 = vpop.f32.mrb[0].mxu0
    %v568 = vadd.f32 0.0, %v567
    %v569 = vpop.f32.mrb[0].mxu0
    %v570 = vadd.f32 0.0, %v569
    %571 = vmatprep.mubr.f32.mxu0 0.0
    %572 = vmatmul.mubr.f32.gmra.mrb[0].mxu0 %v439
    %v573 = vpop.f32.mrb[0].mxu0
    %v574 = vadd.f32 0.0, %v573
    %v575 = vpop.f32.mrb[0].mxu0
    %v576 = vadd.f32 0.0, %v575
    %577 = vmatprep.mubr.f32.mxu0 0.0
    %578 = vmatmul.mubr.f32.gmra.mrb[0].mxu0 %v442
    %v579 = vpop.f32.mrb[0].mxu0
    %v580 = vadd.f32 0.0, %v579
    %v581 = vpop.f32.mrb[0].mxu0
    %v582 = vadd.f32 0.0, %v581
    %583 = vmatprep.mubr.f32.mxu0 0.0
    %584 = vmatmul.mubr.f32.gmra.mrb[0].mxu0 %v445
    %v585 = vpop.f32.mrb[0].mxu0
    %v586 = vadd.f32 0.0, %v585
    %v587 = vpop.f32.mrb[0].mxu0
    %v588 = vadd.f32 0.0, %v587
    %589 = vmatprep.mubr.f32.mxu0 0.0
    %590 = vmatmul.mubr.f32.gmra.mrb[0].mxu0 %v448
    %v591 = vpop.f32.mrb[0].mxu0
    %v592 = vadd.f32 0.0, %v591
    %v593 = vpop.f32.mrb[0].mxu0
    %v594 = vadd.f32 0.0, %v593
    %595 = vmatprep.mubr.f32.mxu0 0.0
    %596 = vmatmul.mubr.f32.gmra.mrb[0].mxu0 %v451
    %v597 = vpop.f32.mrb[0].mxu0
    %v598 = vadd.f32 0.0, %v597
    %v599 = vpop.f32.mrb[0].mxu0
    %v600 = vadd.f32 0.0, %v599
    %601 = vmatprep.mubr.f32.mxu0 0.0
    %602 = vmatmul.mubr.f32.gmra.mrb[0].mxu0 %v454
    %v603 = vpop.f32.mrb[0].mxu0
    %v604 = vadd.f32 0.0, %v603
    %v605 = vpop.f32.mrb[0].mxu0
    %v606 = vadd.f32 0.0, %v605
    %607 = vmatprep.mubr.f32.mxu0 0.0
    %608 = vmatmul.mubr.f32.gmra.mrb[0].mxu0 %v457
    %v609 = vpop.f32.mrb[0].mxu0
    %v610 = vadd.f32 0.0, %v609
    %v611 = vpop.f32.mrb[0].mxu0
    %v612 = vadd.f32 0.0, %v611
    %613 = vmatprep.mubr.f32.mxu0 0.0
    %614 = vmatmul.mubr.f32.gmra.mrb[0].mxu0 %v460
    %v615 = vpop.f32.mrb[0].mxu0
    %v616 = vadd.f32 0.0, %v615
    %v617 = vpop.f32.mrb[0].mxu0
    %v618 = vadd.f32 0.0, %v617
    %619 = vmatprep.mubr.f32.mxu0 0.0
    %620 = vmatmul.mubr.f32.gmra.mrb[0].mxu0 %v463
    %v621 = vpop.f32.mrb[0].mxu0
    %v622 = vadd.f32 0.0, %v621
    %v623 = vpop.f32.mrb[0].mxu0
    %v624 = vadd.f32 0.0, %v623
    %625 = vdwg.mxu0
    %626 = vmatprep.subr.mxu0 %v36
    %627 = vmatpush1.msra.mxu0 %v35
    %628 = vmatprep.subr.mxu0 0.0
    %629 = vmatpush1.msra.mxu0 0.0
    %630 = vmatprep.subr.mxu0 0.0
    %631 = vmatpush1.msra.mxu0 0.0
    %632 = vmatprep.subr.mxu0 0.0
    %633 = vmatpush1.msra.mxu0 0.0
    %634 = vmatprep.subr.mxu0 0.0
    %635 = vmatpush1.msra.mxu0 0.0
    %636 = vmatprep.subr.mxu0 0.0
    %637 = vmatpush1.msra.mxu0 0.0
    %638 = vmatprep.subr.mxu0 0.0
    %639 = vmatpush1.msra.mxu0 0.0
    %640 = vmatprep.subr.mxu0 0.0
    %641 = vmatpush1.msra.mxu0 0.0
    %642 = vmatprep.subr.mxu0 0.0
    %643 = vmatpush1.msra.mxu0 0.0
    %644 = vmatprep.subr.mxu0 0.0
    %645 = vmatpush1.msra.mxu0 0.0
    %646 = vmatprep.subr.mxu0 0.0
    %647 = vmatpush1.msra.mxu0 0.0
    %648 = vmatprep.subr.mxu0 0.0
    %649 = vmatpush1.msra.mxu0 0.0
    %650 = vmatprep.subr.mxu0 0.0
    %651 = vmatpush1.msra.mxu0 0.0
    %652 = vmatprep.subr.mxu0 0.0
    %653 = vmatpush1.msra.mxu0 0.0
    %654 = vmatprep.subr.mxu0 0.0
    %655 = vmatpush1.msra.mxu0 0.0
    %656 = vmatprep.subr.mxu0 0.0
    %657 = vmatpush1.msra.mxu0 0.0
    %658 = vmatprep.subr.mxu0 0.0
    %659 = vmatpush1.msra.mxu0 0.0
    %660 = vmatprep.subr.mxu0 0.0
    %661 = vmatpush1.msra.mxu0 0.0
    %662 = vmatprep.subr.mxu0 0.0
    %663 = vmatpush1.msra.mxu0 0.0
    %664 = vmatprep.subr.mxu0 0.0
    %665 = vmatpush1.msra.mxu0 0.0
    %666 = vmatprep.subr.mxu0 0.0
    %667 = vmatpush1.msra.mxu0 0.0
    %668 = vmatprep.subr.mxu0 0.0
    %669 = vmatpush1.msra.mxu0 0.0
    %670 = vmatprep.subr.mxu0 0.0
    %671 = vmatpush1.msra.mxu0 0.0
    %672 = vmatprep.subr.mxu0 0.0
    %673 = vmatpush1.msra.mxu0 0.0
    %674 = vmatprep.subr.mxu0 0.0
    %675 = vmatpush1.msra.mxu0 0.0
    %676 = vmatprep.subr.mxu0 0.0
    %677 = vmatpush1.msra.mxu0 0.0
    %678 = vmatprep.subr.mxu0 0.0
    %679 = vmatpush1.msra.mxu0 0.0
    %680 = vmatprep.subr.mxu0 0.0
    %681 = vmatpush1.msra.mxu0 0.0
    %682 = vmatprep.subr.mxu0 0.0
    %683 = vmatpush1.msra.mxu0 0.0
    %684 = vmatprep.subr.mxu0 0.0
    %685 = vmatpush1.msra.mxu0 0.0
    %686 = vmatprep.subr.mxu0 0.0
    %687 = vmatpush1.msra.mxu0 0.0
    %688 = vmatprep.subr.mxu0 0.0
    %689 = vmatpush1.msra.mxu0 0.0
    %690 = vmatprep.mubr.f32.mxu0 0.0
    %691 = vmatmul.mubr.f32.gmra.mrb[0].mxu0 %v418
    %v692 = vpop.f32.mrb[0].mxu0
    %v693 = vadd.f32 0.0, %v692
    %v694 = vpop.f32.mrb[0].mxu0
    %v695 = vadd.f32 0.0, %v694
    %696 = vmatprep.mubr.f32.mxu0 0.0
    %697 = vmatmul.mubr.f32.gmra.mrb[0].mxu0 %v421
    %v698 = vpop.f32.mrb[0].mxu0
    %v699 = vadd.f32 0.0, %v698
    %v700 = vpop.f32.mrb[0].mxu0
    %v701 = vadd.f32 0.0, %v700
    %702 = vmatprep.mubr.f32.mxu0 0.0
    %703 = vmatmul.mubr.f32.gmra.mrb[0].mxu0 %v424
    %v704 = vpop.f32.mrb[0].mxu0
    %v705 = vadd.f32 0.0, %v704
    %v706 = vpop.f32.mrb[0].mxu0
    %v707 = vadd.f32 0.0, %v706
    %708 = vmatprep.mubr.f32.mxu0 0.0
    %709 = vmatmul.mubr.f32.gmra.mrb[0].mxu0 %v427
    %v710 = vpop.f32.mrb[0].mxu0
    %v711 = vadd.f32 0.0, %v710
    %v712 = vpop.f32.mrb[0].mxu0
    %v713 = vadd.f32 0.0, %v712
    %714 = vmatprep.mubr.f32.mxu0 0.0
    %715 = vmatmul.mubr.f32.gmra.mrb[0].mxu0 %v430
    %v716 = vpop.f32.mrb[0].mxu0
    %v717 = vadd.f32 0.0, %v716
    %v718 = vpop.f32.mrb[0].mxu0
    %v719 = vadd.f32 0.0, %v718
    %720 = vmatprep.mubr.f32.mxu0 0.0
    %721 = vmatmul.mubr.f32.gmra.mrb[0].mxu0 %v433
    %v722 = vpop.f32.mrb[0].mxu0
    %v723 = vadd.f32 0.0, %v722
    %v724 = vpop.f32.mrb[0].mxu0
    %v725 = vadd.f32 0.0, %v724
    %726 = vmatprep.mubr.f32.mxu0 0.0
    %727 = vmatmul.mubr.f32.gmra.mrb[0].mxu0 %v436
    %v728 = vpop.f32.mrb[0].mxu0
    %v729 = vadd.f32 0.0, %v728
    %v730 = vpop.f32.mrb[0].mxu0
    %v731 = vadd.f32 0.0, %v730
    %732 = vmatprep.mubr.f32.mxu0 0.0
    %733 = vmatmul.mubr.f32.gmra.mrb[0].mxu0 %v439
    %v734 = vpop.f32.mrb[0].mxu0
    %v735 = vadd.f32 0.0, %v734
    %v736 = vpop.f32.mrb[0].mxu0
    %v737 = vadd.f32 0.0, %v736
    %738 = vmatprep.mubr.f32.mxu0 0.0
    %739 = vmatmul.mubr.f32.gmra.mrb[0].mxu0 %v442
    %v740 = vpop.f32.mrb[0].mxu0
    %v741 = vadd.f32 0.0, %v740
    %v742 = vpop.f32.mrb[0].mxu0
    %v743 = vadd.f32 0.0, %v742
    %744 = vmatprep.mubr.f32.mxu0 0.0
    %745 = vmatmul.mubr.f32.gmra.mrb[0].mxu0 %v445
    %v746 = vpop.f32.mrb[0].mxu0
    %v747 = vadd.f32 0.0, %v746
    %v748 = vpop.f32.mrb[0].mxu0
    %v749 = vadd.f32 0.0, %v748
    %750 = vmatprep.mubr.f32.mxu0 0.0
    %751 = vmatmul.mubr.f32.gmra.mrb[0].mxu0 %v448
    %v752 = vpop.f32.mrb[0].mxu0
    %v753 = vadd.f32 0.0, %v752
    %v754 = vpop.f32.mrb[0].mxu0
    %v755 = vadd.f32 0.0, %v754
    %756 = vmatprep.mubr.f32.mxu0 0.0
    %757 = vmatmul.mubr.f32.gmra.mrb[0].mxu0 %v451
    %v758 = vpop.f32.mrb[0].mxu0
    %v759 = vadd.f32 0.0, %v758
    %v760 = vpop.f32.mrb[0].mxu0
    %v761 = vadd.f32 0.0, %v760
    %762 = vmatprep.mubr.f32.mxu0 0.0
    %763 = vmatmul.mubr.f32.gmra.mrb[0].mxu0 %v454
    %v764 = vpop.f32.mrb[0].mxu0
    %v765 = vadd.f32 0.0, %v764
    %v766 = vpop.f32.mrb[0].mxu0
    %v767 = vadd.f32 0.0, %v766
    %768 = vmatprep.mubr.f32.mxu0 0.0
    %769 = vmatmul.mubr.f32.gmra.mrb[0].mxu0 %v457
    %v770 = vpop.f32.mrb[0].mxu0
    %v771 = vadd.f32 0.0, %v770
    %v772 = vpop.f32.mrb[0].mxu0
    %v773 = vadd.f32 0.0, %v772
    %774 = vmatprep.mubr.f32.mxu0 0.0
    %775 = vmatmul.mubr.f32.gmra.mrb[0].mxu0 %v460
    %v776 = vpop.f32.mrb[0].mxu0
    %v777 = vadd.f32 0.0, %v776
    %v778 = vpop.f32.mrb[0].mxu0
    %v779 = vadd.f32 0.0, %v778
    %780 = vmatprep.mubr.f32.mxu0 0.0
    %781 = vmatmul.mubr.f32.gmra.mrb[0].mxu0 %v463
    %v782 = vpop.f32.mrb[0].mxu0
    %v783 = vadd.f32 0.0, %v782
    %v784 = vpop.f32.mrb[0].mxu0
    %v785 = vadd.f32 0.0, %v784
    %786 = vdwg.mxu0
    %v787 = vmul.f32 %v33, %v33
    %v788 = vmul.f32 %v34, %v34
    %v789 = vmul.f32 %v35, %v35
    %v790 = vmul.f32 %v36, %v36
    %v791 = vadd.f32 %v787, %v788
    %v792 = vadd.f32 %v791, %v789
    %v793 = vadd.f32 %v792, %v790
    %794 = vadd.xlane.f32.xlu0 %v793
    %v795 = vpop.xlane.xlu0 %794
    %v796 = vmul.f32 %v309, %v309
    %v797 = vmul.f32 %v311, %v311
    %v798 = vmul.f32 %v380, %v380
    %v799 = vmul.f32 %v382, %v382
    %v800 = vadd.f32 %v796, %v797
    %v801 = vadd.f32 %v800, %v798
    %v802 = vadd.f32 %v801, %v799
    %803 = vadd.xlane.f32.xlu0 %v802
    %v804 = vpop.xlane.xlu0 %803
    %v805 = vrsqrt.pop %v795
    %v806 = vmul.f32 %v795, %v805
    %vm807 = vcmp.eq.f32.partialorder %v795, inf
    %v808 = vsel %vm807, %v795, %v806
    %vm809 = vcmp.eq.f32.partialorder %v795, 0.0
    %v810 = vand.u32 %v795, 2147483648
    %v811 = vsel %vm809, %v810, %v808
    %v812 = vrsqrt.pop %v804
    %v813 = vmul.f32 %v811, %v812
    %v814 = vmul.f32 %v37, %v37
    %v815 = vmul.f32 %v38, %v38
    %v816 = vmul.f32 %v39, %v39
    %v817 = vmul.f32 %v40, %v40
    %v818 = vmul.f32 %v41, %v41
    %v819 = vmul.f32 %v42, %v42
    %v820 = vmul.f32 %v43, %v43
    %v821 = vmul.f32 %v44, %v44
    %v822 = vmul.f32 %v45, %v45
    %v823 = vmul.f32 %v46, %v46
    %v824 = vmul.f32 %v47, %v47
    %v825 = vmul.f32 %v48, %v48
    %v826 = vmul.f32 %v49, %v49
    %v827 = vmul.f32 %v50, %v50
    %v828 = vmul.f32 %v51, %v51
    %v829 = vmul.f32 %v52, %v52
    %v830 = vmul.f32 %v53, %v53
    %v831 = vmul.f32 %v54, %v54
    %v832 = vmul.f32 %v55, %v55
    %v833 = vmul.f32 %v56, %v56
    %v834 = vmul.f32 %v57, %v57
    %v835 = vmul.f32 %v58, %v58
    %v836 = vmul.f32 %v59, %v59
    %v837 = vmul.f32 %v60, %v60
    %v838 = vmul.f32 %v61, %v61
    %v839 = vmul.f32 %v62, %v62
    %v840 = vmul.f32 %v63, %v63
    %v841 = vmul.f32 %v64, %v64
    %v842 = vmul.f32 %v65, %v65
    %v843 = vmul.f32 %v66, %v66
    %v844 = vmul.f32 %v67, %v67
    %v845 = vmul.f32 %v68, %v68
    %v846 = vmul.f32 %v69, %v69
    %v847 = vmul.f32 %v70, %v70
    %v848 = vmul.f32 %v71, %v71
    %v849 = vmul.f32 %v72, %v72
    %v850 = vmul.f32 %v73, %v73
    %v851 = vmul.f32 %v74, %v74
    %v852 = vmul.f32 %v75, %v75
    %v853 = vmul.f32 %v76, %v76
    %v854 = vmul.f32 %v77, %v77
    %v855 = vmul.f32 %v78, %v78
    %v856 = vmul.f32 %v79, %v79
    %v857 = vmul.f32 %v80, %v80
    %v858 = vmul.f32 %v81, %v81
    %v859 = vmul.f32 %v82, %v82
    %v860 = vmul.f32 %v83, %v83
    %v861 = vmul.f32 %v84, %v84
    %v862 = vmul.f32 %v85, %v85
    %v863 = vmul.f32 %v86, %v86
    %v864 = vmul.f32 %v87, %v87
    %v865 = vmul.f32 %v88, %v88
    %v866 = vmul.f32 %v89, %v89
    %v867 = vmul.f32 %v90, %v90
    %v868 = vmul.f32 %v91, %v91
    %v869 = vmul.f32 %v92, %v92
    %v870 = vmul.f32 %v93, %v93
    %v871 = vmul.f32 %v94, %v94
    %v872 = vmul.f32 %v95, %v95
    %v873 = vmul.f32 %v96, %v96
    %v874 = vmul.f32 %v97, %v97
    %v875 = vmul.f32 %v98, %v98
    %v876 = vmul.f32 %v99, %v99
    %v877 = vmul.f32 %v100, %v100
    %v878 = vadd.f32 %v814, %v815
    %v879 = vadd.f32 %v878, %v816
    %v880 = vadd.f32 %v879, %v817
    %881 = vadd.xlane.f32.xlu0 %v880
    %v882 = vpop.xlane.xlu0 %881
    %v883 = vadd.f32 %v818, %v819
    %v884 = vadd.f32 %v883, %v820
    %v885 = vadd.f32 %v884, %v821
    %886 = vadd.xlane.f32.xlu0 %v885
    %v887 = vpop.xlane.xlu0 %886
    %v888 = vadd.f32 %v822, %v823
    %v889 = vadd.f32 %v888, %v824
    %v890 = vadd.f32 %v889, %v825
    %891 = vadd.xlane.f32.xlu0 %v890
    %v892 = vpop.xlane.xlu0 %891
    %v893 = vadd.f32 %v826, %v827
    %v894 = vadd.f32 %v893, %v828
    %v895 = vadd.f32 %v894, %v829
    %896 = vadd.xlane.f32.xlu0 %v895
    %v897 = vpop.xlane.xlu0 %896
    %v898 = vadd.f32 %v830, %v831
    %v899 = vadd.f32 %v898, %v832
    %v900 = vadd.f32 %v899, %v833
    %901 = vadd.xlane.f32.xlu0 %v900
    %v902 = vpop.xlane.xlu0 %901
    %v903 = vadd.f32 %v834, %v835
    %v904 = vadd.f32 %v903, %v836
    %v905 = vadd.f32 %v904, %v837
    %906 = vadd.xlane.f32.xlu0 %v905
    %v907 = vpop.xlane.xlu0 %906
    %v908 = vadd.f32 %v838, %v839
    %v909 = vadd.f32 %v908, %v840
    %v910 = vadd.f32 %v909, %v841
    %911 = vadd.xlane.f32.xlu0 %v910
    %v912 = vpop.xlane.xlu0 %911
    %v913 = vadd.f32 %v842, %v843
    %v914 = vadd.f32 %v913, %v844
    %v915 = vadd.f32 %v914, %v845
    %916 = vadd.xlane.f32.xlu0 %v915
    %v917 = vpop.xlane.xlu0 %916
    %v918 = vadd.f32 %v846, %v847
    %v919 = vadd.f32 %v918, %v848
    %v920 = vadd.f32 %v919, %v849
    %921 = vadd.xlane.f32.xlu0 %v920
    %v922 = vpop.xlane.xlu0 %921
    %v923 = vadd.f32 %v850, %v851
    %v924 = vadd.f32 %v923, %v852
    %v925 = vadd.f32 %v924, %v853
    %926 = vadd.xlane.f32.xlu0 %v925
    %v927 = vpop.xlane.xlu0 %926
    %v928 = vadd.f32 %v854, %v855
    %v929 = vadd.f32 %v928, %v856
    %v930 = vadd.f32 %v929, %v857
    %931 = vadd.xlane.f32.xlu0 %v930
    %v932 = vpop.xlane.xlu0 %931
    %v933 = vadd.f32 %v858, %v859
    %v934 = vadd.f32 %v933, %v860
    %v935 = vadd.f32 %v934, %v861
    %936 = vadd.xlane.f32.xlu0 %v935
    %v937 = vpop.xlane.xlu0 %936
    %v938 = vadd.f32 %v862, %v863
    %v939 = vadd.f32 %v938, %v864
    %v940 = vadd.f32 %v939, %v865
    %941 = vadd.xlane.f32.xlu0 %v940
    %v942 = vpop.xlane.xlu0 %941
    %v943 = vadd.f32 %v866, %v867
    %v944 = vadd.f32 %v943, %v868
    %v945 = vadd.f32 %v944, %v869
    %946 = vadd.xlane.f32.xlu0 %v945
    %v947 = vpop.xlane.xlu0 %946
    %v948 = vadd.f32 %v870, %v871
    %v949 = vadd.f32 %v948, %v872
    %v950 = vadd.f32 %v949, %v873
    %951 = vadd.xlane.f32.xlu0 %v950
    %v952 = vpop.xlane.xlu0 %951
    %v953 = vadd.f32 %v874, %v875
    %v954 = vadd.f32 %v953, %v876
    %v955 = vadd.f32 %v954, %v877
    %956 = vadd.xlane.f32.xlu0 %v955
    %v957 = vpop.xlane.xlu0 %956
    %v958 = vmul.f32 %v532, %v532
    %v959 = vmul.f32 %v534, %v534
    %v960 = vmul.f32 %v693, %v693
    %v961 = vmul.f32 %v695, %v695
    %v962 = vmul.f32 %v538, %v538
    %v963 = vmul.f32 %v540, %v540
    %v964 = vmul.f32 %v699, %v699
    %v965 = vmul.f32 %v701, %v701
    %v966 = vmul.f32 %v544, %v544
    %v967 = vmul.f32 %v546, %v546
    %v968 = vmul.f32 %v705, %v705
    %v969 = vmul.f32 %v707, %v707
    %v970 = vmul.f32 %v550, %v550
    %v971 = vmul.f32 %v552, %v552
    %v972 = vmul.f32 %v711, %v711
    %v973 = vmul.f32 %v713, %v713
    %v974 = vmul.f32 %v556, %v556
    %v975 = vmul.f32 %v558, %v558
    %v976 = vmul.f32 %v717, %v717
    %v977 = vmul.f32 %v719, %v719
    %v978 = vmul.f32 %v562, %v562
    %v979 = vmul.f32 %v564, %v564
    %v980 = vmul.f32 %v723, %v723
    %v981 = vmul.f32 %v725, %v725
    %v982 = vmul.f32 %v568, %v568
    %v983 = vmul.f32 %v570, %v570
    %v984 = vmul.f32 %v729, %v729
    %v985 = vmul.f32 %v731, %v731
    %v986 = vmul.f32 %v574, %v574
    %v987 = vmul.f32 %v576, %v576
    %v988 = vmul.f32 %v735, %v735
    %v989 = vmul.f32 %v737, %v737
    %v990 = vmul.f32 %v580, %v580
    %v991 = vmul.f32 %v582, %v582
    %v992 = vmul.f32 %v741, %v741
    %v993 = vmul.f32 %v743, %v743
    %v994 = vmul.f32 %v586, %v586
    %v995 = vmul.f32 %v588, %v588
    %v996 = vmul.f32 %v747, %v747
    %v997 = vmul.f32 %v749, %v749
    %v998 = vmul.f32 %v592, %v592
    %v999 = vmul.f32 %v594, %v594
    %v1000 = vmul.f32 %v753, %v753
    %v1001 = vmul.f32 %v755, %v755
    %v1002 = vmul.f32 %v598, %v598
    %v1003 = vmul.f32 %v600, %v600
    %v1004 = vmul.f32 %v759, %v759
    %v1005 = vmul.f32 %v761, %v761
    %v1006 = vmul.f32 %v604, %v604
    %v1007 = vmul.f32 %v606, %v606
    %v1008 = vmul.f32 %v765, %v765
    %v1009 = vmul.f32 %v767, %v767
    %v1010 = vmul.f32 %v610, %v610
    %v1011 = vmul.f32 %v612, %v612
    %v1012 = vmul.f32 %v771, %v771
    %v1013 = vmul.f32 %v773, %v773
    %v1014 = vmul.f32 %v616, %v616
    %v1015 = vmul.f32 %v618, %v618
    %v1016 = vmul.f32 %v777, %v777
    %v1017 = vmul.f32 %v779, %v779
    %v1018 = vmul.f32 %v622, %v622
    %v1019 = vmul.f32 %v624, %v624
    %v1020 = vmul.f32 %v783, %v783
    %v1021 = vmul.f32 %v785, %v785
    %v1022 = vadd.f32 %v958, %v959
    %v1023 = vadd.f32 %v1022, %v960
    %v1024 = vadd.f32 %v1023, %v961
    %1025 = vadd.xlane.f32.xlu0 %v1024
    %v1026 = vpop.xlane.xlu0 %1025
    %v1027 = vadd.f32 %v962, %v963
    %v1028 = vadd.f32 %v1027, %v964
    %v1029 = vadd.f32 %v1028, %v965
    %1030 = vadd.xlane.f32.xlu0 %v1029
    %v1031 = vpop.xlane.xlu0 %1030
    %v1032 = vadd.f32 %v966, %v967
    %v1033 = vadd.f32 %v1032, %v968
    %v1034 = vadd.f32 %v1033, %v969
    %1035 = vadd.xlane.f32.xlu0 %v1034
    %v1036 = vpop.xlane.xlu0 %1035
    %v1037 = vadd.f32 %v970, %v971
    %v1038 = vadd.f32 %v1037, %v972
    %v1039 = vadd.f32 %v1038, %v973
    %1040 = vadd.xlane.f32.xlu0 %v1039
    %v1041 = vpop.xlane.xlu0 %1040
    %v1042 = vadd.f32 %v974, %v975
    %v1043 = vadd.f32 %v1042, %v976
    %v1044 = vadd.f32 %v1043, %v977
    %1045 = vadd.xlane.f32.xlu0 %v1044
    %v1046 = vpop.xlane.xlu0 %1045
    %v1047 = vadd.f32 %v978, %v979
    %v1048 = vadd.f32 %v1047, %v980
    %v1049 = vadd.f32 %v1048, %v981
    %1050 = vadd.xlane.f32.xlu0 %v1049
    %v1051 = vpop.xlane.xlu0 %1050
    %v1052 = vadd.f32 %v982, %v983
    %v1053 = vadd.f32 %v1052, %v984
    %v1054 = vadd.f32 %v1053, %v985
    %1055 = vadd.xlane.f32.xlu0 %v1054
    %v1056 = vpop.xlane.xlu0 %1055
    %v1057 = vadd.f32 %v986, %v987
    %v1058 = vadd.f32 %v1057, %v988
    %v1059 = vadd.f32 %v1058, %v989
    %1060 = vadd.xlane.f32.xlu0 %v1059
    %v1061 = vpop.xlane.xlu0 %1060
    %v1062 = vadd.f32 %v990, %v991
    %v1063 = vadd.f32 %v1062, %v992
    %v1064 = vadd.f32 %v1063, %v993
    %1065 = vadd.xlane.f32.xlu0 %v1064
    %v1066 = vpop.xlane.xlu0 %1065
    %v1067 = vadd.f32 %v994, %v995
    %v1068 = vadd.f32 %v1067, %v996
    %v1069 = vadd.f32 %v1068, %v997
    %1070 = vadd.xlane.f32.xlu0 %v1069
    %v1071 = vpop.xlane.xlu0 %1070
    %v1072 = vadd.f32 %v998, %v999
    %v1073 = vadd.f32 %v1072, %v1000
    %v1074 = vadd.f32 %v1073, %v1001
    %1075 = vadd.xlane.f32.xlu0 %v1074
    %v1076 = vpop.xlane.xlu0 %1075
    %v1077 = vadd.f32 %v1002, %v1003
    %v1078 = vadd.f32 %v1077, %v1004
    %v1079 = vadd.f32 %v1078, %v1005
    %1080 = vadd.xlane.f32.xlu0 %v1079
    %v1081 = vpop.xlane.xlu0 %1080
    %v1082 = vadd.f32 %v1006, %v1007
    %v1083 = vadd.f32 %v1082, %v1008
    %v1084 = vadd.f32 %v1083, %v1009
    %1085 = vadd.xlane.f32.xlu0 %v1084
    %v1086 = vpop.xlane.xlu0 %1085
    %v1087 = vadd.f32 %v1010, %v1011
    %v1088 = vadd.f32 %v1087, %v1012
    %v1089 = vadd.f32 %v1088, %v1013
    %1090 = vadd.xlane.f32.xlu0 %v1089
    %v1091 = vpop.xlane.xlu0 %1090
    %v1092 = vadd.f32 %v1014, %v1015
    %v1093 = vadd.f32 %v1092, %v1016
    %v1094 = vadd.f32 %v1093, %v1017
    %1095 = vadd.xlane.f32.xlu0 %v1094
    %v1096 = vpop.xlane.xlu0 %1095
    %v1097 = vadd.f32 %v1018, %v1019
    %v1098 = vadd.f32 %v1097, %v1020
    %v1099 = vadd.f32 %v1098, %v1021
    %1100 = vadd.xlane.f32.xlu0 %v1099
    %v1101 = vpop.xlane.xlu0 %1100
    %v1102 = vrsqrt.pop %v882
    %v1103 = vmul.f32 %v882, %v1102
    %vm1104 = vcmp.eq.f32.partialorder %v882, inf
    %v1105 = vsel %vm1104, %v882, %v1103
    %vm1106 = vcmp.eq.f32.partialorder %v882, 0.0
    %v1107 = vand.u32 %v882, 2147483648
    %v1108 = vsel %vm1106, %v1107, %v1105
    %v1109 = vrsqrt.pop %v887
    %v1110 = vmul.f32 %v887, %v1109
    %vm1111 = vcmp.eq.f32.partialorder %v887, inf
    %v1112 = vsel %vm1111, %v887, %v1110
    %vm1113 = vcmp.eq.f32.partialorder %v887, 0.0
    %v1114 = vand.u32 %v887, 2147483648
    %v1115 = vsel %vm1113, %v1114, %v1112
    %v1116 = vrsqrt.pop %v892
    %v1117 = vmul.f32 %v892, %v1116
    %vm1118 = vcmp.eq.f32.partialorder %v892, inf
    %v1119 = vsel %vm1118, %v892, %v1117
    %vm1120 = vcmp.eq.f32.partialorder %v892, 0.0
    %v1121 = vand.u32 %v892, 2147483648
    %v1122 = vsel %vm1120, %v1121, %v1119
    %v1123 = vrsqrt.pop %v897
    %v1124 = vmul.f32 %v897, %v1123
    %vm1125 = vcmp.eq.f32.partialorder %v897, inf
    %v1126 = vsel %vm1125, %v897, %v1124
    %vm1127 = vcmp.eq.f32.partialorder %v897, 0.0
    %v1128 = vand.u32 %v897, 2147483648
    %v1129 = vsel %vm1127, %v1128, %v1126
    %v1130 = vrsqrt.pop %v902
    %v1131 = vmul.f32 %v902, %v1130
    %vm1132 = vcmp.eq.f32.partialorder %v902, inf
    %v1133 = vsel %vm1132, %v902, %v1131
    %vm1134 = vcmp.eq.f32.partialorder %v902, 0.0
    %v1135 = vand.u32 %v902, 2147483648
    %v1136 = vsel %vm1134, %v1135, %v1133
    %v1137 = vrsqrt.pop %v907
    %v1138 = vmul.f32 %v907, %v1137
    %vm1139 = vcmp.eq.f32.partialorder %v907, inf
    %v1140 = vsel %vm1139, %v907, %v1138
    %vm1141 = vcmp.eq.f32.partialorder %v907, 0.0
    %v1142 = vand.u32 %v907, 2147483648
    %v1143 = vsel %vm1141, %v1142, %v1140
    %v1144 = vrsqrt.pop %v912
    %v1145 = vmul.f32 %v912, %v1144
    %vm1146 = vcmp.eq.f32.partialorder %v912, inf
    %v1147 = vsel %vm1146, %v912, %v1145
    %vm1148 = vcmp.eq.f32.partialorder %v912, 0.0
    %v1149 = vand.u32 %v912, 2147483648
    %v1150 = vsel %vm1148, %v1149, %v1147
    %v1151 = vrsqrt.pop %v917
    %v1152 = vmul.f32 %v917, %v1151
    %vm1153 = vcmp.eq.f32.partialorder %v917, inf
    %v1154 = vsel %vm1153, %v917, %v1152
    %vm1155 = vcmp.eq.f32.partialorder %v917, 0.0
    %v1156 = vand.u32 %v917, 2147483648
    %v1157 = vsel %vm1155, %v1156, %v1154
    %v1158 = vrsqrt.pop %v922
    %v1159 = vmul.f32 %v922, %v1158
    %vm1160 = vcmp.eq.f32.partialorder %v922, inf
    %v1161 = vsel %vm1160, %v922, %v1159
    %vm1162 = vcmp.eq.f32.partialorder %v922, 0.0
    %v1163 = vand.u32 %v922, 2147483648
    %v1164 = vsel %vm1162, %v1163, %v1161
    %v1165 = vrsqrt.pop %v927
    %v1166 = vmul.f32 %v927, %v1165
    %vm1167 = vcmp.eq.f32.partialorder %v927, inf
    %v1168 = vsel %vm1167, %v927, %v1166
    %vm1169 = vcmp.eq.f32.partialorder %v927, 0.0
    %v1170 = vand.u32 %v927, 2147483648
    %v1171 = vsel %vm1169, %v1170, %v1168
    %v1172 = vrsqrt.pop %v932
    %v1173 = vmul.f32 %v932, %v1172
    %vm1174 = vcmp.eq.f32.partialorder %v932, inf
    %v1175 = vsel %vm1174, %v932, %v1173
    %vm1176 = vcmp.eq.f32.partialorder %v932, 0.0
    %v1177 = vand.u32 %v932, 2147483648
    %v1178 = vsel %vm1176, %v1177, %v1175
    %v1179 = vrsqrt.pop %v937
    %v1180 = vmul.f32 %v937, %v1179
    %vm1181 = vcmp.eq.f32.partialorder %v937, inf
    %v1182 = vsel %vm1181, %v937, %v1180
    %vm1183 = vcmp.eq.f32.partialorder %v937, 0.0
    %v1184 = vand.u32 %v937, 2147483648
    %v1185 = vsel %vm1183, %v1184, %v1182
    %v1186 = vrsqrt.pop %v942
    %v1187 = vmul.f32 %v942, %v1186
    %vm1188 = vcmp.eq.f32.partialorder %v942, inf
    %v1189 = vsel %vm1188, %v942, %v1187
    %vm1190 = vcmp.eq.f32.partialorder %v942, 0.0
    %v1191 = vand.u32 %v942, 2147483648
    %v1192 = vsel %vm1190, %v1191, %v1189
    %v1193 = vrsqrt.pop %v947
    %v1194 = vmul.f32 %v947, %v1193
    %vm1195 = vcmp.eq.f32.partialorder %v947, inf
    %v1196 = vsel %vm1195, %v947, %v1194
    %vm1197 = vcmp.eq.f32.partialorder %v947, 0.0
    %v1198 = vand.u32 %v947, 2147483648
    %v1199 = vsel %vm1197, %v1198, %v1196
    %v1200 = vrsqrt.pop %v952
    %v1201 = vmul.f32 %v952, %v1200
    %vm1202 = vcmp.eq.f32.partialorder %v952, inf
    %v1203 = vsel %vm1202, %v952, %v1201
    %vm1204 = vcmp.eq.f32.partialorder %v952, 0.0
    %v1205 = vand.u32 %v952, 2147483648
    %v1206 = vsel %vm1204, %v1205, %v1203
    %v1207 = vrsqrt.pop %v957
    %v1208 = vmul.f32 %v957, %v1207
    %vm1209 = vcmp.eq.f32.partialorder %v957, inf
    %v1210 = vsel %vm1209, %v957, %v1208
    %vm1211 = vcmp.eq.f32.partialorder %v957, 0.0
    %v1212 = vand.u32 %v957, 2147483648
    %v1213 = vsel %vm1211, %v1212, %v1210
    %v1214 = vrsqrt.pop %v1026
    %v1215 = vrsqrt.pop %v1031
    %v1216 = vrsqrt.pop %v1036
    %v1217 = vrsqrt.pop %v1041
    %v1218 = vrsqrt.pop %v1046
    %v1219 = vrsqrt.pop %v1051
    %v1220 = vrsqrt.pop %v1056
    %v1221 = vrsqrt.pop %v1061
    %v1222 = vrsqrt.pop %v1066
    %v1223 = vrsqrt.pop %v1071
    %v1224 = vrsqrt.pop %v1076
    %v1225 = vrsqrt.pop %v1081
    %v1226 = vrsqrt.pop %v1086
    %v1227 = vrsqrt.pop %v1091
    %v1228 = vrsqrt.pop %v1096
    %v1229 = vrsqrt.pop %v1101
    %v1230 = vmul.f32 %v1108, %v1214
    %v1231 = vmul.f32 %v1115, %v1215
    %v1232 = vmul.f32 %v1122, %v1216
    %v1233 = vmul.f32 %v1129, %v1217
    %v1234 = vmul.f32 %v1136, %v1218
    %v1235 = vmul.f32 %v1143, %v1219
    %v1236 = vmul.f32 %v1150, %v1220
    %v1237 = vmul.f32 %v1157, %v1221
    %v1238 = vmul.f32 %v1164, %v1222
    %v1239 = vmul.f32 %v1171, %v1223
    %v1240 = vmul.f32 %v1178, %v1224
    %v1241 = vmul.f32 %v1185, %v1225
    %v1242 = vmul.f32 %v1192, %v1226
    %v1243 = vmul.f32 %v1199, %v1227
    %v1244 = vmul.f32 %v1206, %v1228
    %v1245 = vmul.f32 %v1213, %v1229
    %v1246 = vmul.f32 %v813, %v309
    %v1247 = vmul.f32 %v813, %v311
    %v1248 = vmul.f32 %v813, %v380
    %v1249 = vmul.f32 %v813, %v382
    %v1250 = vadd.f32 %v33, %v1246
    %v1251 = vadd.f32 %v34, %v1247
    %v1252 = vadd.f32 %v35, %v1248
    %v1253 = vadd.f32 %v36, %v1249
    %v1254 = vmul.f32 %v1230, %v532
    %v1255 = vmul.f32 %v1230, %v534
    %v1256 = vmul.f32 %v1230, %v693
    %v1257 = vmul.f32 %v1230, %v695
    %v1258 = vmul.f32 %v1231, %v538
    %v1259 = vmul.f32 %v1231, %v540
    %v1260 = vmul.f32 %v1231, %v699
    %v1261 = vmul.f32 %v1231, %v701
    %v1262 = vmul.f32 %v1232, %v544
    %v1263 = vmul.f32 %v1232, %v546
    %v1264 = vmul.f32 %v1232, %v705
    %v1265 = vmul.f32 %v1232, %v707
    %v1266 = vmul.f32 %v1233, %v550
    %v1267 = vmul.f32 %v1233, %v552
    %v1268 = vmul.f32 %v1233, %v711
    %v1269 = vmul.f32 %v1233, %v713
    %v1270 = vmul.f32 %v1234, %v556
    %v1271 = vmul.f32 %v1234, %v558
    %v1272 = vmul.f32 %v1234, %v717
    %v1273 = vmul.f32 %v1234, %v719
    %v1274 = vmul.f32 %v1235, %v562
    %v1275 = vmul.f32 %v1235, %v564
    %v1276 = vmul.f32 %v1235, %v723
    %v1277 = vmul.f32 %v1235, %v725
    %v1278 = vmul.f32 %v1236, %v568
    %v1279 = vmul.f32 %v1236, %v570
    %v1280 = vmul.f32 %v1236, %v729
    %v1281 = vmul.f32 %v1236, %v731
    %v1282 = vmul.f32 %v1237, %v574
    %v1283 = vmul.f32 %v1237, %v576
    %v1284 = vmul.f32 %v1237, %v735
    %v1285 = vmul.f32 %v1237, %v737
    %v1286 = vmul.f32 %v1238, %v580
    %v1287 = vmul.f32 %v1238, %v582
    %v1288 = vmul.f32 %v1238, %v741
    %v1289 = vmul.f32 %v1238, %v743
    %v1290 = vmul.f32 %v1239, %v586
    %v1291 = vmul.f32 %v1239, %v588
    %v1292 = vmul.f32 %v1239, %v747
    %v1293 = vmul.f32 %v1239, %v749
    %v1294 = vmul.f32 %v1240, %v592
    %v1295 = vmul.f32 %v1240, %v594
    %v1296 = vmul.f32 %v1240, %v753
    %v1297 = vmul.f32 %v1240, %v755
    %v1298 = vmul.f32 %v1241, %v598
    %v1299 = vmul.f32 %v1241, %v600
    %v1300 = vmul.f32 %v1241, %v759
    %v1301 = vmul.f32 %v1241, %v761
    %v1302 = vmul.f32 %v1242, %v604
    %v1303 = vmul.f32 %v1242, %v606
    %v1304 = vmul.f32 %v1242, %v765
    %v1305 = vmul.f32 %v1242, %v767
    %v1306 = vmul.f32 %v1243, %v610
    %v1307 = vmul.f32 %v1243, %v612
    %v1308 = vmul.f32 %v1243, %v771
    %v1309 = vmul.f32 %v1243, %v773
    %v1310 = vmul.f32 %v1244, %v616
    %v1311 = vmul.f32 %v1244, %v618
    %v1312 = vmul.f32 %v1244, %v777
    %v1313 = vmul.f32 %v1244, %v779
    %v1314 = vmul.f32 %v1245, %v622
    %v1315 = vmul.f32 %v1245, %v624
    %v1316 = vmul.f32 %v1245, %v783
    %v1317 = vmul.f32 %v1245, %v785
    %v1318 = vadd.f32 %v37, %v1254
    %v1319 = vadd.f32 %v38, %v1255
    %v1320 = vadd.f32 %v39, %v1256
    %v1321 = vadd.f32 %v40, %v1257
    %v1322 = vadd.f32 %v41, %v1258
    %v1323 = vadd.f32 %v42, %v1259
    %v1324 = vadd.f32 %v43, %v1260
    %v1325 = vadd.f32 %v44, %v1261
    %v1326 = vadd.f32 %v45, %v1262
    %v1327 = vadd.f32 %v46, %v1263
    %v1328 = vadd.f32 %v47, %v1264
    %v1329 = vadd.f32 %v48, %v1265
    %v1330 = vadd.f32 %v49, %v1266
    %v1331 = vadd.f32 %v50, %v1267
    %v1332 = vadd.f32 %v51, %v1268
    %v1333 = vadd.f32 %v52, %v1269
    %v1334 = vadd.f32 %v53, %v1270
    %v1335 = vadd.f32 %v54, %v1271
    %v1336 = vadd.f32 %v55, %v1272
    %v1337 = vadd.f32 %v56, %v1273
    %v1338 = vadd.f32 %v57, %v1274
    %v1339 = vadd.f32 %v58, %v1275
    %v1340 = vadd.f32 %v59, %v1276
    %v1341 = vadd.f32 %v60, %v1277
    %v1342 = vadd.f32 %v61, %v1278
    %v1343 = vadd.f32 %v62, %v1279
    %v1344 = vadd.f32 %v63, %v1280
    %v1345 = vadd.f32 %v64, %v1281
    %v1346 = vadd.f32 %v65, %v1282
    %v1347 = vadd.f32 %v66, %v1283
    %v1348 = vadd.f32 %v67, %v1284
    %v1349 = vadd.f32 %v68, %v1285
    %v1350 = vadd.f32 %v69, %v1286
    %v1351 = vadd.f32 %v70, %v1287
    %v1352 = vadd.f32 %v71, %v1288
    %v1353 = vadd.f32 %v72, %v1289
    %v1354 = vadd.f32 %v73, %v1290
    %v1355 = vadd.f32 %v74, %v1291
    %v1356 = vadd.f32 %v75, %v1292
    %v1357 = vadd.f32 %v76, %v1293
    %v1358 = vadd.f32 %v77, %v1294
    %v1359 = vadd.f32 %v78, %v1295
    %v1360 = vadd.f32 %v79, %v1296
    %v1361 = vadd.f32 %v80, %v1297
    %v1362 = vadd.f32 %v81, %v1298
    %v1363 = vadd.f32 %v82, %v1299
    %v1364 = vadd.f32 %v83, %v1300
    %v1365 = vadd.f32 %v84, %v1301
    %v1366 = vadd.f32 %v85, %v1302
    %v1367 = vadd.f32 %v86, %v1303
    %v1368 = vadd.f32 %v87, %v1304
    %v1369 = vadd.f32 %v88, %v1305
    %v1370 = vadd.f32 %v89, %v1306
    %v1371 = vadd.f32 %v90, %v1307
    %v1372 = vadd.f32 %v91, %v1308
    %v1373 = vadd.f32 %v92, %v1309
    %v1374 = vadd.f32 %v93, %v1310
    %v1375 = vadd.f32 %v94, %v1311
    %v1376 = vadd.f32 %v95, %v1312
    %v1377 = vadd.f32 %v96, %v1313
    %v1378 = vadd.f32 %v97, %v1314
    %v1379 = vadd.f32 %v98, %v1315
    %v1380 = vadd.f32 %v99, %v1316
    %v1381 = vadd.f32 %v100, %v1317
    %v1382 = vpack.c.bf16 %v1318, %v1250
    %v1383 = vpack.c.bf16 %v1319, %v1251
    %v1384 = vpack.c.bf16 %v1320, %v1252
    %v1385 = vpack.c.bf16 %v1321, %v1253
    %v1386 = vpack.c.bf16 %v1326, %v1322
    %v1387 = vpack.c.bf16 %v1327, %v1323
    %v1388 = vpack.c.bf16 %v1328, %v1324
    %v1389 = vpack.c.bf16 %v1329, %v1325
    %v1390 = vpack.c.bf16 %v1334, %v1330
    %v1391 = vpack.c.bf16 %v1335, %v1331
    %v1392 = vpack.c.bf16 %v1336, %v1332
    %v1393 = vpack.c.bf16 %v1337, %v1333
    %v1394 = vpack.c.bf16 %v1342, %v1338
    %v1395 = vpack.c.bf16 %v1343, %v1339
    %v1396 = vpack.c.bf16 %v1344, %v1340
    %v1397 = vpack.c.bf16 %v1345, %v1341
    %v1398 = vpack.c.bf16 %v1350, %v1346
    %v1399 = vpack.c.bf16 %v1351, %v1347
    %v1400 = vpack.c.bf16 %v1352, %v1348
    %v1401 = vpack.c.bf16 %v1353, %v1349
    %v1402 = vpack.c.bf16 %v1358, %v1354
    %v1403 = vpack.c.bf16 %v1359, %v1355
    %v1404 = vpack.c.bf16 %v1360, %v1356
    %v1405 = vpack.c.bf16 %v1361, %v1357
    %v1406 = vpack.c.bf16 %v1366, %v1362
    %v1407 = vpack.c.bf16 %v1367, %v1363
    %v1408 = vpack.c.bf16 %v1368, %v1364
    %v1409 = vpack.c.bf16 %v1369, %v1365
    %v1410 = vpack.c.bf16 %v1374, %v1370
    %v1411 = vpack.c.bf16 %v1375, %v1371
    %v1412 = vpack.c.bf16 %v1376, %v1372
    %v1413 = vpack.c.bf16 %v1377, %v1373
    %v1414 = vpack.c.bf16 %v1378, %v1378
    %v1415 = vpack.c.bf16 %v1379, %v1379
    %v1416 = vpack.c.bf16 %v1380, %v1380
    %v1417 = vpack.c.bf16 %v1381, %v1381
    %v1418 = vld [vmem:[%s5] sm:$0xff]
    %v1419 = vld [vmem:[%s5 + $0x8] sm:$0xff]
    %v1420 = vld [vmem:[%s5 + $0x10] sm:$0xff]
    %v1421 = vld [vmem:[%s5 + $0x18] sm:$0xff]
    %v1422 = vld [vmem:[%s5 + $0x20] sm:$0xff]
    %v1423 = vld [vmem:[%s5 + $0x28] sm:$0xff]
    %v1424 = vld [vmem:[%s5 + $0x30] sm:$0xff]
    %v1425 = vld [vmem:[%s5 + $0x38] sm:$0xff]
    %v1426 = vld [vmem:[%s5 + $0x40] sm:$0xff]
    %v1427 = vld [vmem:[%s5 + $0x48] sm:$0xff]
    %v1428 = vld [vmem:[%s5 + $0x50] sm:$0xff]
    %v1429 = vld [vmem:[%s5 + $0x58] sm:$0xff]
    %v1430 = vld [vmem:[%s5 + $0x60] sm:$0xff]
    %v1431 = vld [vmem:[%s5 + $0x68] sm:$0xff]
    %v1432 = vld [vmem:[%s5 + $0x70] sm:$0xff]
    %v1433 = vld [vmem:[%s5 + $0x78] sm:$0xff]
    %v1434 = vld [vmem:[%s5 + $0x80] sm:$0xff]
    %v1435 = vld [vmem:[%s5 + $0x88] sm:$0xff]
    %v1436 = vld [vmem:[%s5 + $0x90] sm:$0xff]
    %v1437 = vld [vmem:[%s5 + $0x98] sm:$0xff]
    %v1438 = vld [vmem:[%s5 + $0xa0] sm:$0xff]
    %v1439 = vld [vmem:[%s5 + $0xa8] sm:$0xff]
    %v1440 = vld [vmem:[%s5 + $0xb0] sm:$0xff]
    %v1441 = vld [vmem:[%s5 + $0xb8] sm:$0xff]
    %v1442 = vld [vmem:[%s5 + $0xc0] sm:$0xff]
    %v1443 = vld [vmem:[%s5 + $0xc8] sm:$0xff]
    %v1444 = vld [vmem:[%s5 + $0xd0] sm:$0xff]
    %v1445 = vld [vmem:[%s5 + $0xd8] sm:$0xff]
    %v1446 = vld [vmem:[%s5 + $0xe0] sm:$0xff]
    %v1447 = vld [vmem:[%s5 + $0xe8] sm:$0xff]
    %v1448 = vld [vmem:[%s5 + $0xf0] sm:$0xff]
    %v1449 = vld [vmem:[%s5 + $0xf8] sm:$0xff]
    %v1450 = vld [vmem:[%s5 + $0x100] sm:$0xff]
    %v1451 = vld [vmem:[%s5 + $0x108] sm:$0xff]
    %v1452 = vld [vmem:[%s5 + $0x110] sm:$0xff]
    %v1453 = vld [vmem:[%s5 + $0x118] sm:$0xff]
    %v1454 = vld [vmem:[%s5 + $0x120] sm:$0xff]
    %v1455 = vld [vmem:[%s5 + $0x128] sm:$0xff]
    %v1456 = vld [vmem:[%s5 + $0x130] sm:$0xff]
    %v1457 = vld [vmem:[%s5 + $0x138] sm:$0xff]
    %v1458 = vld [vmem:[%s5 + $0x140] sm:$0xff]
    %v1459 = vld [vmem:[%s5 + $0x148] sm:$0xff]
    %v1460 = vld [vmem:[%s5 + $0x150] sm:$0xff]
    %v1461 = vld [vmem:[%s5 + $0x158] sm:$0xff]
    %v1462 = vld [vmem:[%s5 + $0x160] sm:$0xff]
    %v1463 = vld [vmem:[%s5 + $0x168] sm:$0xff]
    %v1464 = vld [vmem:[%s5 + $0x170] sm:$0xff]
    %v1465 = vld [vmem:[%s5 + $0x178] sm:$0xff]
    %v1466 = vld [vmem:[%s5 + $0x180] sm:$0xff]
    %v1467 = vld [vmem:[%s5 + $0x188] sm:$0xff]
    %v1468 = vld [vmem:[%s5 + $0x190] sm:$0xff]
    %v1469 = vld [vmem:[%s5 + $0x198] sm:$0xff]
    %v1470 = vld [vmem:[%s5 + $0x1a0] sm:$0xff]
    %v1471 = vld [vmem:[%s5 + $0x1a8] sm:$0xff]
    %v1472 = vld [vmem:[%s5 + $0x1b0] sm:$0xff]
    %v1473 = vld [vmem:[%s5 + $0x1b8] sm:$0xff]
    %v1474 = vld [vmem:[%s5 + $0x1c0] sm:$0xff]
    %v1475 = vld [vmem:[%s5 + $0x1c8] sm:$0xff]
    %v1476 = vld [vmem:[%s5 + $0x1d0] sm:$0xff]
    %v1477 = vld [vmem:[%s5 + $0x1d8] sm:$0xff]
    %v1478 = vld [vmem:[%s5 + $0x1e0] sm:$0xff]
    %v1479 = vld [vmem:[%s5 + $0x1e8] sm:$0xff]
    %v1480 = vld [vmem:[%s5 + $0x1f0] sm:$0xff]
    %v1481 = vld [vmem:[%s5 + $0x1f8] sm:$0xff]
    %v1482 = vld [vmem:[%s5 + $0x200] sm:$0xff]
    %v1483 = vld [vmem:[%s5 + $0x208] sm:$0xff]
    %v1484 = vld [vmem:[%s5 + $0x210] sm:$0xff]
    %v1485 = vld [vmem:[%s5 + $0x218] sm:$0xff]
    %v1486 = vld [vmem:[%s5 + $0x220] sm:$0xff]
    %v1487 = vld [vmem:[%s5 + $0x228] sm:$0xff]
    %v1488 = vld [vmem:[%s5 + $0x230] sm:$0xff]
    %v1489 = vld [vmem:[%s5 + $0x238] sm:$0xff]
    %v1490 = vld [vmem:[%s5 + $0x240] sm:$0xff]
    %v1491 = vld [vmem:[%s5 + $0x248] sm:$0xff]
    %v1492 = vld [vmem:[%s5 + $0x250] sm:$0xff]
    %v1493 = vld [vmem:[%s5 + $0x258] sm:$0xff]
    %v1494 = vld [vmem:[%s5 + $0x260] sm:$0xff]
    %v1495 = vld [vmem:[%s5 + $0x268] sm:$0xff]
    %v1496 = vld [vmem:[%s5 + $0x270] sm:$0xff]
    %v1497 = vld [vmem:[%s5 + $0x278] sm:$0xff]
    %v1498 = vld [vmem:[%s5 + $0x280] sm:$0xff]
    %v1499 = vld [vmem:[%s5 + $0x288] sm:$0xff]
    %v1500 = vld [vmem:[%s5 + $0x290] sm:$0xff]
    %v1501 = vld [vmem:[%s5 + $0x298] sm:$0xff]
    %v1502 = vld [vmem:[%s5 + $0x2a0] sm:$0xff]
    %v1503 = vld [vmem:[%s5 + $0x2a8] sm:$0xff]
    %v1504 = vld [vmem:[%s5 + $0x2b0] sm:$0xff]
    %v1505 = vld [vmem:[%s5 + $0x2b8] sm:$0xff]
    %v1506 = vld [vmem:[%s5 + $0x2c0] sm:$0xff]
    %v1507 = vld [vmem:[%s5 + $0x2c8] sm:$0xff]
    %v1508 = vld [vmem:[%s5 + $0x2d0] sm:$0xff]
    %v1509 = vld [vmem:[%s5 + $0x2d8] sm:$0xff]
    %v1510 = vld [vmem:[%s5 + $0x2e0] sm:$0xff]
    %v1511 = vld [vmem:[%s5 + $0x2e8] sm:$0xff]
    %v1512 = vld [vmem:[%s5 + $0x2f0] sm:$0xff]
    %v1513 = vld [vmem:[%s5 + $0x2f8] sm:$0xff]
    %v1514 = vld [vmem:[%s5 + $0x300] sm:$0xff]
    %v1515 = vld [vmem:[%s5 + $0x308] sm:$0xff]
    %v1516 = vld [vmem:[%s5 + $0x310] sm:$0xff]
    %v1517 = vld [vmem:[%s5 + $0x318] sm:$0xff]
    %v1518 = vld [vmem:[%s5 + $0x320] sm:$0xff]
    %v1519 = vld [vmem:[%s5 + $0x328] sm:$0xff]
    %v1520 = vld [vmem:[%s5 + $0x330] sm:$0xff]
    %v1521 = vld [vmem:[%s5 + $0x338] sm:$0xff]
    %v1522 = vld [vmem:[%s5 + $0x340] sm:$0xff]
    %v1523 = vld [vmem:[%s5 + $0x348] sm:$0xff]
    %v1524 = vld [vmem:[%s5 + $0x350] sm:$0xff]
    %v1525 = vld [vmem:[%s5 + $0x358] sm:$0xff]
    %v1526 = vld [vmem:[%s5 + $0x360] sm:$0xff]
    %v1527 = vld [vmem:[%s5 + $0x368] sm:$0xff]
    %v1528 = vld [vmem:[%s5 + $0x370] sm:$0xff]
    %v1529 = vld [vmem:[%s5 + $0x378] sm:$0xff]
    %v1530 = vld [vmem:[%s5 + $0x380] sm:$0xff]
    %v1531 = vld [vmem:[%s5 + $0x388] sm:$0xff]
    %v1532 = vld [vmem:[%s5 + $0x390] sm:$0xff]
    %v1533 = vld [vmem:[%s5 + $0x398] sm:$0xff]
    %v1534 = vld [vmem:[%s5 + $0x3a0] sm:$0xff]
    %v1535 = vld [vmem:[%s5 + $0x3a8] sm:$0xff]
    %v1536 = vld [vmem:[%s5 + $0x3b0] sm:$0xff]
    %v1537 = vld [vmem:[%s5 + $0x3b8] sm:$0xff]
    %v1538 = vld [vmem:[%s5 + $0x3c0] sm:$0xff]
    %v1539 = vld [vmem:[%s5 + $0x3c8] sm:$0xff]
    %v1540 = vld [vmem:[%s5 + $0x3d0] sm:$0xff]
    %v1541 = vld [vmem:[%s5 + $0x3d8] sm:$0xff]
    %v1542 = vld [vmem:[%s5 + $0x3e0] sm:$0xff]
    %v1543 = vld [vmem:[%s5 + $0x3e8] sm:$0xff]
    %v1544 = vld [vmem:[%s5 + $0x3f0] sm:$0xff]
    %v1545 = vld [vmem:[%s5 + $0x3f8] sm:$0xff]
    %v1546 = vld [vmem:[%s6] sm:$0xf]
    %v1548 = vlaneseq
    %v1549 = vshrl.u32 %v1548, 7
    %v1550 = vsub.s32 0, %v1549
    %v1551 = vrot.slane %v1546, %v1550
    %v1552 = vlaneseq
    %v1553 = vshrl.u32 %v1552, 7
    %v1554 = vsub.s32 1, %v1553
    %v1555 = vrot.slane %v1546, %v1554
    %v1556 = vlaneseq
    %v1557 = vshrl.u32 %v1556, 7
    %v1558 = vsub.s32 2, %v1557
    %v1559 = vrot.slane %v1546, %v1558
    %v1560 = vlaneseq
    %v1561 = vshrl.u32 %v1560, 7
    %v1562 = vsub.s32 3, %v1561
    %v1563 = vrot.slane %v1546, %v1562
    %v1696 = vunpack.c.l.b16 %v1418
    %v1697 = vunpack.c.h.b16 %v1418
    %v1698 = vunpack.c.l.b16 %v1419
    %v1699 = vunpack.c.h.b16 %v1419
    %v1700 = vunpack.c.l.b16 %v1420
    %v1701 = vunpack.c.h.b16 %v1420
    %v1702 = vunpack.c.l.b16 %v1421
    %v1703 = vunpack.c.h.b16 %v1421
    %v1704 = vunpack.c.l.b16 %v1422
    %v1705 = vunpack.c.h.b16 %v1422
    %v1706 = vunpack.c.l.b16 %v1423
    %v1707 = vunpack.c.h.b16 %v1423
    %v1708 = vunpack.c.l.b16 %v1424
    %v1709 = vunpack.c.h.b16 %v1424
    %v1710 = vunpack.c.l.b16 %v1425
    %v1711 = vunpack.c.h.b16 %v1425
    %v1712 = vunpack.c.l.b16 %v1426
    %v1713 = vunpack.c.h.b16 %v1426
    %v1714 = vunpack.c.l.b16 %v1427
    %v1715 = vunpack.c.h.b16 %v1427
    %v1716 = vunpack.c.l.b16 %v1428
    %v1717 = vunpack.c.h.b16 %v1428
    %v1718 = vunpack.c.l.b16 %v1429
    %v1719 = vunpack.c.h.b16 %v1429
    %v1720 = vunpack.c.l.b16 %v1430
    %v1721 = vunpack.c.h.b16 %v1430
    %v1722 = vunpack.c.l.b16 %v1431
    %v1723 = vunpack.c.h.b16 %v1431
    %v1724 = vunpack.c.l.b16 %v1432
    %v1725 = vunpack.c.h.b16 %v1432
    %v1726 = vunpack.c.l.b16 %v1433
    %v1727 = vunpack.c.h.b16 %v1433
    %v1728 = vunpack.c.l.b16 %v1434
    %v1729 = vunpack.c.h.b16 %v1434
    %v1730 = vunpack.c.l.b16 %v1435
    %v1731 = vunpack.c.h.b16 %v1435
    %v1732 = vunpack.c.l.b16 %v1436
    %v1733 = vunpack.c.h.b16 %v1436
    %v1734 = vunpack.c.l.b16 %v1437
    %v1735 = vunpack.c.h.b16 %v1437
    %v1736 = vunpack.c.l.b16 %v1438
    %v1737 = vunpack.c.h.b16 %v1438
    %v1738 = vunpack.c.l.b16 %v1439
    %v1739 = vunpack.c.h.b16 %v1439
    %v1740 = vunpack.c.l.b16 %v1440
    %v1741 = vunpack.c.h.b16 %v1440
    %v1742 = vunpack.c.l.b16 %v1441
    %v1743 = vunpack.c.h.b16 %v1441
    %v1744 = vunpack.c.l.b16 %v1442
    %v1745 = vunpack.c.h.b16 %v1442
    %v1746 = vunpack.c.l.b16 %v1443
    %v1747 = vunpack.c.h.b16 %v1443
    %v1748 = vunpack.c.l.b16 %v1444
    %v1749 = vunpack.c.h.b16 %v1444
    %v1750 = vunpack.c.l.b16 %v1445
    %v1751 = vunpack.c.h.b16 %v1445
    %v1752 = vunpack.c.l.b16 %v1446
    %v1753 = vunpack.c.h.b16 %v1446
    %v1754 = vunpack.c.l.b16 %v1447
    %v1755 = vunpack.c.h.b16 %v1447
    %v1756 = vunpack.c.l.b16 %v1448
    %v1757 = vunpack.c.h.b16 %v1448
    %v1758 = vunpack.c.l.b16 %v1449
    %v1759 = vunpack.c.h.b16 %v1449
    %v1760 = vunpack.c.l.b16 %v1450
    %v1761 = vunpack.c.h.b16 %v1450
    %v1762 = vunpack.c.l.b16 %v1451
    %v1763 = vunpack.c.h.b16 %v1451
    %v1764 = vunpack.c.l.b16 %v1452
    %v1765 = vunpack.c.h.b16 %v1452
    %v1766 = vunpack.c.l.b16 %v1453
    %v1767 = vunpack.c.h.b16 %v1453
    %v1768 = vunpack.c.l.b16 %v1454
    %v1769 = vunpack.c.h.b16 %v1454
    %v1770 = vunpack.c.l.b16 %v1455
    %v1771 = vunpack.c.h.b16 %v1455
    %v1772 = vunpack.c.l.b16 %v1456
    %v1773 = vunpack.c.h.b16 %v1456
    %v1774 = vunpack.c.l.b16 %v1457
    %v1775 = vunpack.c.h.b16 %v1457
    %v1776 = vunpack.c.l.b16 %v1458
    %v1777 = vunpack.c.h.b16 %v1458
    %v1778 = vunpack.c.l.b16 %v1459
    %v1779 = vunpack.c.h.b16 %v1459
    %v1780 = vunpack.c.l.b16 %v1460
    %v1781 = vunpack.c.h.b16 %v1460
    %v1782 = vunpack.c.l.b16 %v1461
    %v1783 = vunpack.c.h.b16 %v1461
    %v1784 = vunpack.c.l.b16 %v1462
    %v1785 = vunpack.c.h.b16 %v1462
    %v1786 = vunpack.c.l.b16 %v1463
    %v1787 = vunpack.c.h.b16 %v1463
    %v1788 = vunpack.c.l.b16 %v1464
    %v1789 = vunpack.c.h.b16 %v1464
    %v1790 = vunpack.c.l.b16 %v1465
    %v1791 = vunpack.c.h.b16 %v1465
    %v1792 = vunpack.c.l.b16 %v1466
    %v1793 = vunpack.c.h.b16 %v1466
    %v1794 = vunpack.c.l.b16 %v1467
    %v1795 = vunpack.c.h.b16 %v1467
    %v1796 = vunpack.c.l.b16 %v1468
    %v1797 = vunpack.c.h.b16 %v1468
    %v1798 = vunpack.c.l.b16 %v1469
    %v1799 = vunpack.c.h.b16 %v1469
    %v1800 = vunpack.c.l.b16 %v1470
    %v1801 = vunpack.c.h.b16 %v1470
    %v1802 = vunpack.c.l.b16 %v1471
    %v1803 = vunpack.c.h.b16 %v1471
    %v1804 = vunpack.c.l.b16 %v1472
    %v1805 = vunpack.c.h.b16 %v1472
    %v1806 = vunpack.c.l.b16 %v1473
    %v1807 = vunpack.c.h.b16 %v1473
    %v1808 = vunpack.c.l.b16 %v1474
    %v1809 = vunpack.c.h.b16 %v1474
    %v1810 = vunpack.c.l.b16 %v1475
    %v1811 = vunpack.c.h.b16 %v1475
    %v1812 = vunpack.c.l.b16 %v1476
    %v1813 = vunpack.c.h.b16 %v1476
    %v1814 = vunpack.c.l.b16 %v1477
    %v1815 = vunpack.c.h.b16 %v1477
    %v1816 = vunpack.c.l.b16 %v1478
    %v1817 = vunpack.c.h.b16 %v1478
    %v1818 = vunpack.c.l.b16 %v1479
    %v1819 = vunpack.c.h.b16 %v1479
    %v1820 = vunpack.c.l.b16 %v1480
    %v1821 = vunpack.c.h.b16 %v1480
    %v1822 = vunpack.c.l.b16 %v1481
    %v1823 = vunpack.c.h.b16 %v1481
    %v1824 = vunpack.c.l.b16 %v1482
    %v1825 = vunpack.c.h.b16 %v1482
    %v1826 = vunpack.c.l.b16 %v1483
    %v1827 = vunpack.c.h.b16 %v1483
    %v1828 = vunpack.c.l.b16 %v1484
    %v1829 = vunpack.c.h.b16 %v1484
    %v1830 = vunpack.c.l.b16 %v1485
    %v1831 = vunpack.c.h.b16 %v1485
    %v1832 = vunpack.c.l.b16 %v1486
    %v1833 = vunpack.c.h.b16 %v1486
    %v1834 = vunpack.c.l.b16 %v1487
    %v1835 = vunpack.c.h.b16 %v1487
    %v1836 = vunpack.c.l.b16 %v1488
    %v1837 = vunpack.c.h.b16 %v1488
    %v1838 = vunpack.c.l.b16 %v1489
    %v1839 = vunpack.c.h.b16 %v1489
    %v1840 = vunpack.c.l.b16 %v1490
    %v1841 = vunpack.c.h.b16 %v1490
    %v1842 = vunpack.c.l.b16 %v1491
    %v1843 = vunpack.c.h.b16 %v1491
    %v1844 = vunpack.c.l.b16 %v1492
    %v1845 = vunpack.c.h.b16 %v1492
    %v1846 = vunpack.c.l.b16 %v1493
    %v1847 = vunpack.c.h.b16 %v1493
    %v1848 = vunpack.c.l.b16 %v1494
    %v1849 = vunpack.c.h.b16 %v1494
    %v1850 = vunpack.c.l.b16 %v1495
    %v1851 = vunpack.c.h.b16 %v1495
    %v1852 = vunpack.c.l.b16 %v1496
    %v1853 = vunpack.c.h.b16 %v1496
    %v1854 = vunpack.c.l.b16 %v1497
    %v1855 = vunpack.c.h.b16 %v1497
    %v1856 = vunpack.c.l.b16 %v1498
    %v1857 = vunpack.c.h.b16 %v1498
    %v1858 = vunpack.c.l.b16 %v1499
    %v1859 = vunpack.c.h.b16 %v1499
    %v1860 = vunpack.c.l.b16 %v1500
    %v1861 = vunpack.c.h.b16 %v1500
    %v1862 = vunpack.c.l.b16 %v1501
    %v1863 = vunpack.c.h.b16 %v1501
    %v1864 = vunpack.c.l.b16 %v1502
    %v1865 = vunpack.c.h.b16 %v1502
    %v1866 = vunpack.c.l.b16 %v1503
    %v1867 = vunpack.c.h.b16 %v1503
    %v1868 = vunpack.c.l.b16 %v1504
    %v1869 = vunpack.c.h.b16 %v1504
    %v1870 = vunpack.c.l.b16 %v1505
    %v1871 = vunpack.c.h.b16 %v1505
    %v1872 = vunpack.c.l.b16 %v1506
    %v1873 = vunpack.c.h.b16 %v1506
    %v1874 = vunpack.c.l.b16 %v1507
    %v1875 = vunpack.c.h.b16 %v1507
    %v1876 = vunpack.c.l.b16 %v1508
    %v1877 = vunpack.c.h.b16 %v1508
    %v1878 = vunpack.c.l.b16 %v1509
    %v1879 = vunpack.c.h.b16 %v1509
    %v1880 = vunpack.c.l.b16 %v1510
    %v1881 = vunpack.c.h.b16 %v1510
    %v1882 = vunpack.c.l.b16 %v1511
    %v1883 = vunpack.c.h.b16 %v1511
    %v1884 = vunpack.c.l.b16 %v1512
    %v1885 = vunpack.c.h.b16 %v1512
    %v1886 = vunpack.c.l.b16 %v1513
    %v1887 = vunpack.c.h.b16 %v1513
    %v1888 = vunpack.c.l.b16 %v1514
    %v1889 = vunpack.c.h.b16 %v1514
    %v1890 = vunpack.c.l.b16 %v1515
    %v1891 = vunpack.c.h.b16 %v1515
    %v1892 = vunpack.c.l.b16 %v1516
    %v1893 = vunpack.c.h.b16 %v1516
    %v1894 = vunpack.c.l.b16 %v1517
    %v1895 = vunpack.c.h.b16 %v1517
    %v1896 = vunpack.c.l.b16 %v1518
    %v1897 = vunpack.c.h.b16 %v1518
    %v1898 = vunpack.c.l.b16 %v1519
    %v1899 = vunpack.c.h.b16 %v1519
    %v1900 = vunpack.c.l.b16 %v1520
    %v1901 = vunpack.c.h.b16 %v1520
    %v1902 = vunpack.c.l.b16 %v1521
    %v1903 = vunpack.c.h.b16 %v1521
    %v1904 = vunpack.c.l.b16 %v1522
    %v1905 = vunpack.c.h.b16 %v1522
    %v1906 = vunpack.c.l.b16 %v1523
    %v1907 = vunpack.c.h.b16 %v1523
    %v1908 = vunpack.c.l.b16 %v1524
    %v1909 = vunpack.c.h.b16 %v1524
    %v1910 = vunpack.c.l.b16 %v1525
    %v1911 = vunpack.c.h.b16 %v1525
    %v1912 = vunpack.c.l.b16 %v1526
    %v1913 = vunpack.c.h.b16 %v1526
    %v1914 = vunpack.c.l.b16 %v1527
    %v1915 = vunpack.c.h.b16 %v1527
    %v1916 = vunpack.c.l.b16 %v1528
    %v1917 = vunpack.c.h.b16 %v1528
    %v1918 = vunpack.c.l.b16 %v1529
    %v1919 = vunpack.c.h.b16 %v1529
    %v1920 = vunpack.c.l.b16 %v1530
    %v1921 = vunpack.c.h.b16 %v1530
    %v1922 = vunpack.c.l.b16 %v1531
    %v1923 = vunpack.c.h.b16 %v1531
    %v1924 = vunpack.c.l.b16 %v1532
    %v1925 = vunpack.c.h.b16 %v1532
    %v1926 = vunpack.c.l.b16 %v1533
    %v1927 = vunpack.c.h.b16 %v1533
    %v1928 = vunpack.c.l.b16 %v1534
    %v1929 = vunpack.c.h.b16 %v1534
    %v1930 = vunpack.c.l.b16 %v1535
    %v1931 = vunpack.c.h.b16 %v1535
    %v1932 = vunpack.c.l.b16 %v1536
    %v1933 = vunpack.c.h.b16 %v1536
    %v1934 = vunpack.c.l.b16 %v1537
    %v1935 = vunpack.c.h.b16 %v1537
    %v1936 = vunpack.c.l.b16 %v1538
    %v1937 = vunpack.c.h.b16 %v1538
    %v1938 = vunpack.c.l.b16 %v1539
    %v1939 = vunpack.c.h.b16 %v1539
    %v1940 = vunpack.c.l.b16 %v1540
    %v1941 = vunpack.c.h.b16 %v1540
    %v1942 = vunpack.c.l.b16 %v1541
    %v1943 = vunpack.c.h.b16 %v1541
    %v1944 = vunpack.c.l.b16 %v1542
    %v1945 = vunpack.c.h.b16 %v1542
    %v1946 = vunpack.c.l.b16 %v1543
    %v1947 = vunpack.c.h.b16 %v1543
    %v1948 = vunpack.c.l.b16 %v1544
    %v1949 = vunpack.c.h.b16 %v1544
    %v1950 = vunpack.c.l.b16 %v1545
    %v1951 = vunpack.c.h.b16 %v1545
    %v1952 = vpack.c.b16 %v1700, %v1696
    %v1953 = vpack.c.b16 %v1701, %v1697
    %v1954 = vpack.c.b16 %v1702, %v1698
    %v1955 = vpack.c.b16 %v1703, %v1699
    %v1956 = vpack.c.b16 %v1708, %v1704
    %v1957 = vpack.c.b16 %v1709, %v1705
    %v1958 = vpack.c.b16 %v1710, %v1706
    %v1959 = vpack.c.b16 %v1711, %v1707
    %v1960 = vpack.c.b16 %v1716, %v1712
    %v1961 = vpack.c.b16 %v1717, %v1713
    %v1962 = vpack.c.b16 %v1718, %v1714
    %v1963 = vpack.c.b16 %v1719, %v1715
    %v1964 = vpack.c.b16 %v1724, %v1720
    %v1965 = vpack.c.b16 %v1725, %v1721
    %v1966 = vpack.c.b16 %v1726, %v1722
    %v1967 = vpack.c.b16 %v1727, %v1723
    %v1968 = vpack.c.b16 %v1732, %v1728
    %v1969 = vpack.c.b16 %v1733, %v1729
    %v1970 = vpack.c.b16 %v1734, %v1730
    %v1971 = vpack.c.b16 %v1735, %v1731
    %v1972 = vpack.c.b16 %v1740, %v1736
    %v1973 = vpack.c.b16 %v1741, %v1737
    %v1974 = vpack.c.b16 %v1742, %v1738
    %v1975 = vpack.c.b16 %v1743, %v1739
    %v1976 = vpack.c.b16 %v1748, %v1744
    %v1977 = vpack.c.b16 %v1749, %v1745
    %v1978 = vpack.c.b16 %v1750, %v1746
    %v1979 = vpack.c.b16 %v1751, %v1747
    %v1980 = vpack.c.b16 %v1756, %v1752
    %v1981 = vpack.c.b16 %v1757, %v1753
    %v1982 = vpack.c.b16 %v1758, %v1754
    %v1983 = vpack.c.b16 %v1759, %v1755
    %v1984 = vpack.c.b16 %v1764, %v1760
    %v1985 = vpack.c.b16 %v1765, %v1761
    %v1986 = vpack.c.b16 %v1766, %v1762
    %v1987 = vpack.c.b16 %v1767, %v1763
    %v1988 = vpack.c.b16 %v1772, %v1768
    %v1989 = vpack.c.b16 %v1773, %v1769
    %v1990 = vpack.c.b16 %v1774, %v1770
    %v1991 = vpack.c.b16 %v1775, %v1771
    %v1992 = vpack.c.b16 %v1780, %v1776
    %v1993 = vpack.c.b16 %v1781, %v1777
    %v1994 = vpack.c.b16 %v1782, %v1778
    %v1995 = vpack.c.b16 %v1783, %v1779
    %v1996 = vpack.c.b16 %v1788, %v1784
    %v1997 = vpack.c.b16 %v1789, %v1785
    %v1998 = vpack.c.b16 %v1790, %v1786
    %v1999 = vpack.c.b16 %v1791, %v1787
    %v2000 = vpack.c.b16 %v1796, %v1792
    %v2001 = vpack.c.b16 %v1797, %v1793
    %v2002 = vpack.c.b16 %v1798, %v1794
    %v2003 = vpack.c.b16 %v1799, %v1795
    %v2004 = vpack.c.b16 %v1804, %v1800
    %v2005 = vpack.c.b16 %v1805, %v1801
    %v2006 = vpack.c.b16 %v1806, %v1802
    %v2007 = vpack.c.b16 %v1807, %v1803
    %v2008 = vpack.c.b16 %v1812, %v1808
    %v2009 = vpack.c.b16 %v1813, %v1809
    %v2010 = vpack.c.b16 %v1814, %v1810
    %v2011 = vpack.c.b16 %v1815, %v1811
    %v2012 = vpack.c.b16 %v1820, %v1816
    %v2013 = vpack.c.b16 %v1821, %v1817
    %v2014 = vpack.c.b16 %v1822, %v1818
    %v2015 = vpack.c.b16 %v1823, %v1819
    %v2016 = vpack.c.b16 %v1828, %v1824
    %v2017 = vpack.c.b16 %v1829, %v1825
    %v2018 = vpack.c.b16 %v1830, %v1826
    %v2019 = vpack.c.b16 %v1831, %v1827
    %v2020 = vpack.c.b16 %v1836, %v1832
    %v2021 = vpack.c.b16 %v1837, %v1833
    %v2022 = vpack.c.b16 %v1838, %v1834
    %v2023 = vpack.c.b16 %v1839, %v1835
    %v2024 = vpack.c.b16 %v1844, %v1840
    %v2025 = vpack.c.b16 %v1845, %v1841
    %v2026 = vpack.c.b16 %v1846, %v1842
    %v2027 = vpack.c.b16 %v1847, %v1843
    %v2028 = vpack.c.b16 %v1852, %v1848
    %v2029 = vpack.c.b16 %v1853, %v1849
    %v2030 = vpack.c.b16 %v1854, %v1850
    %v2031 = vpack.c.b16 %v1855, %v1851
    %v2032 = vpack.c.b16 %v1860, %v1856
    %v2033 = vpack.c.b16 %v1861, %v1857
    %v2034 = vpack.c.b16 %v1862, %v1858
    %v2035 = vpack.c.b16 %v1863, %v1859
    %v2036 = vpack.c.b16 %v1868, %v1864
    %v2037 = vpack.c.b16 %v1869, %v1865
    %v2038 = vpack.c.b16 %v1870, %v1866
    %v2039 = vpack.c.b16 %v1871, %v1867
    %v2040 = vpack.c.b16 %v1876, %v1872
    %v2041 = vpack.c.b16 %v1877, %v1873
    %v2042 = vpack.c.b16 %v1878, %v1874
    %v2043 = vpack.c.b16 %v1879, %v1875
    %v2044 = vpack.c.b16 %v1884, %v1880
    %v2045 = vpack.c.b16 %v1885, %v1881
    %v2046 = vpack.c.b16 %v1886, %v1882
    %v2047 = vpack.c.b16 %v1887, %v1883
    %v2048 = vpack.c.b16 %v1892, %v1888
    %v2049 = vpack.c.b16 %v1893, %v1889
    %v2050 = vpack.c.b16 %v1894, %v1890
    %v2051 = vpack.c.b16 %v1895, %v1891
    %v2052 = vpack.c.b16 %v1900, %v1896
    %v2053 = vpack.c.b16 %v1901, %v1897
    %v2054 = vpack.c.b16 %v1902, %v1898
    %v2055 = vpack.c.b16 %v1903, %v1899
    %v2056 = vpack.c.b16 %v1908, %v1904
    %v2057 = vpack.c.b16 %v1909, %v1905
    %v2058 = vpack.c.b16 %v1910, %v1906
    %v2059 = vpack.c.b16 %v1911, %v1907
    %v2060 = vpack.c.b16 %v1916, %v1912
    %v2061 = vpack.c.b16 %v1917, %v1913
    %v2062 = vpack.c.b16 %v1918, %v1914
    %v2063 = vpack.c.b16 %v1919, %v1915
    %v2064 = vpack.c.b16 %v1924, %v1920
    %v2065 = vpack.c.b16 %v1925, %v1921
    %v2066 = vpack.c.b16 %v1926, %v1922
    %v2067 = vpack.c.b16 %v1927, %v1923
    %v2068 = vpack.c.b16 %v1932, %v1928
    %v2069 = vpack.c.b16 %v1933, %v1929
    %v2070 = vpack.c.b16 %v1934, %v1930
    %v2071 = vpack.c.b16 %v1935, %v1931
    %v2072 = vpack.c.b16 %v1940, %v1936
    %v2073 = vpack.c.b16 %v1941, %v1937
    %v2074 = vpack.c.b16 %v1942, %v1938
    %v2075 = vpack.c.b16 %v1943, %v1939
    %v2076 = vpack.c.b16 %v1948, %v1944
    %v2077 = vpack.c.b16 %v1949, %v1945
    %v2078 = vpack.c.b16 %v1950, %v1946
    %v2079 = vpack.c.b16 %v1951, %v1947
    %2208 = vmatprep.subr.bf16.mxu0 %v1953
    %2209 = vmatpush1.bf16.msra.mxu0 %v1952
    %2210 = vmatprep.subr.bf16.mxu0 %v1957
    %2211 = vmatpush1.bf16.msra.mxu0 %v1956
    %2212 = vmatprep.subr.bf16.mxu0 %v1961
    %2213 = vmatpush1.bf16.msra.mxu0 %v1960
    %2214 = vmatprep.subr.bf16.mxu0 %v1965
    %2215 = vmatpush1.bf16.msra.mxu0 %v1964
    %2216 = vmatprep.subr.bf16.mxu0 %v1969
    %2217 = vmatpush1.bf16.msra.mxu0 %v1968
    %2218 = vmatprep.subr.bf16.mxu0 %v1973
    %2219 = vmatpush1.bf16.msra.mxu0 %v1972
    %2220 = vmatprep.subr.bf16.mxu0 %v1977
    %2221 = vmatpush1.bf16.msra.mxu0 %v1976
    %2222 = vmatprep.subr.bf16.mxu0 %v1981
    %2223 = vmatpush1.bf16.msra.mxu0 %v1980
    %2224 = vmatprep.subr.bf16.mxu0 %v1985
    %2225 = vmatpush1.bf16.msra.mxu0 %v1984
    %2226 = vmatprep.subr.bf16.mxu0 %v1989
    %2227 = vmatpush1.bf16.msra.mxu0 %v1988
    %2228 = vmatprep.subr.bf16.mxu0 %v1993
    %2229 = vmatpush1.bf16.msra.mxu0 %v1992
    %2230 = vmatprep.subr.bf16.mxu0 %v1997
    %2231 = vmatpush1.bf16.msra.mxu0 %v1996
    %2232 = vmatprep.subr.bf16.mxu0 %v2001
    %2233 = vmatpush1.bf16.msra.mxu0 %v2000
    %2234 = vmatprep.subr.bf16.mxu0 %v2005
    %2235 = vmatpush1.bf16.msra.mxu0 %v2004
    %2236 = vmatprep.subr.bf16.mxu0 %v2009
    %2237 = vmatpush1.bf16.msra.mxu0 %v2008
    %2238 = vmatprep.subr.bf16.mxu0 %v2013
    %2239 = vmatpush1.bf16.msra.mxu0 %v2012
    %2240 = vmatprep.mubr.bf16.mxu0 %v1383
    %2241 = vmatmul.mubr.bf16.gmra.mrb[0].mxu0 %v1382
    %v2242 = vpop.f32.mrb[0].mxu0
    %v2243 = vadd.f32 %v1551, %v2242
    %v2244 = vpop.f32.mrb[0].mxu0
    %v2245 = vadd.f32 %v1555, %v2244
    %v2246 = vpop.f32.mrb[0].mxu0
    %v2247 = vadd.f32 %v1551, %v2246
    %v2248 = vpop.f32.mrb[0].mxu0
    %v2249 = vadd.f32 %v1555, %v2248
    %2250 = vmatprep.mubr.bf16.mxu0 %v1387
    %2251 = vmatmul.mubr.bf16.gmra.mrb[0].mxu0 %v1386
    %v2252 = vpop.f32.mrb[0].mxu0
    %v2253 = vadd.f32 %v1551, %v2252
    %v2254 = vpop.f32.mrb[0].mxu0
    %v2255 = vadd.f32 %v1555, %v2254
    %v2256 = vpop.f32.mrb[0].mxu0
    %v2257 = vadd.f32 %v1551, %v2256
    %v2258 = vpop.f32.mrb[0].mxu0
    %v2259 = vadd.f32 %v1555, %v2258
    %2260 = vmatprep.mubr.bf16.mxu0 %v1391
    %2261 = vmatmul.mubr.bf16.gmra.mrb[0].mxu0 %v1390
    %v2262 = vpop.f32.mrb[0].mxu0
    %v2263 = vadd.f32 %v1551, %v2262
    %v2264 = vpop.f32.mrb[0].mxu0
    %v2265 = vadd.f32 %v1555, %v2264
    %v2266 = vpop.f32.mrb[0].mxu0
    %v2267 = vadd.f32 %v1551, %v2266
    %v2268 = vpop.f32.mrb[0].mxu0
    %v2269 = vadd.f32 %v1555, %v2268
    %2270 = vmatprep.mubr.bf16.mxu0 %v1395
    %2271 = vmatmul.mubr.bf16.gmra.mrb[0].mxu0 %v1394
    %v2272 = vpop.f32.mrb[0].mxu0
    %v2273 = vadd.f32 %v1551, %v2272
    %v2274 = vpop.f32.mrb[0].mxu0
    %v2275 = vadd.f32 %v1555, %v2274
    %v2276 = vpop.f32.mrb[0].mxu0
    %v2277 = vadd.f32 %v1551, %v2276
    %v2278 = vpop.f32.mrb[0].mxu0
    %v2279 = vadd.f32 %v1555, %v2278
    %2280 = vmatprep.mubr.bf16.mxu0 %v1399
    %2281 = vmatmul.mubr.bf16.gmra.mrb[0].mxu0 %v1398
    %v2282 = vpop.f32.mrb[0].mxu0
    %v2283 = vadd.f32 %v1551, %v2282
    %v2284 = vpop.f32.mrb[0].mxu0
    %v2285 = vadd.f32 %v1555, %v2284
    %v2286 = vpop.f32.mrb[0].mxu0
    %v2287 = vadd.f32 %v1551, %v2286
    %v2288 = vpop.f32.mrb[0].mxu0
    %v2289 = vadd.f32 %v1555, %v2288
    %2290 = vmatprep.mubr.bf16.mxu0 %v1403
    %2291 = vmatmul.mubr.bf16.gmra.mrb[0].mxu0 %v1402
    %v2292 = vpop.f32.mrb[0].mxu0
    %v2293 = vadd.f32 %v1551, %v2292
    %v2294 = vpop.f32.mrb[0].mxu0
    %v2295 = vadd.f32 %v1555, %v2294
    %v2296 = vpop.f32.mrb[0].mxu0
    %v2297 = vadd.f32 %v1551, %v2296
    %v2298 = vpop.f32.mrb[0].mxu0
    %v2299 = vadd.f32 %v1555, %v2298
    %2300 = vmatprep.mubr.bf16.mxu0 %v1407
    %2301 = vmatmul.mubr.bf16.gmra.mrb[0].mxu0 %v1406
    %v2302 = vpop.f32.mrb[0].mxu0
    %v2303 = vadd.f32 %v1551, %v2302
    %v2304 = vpop.f32.mrb[0].mxu0
    %v2305 = vadd.f32 %v1555, %v2304
    %v2306 = vpop.f32.mrb[0].mxu0
    %v2307 = vadd.f32 %v1551, %v2306
    %v2308 = vpop.f32.mrb[0].mxu0
    %v2309 = vadd.f32 %v1555, %v2308
    %2310 = vmatprep.mubr.bf16.mxu0 %v1411
    %2311 = vmatmul.mubr.bf16.gmra.mrb[0].mxu0 %v1410
    %v2312 = vpop.f32.mrb[0].mxu0
    %v2313 = vadd.f32 %v1551, %v2312
    %v2314 = vpop.f32.mrb[0].mxu0
    %v2315 = vadd.f32 %v1555, %v2314
    %v2316 = vpop.f32.mrb[0].mxu0
    %v2317 = vadd.f32 %v1551, %v2316
    %v2318 = vpop.f32.mrb[0].mxu0
    %v2319 = vadd.f32 %v1555, %v2318
    %2320 = vmatprep.mubr.bf16.mxu0 %v1415
    %2321 = vmatmul.mubr.bf16.gmra.mrb[0].mxu0 %v1414
    %v2322 = vpop.f32.mrb[0].mxu0
    %v2323 = vadd.f32 %v1551, %v2322
    %v2324 = vpop.f32.mrb[0].mxu0
    %v2325 = vadd.f32 %v1555, %v2324
    %v2326 = vpop.f32.mrb[0].mxu0
    %v2327 = vpop.f32.mrb[0].mxu0
    %2328 = vdwg.mxu0
    %2329 = vmatprep.subr.bf16.mxu0 %v2017
    %2330 = vmatpush1.bf16.msra.mxu0 %v2016
    %2331 = vmatprep.subr.bf16.mxu0 %v2021
    %2332 = vmatpush1.bf16.msra.mxu0 %v2020
    %2333 = vmatprep.subr.bf16.mxu0 %v2025
    %2334 = vmatpush1.bf16.msra.mxu0 %v2024
    %2335 = vmatprep.subr.bf16.mxu0 %v2029
    %2336 = vmatpush1.bf16.msra.mxu0 %v2028
    %2337 = vmatprep.subr.bf16.mxu0 %v2033
    %2338 = vmatpush1.bf16.msra.mxu0 %v2032
    %2339 = vmatprep.subr.bf16.mxu0 %v2037
    %2340 = vmatpush1.bf16.msra.mxu0 %v2036
    %2341 = vmatprep.subr.bf16.mxu0 %v2041
    %2342 = vmatpush1.bf16.msra.mxu0 %v2040
    %2343 = vmatprep.subr.bf16.mxu0 %v2045
    %2344 = vmatpush1.bf16.msra.mxu0 %v2044
    %2345 = vmatprep.subr.bf16.mxu0 %v2049
    %2346 = vmatpush1.bf16.msra.mxu0 %v2048
    %2347 = vmatprep.subr.bf16.mxu0 %v2053
    %2348 = vmatpush1.bf16.msra.mxu0 %v2052
    %2349 = vmatprep.subr.bf16.mxu0 %v2057
    %2350 = vmatpush1.bf16.msra.mxu0 %v2056
    %2351 = vmatprep.subr.bf16.mxu0 %v2061
    %2352 = vmatpush1.bf16.msra.mxu0 %v2060
    %2353 = vmatprep.subr.bf16.mxu0 %v2065
    %2354 = vmatpush1.bf16.msra.mxu0 %v2064
    %2355 = vmatprep.subr.bf16.mxu0 %v2069
    %2356 = vmatpush1.bf16.msra.mxu0 %v2068
    %2357 = vmatprep.subr.bf16.mxu0 %v2073
    %2358 = vmatpush1.bf16.msra.mxu0 %v2072
    %2359 = vmatprep.subr.bf16.mxu0 %v2077
    %2360 = vmatpush1.bf16.msra.mxu0 %v2076
    %2361 = vmatprep.mubr.bf16.mxu0 %v1385
    %2362 = vmatmul.mubr.bf16.gmra.mrb[0].mxu0 %v1384
    %v2363 = vpop.f32.mrb[0].mxu0
    %v2364 = vadd.f32 %v2243, %v2363
    %v2365 = vpop.f32.mrb[0].mxu0
    %v2366 = vadd.f32 %v2245, %v2365
    %v2367 = vpop.f32.mrb[0].mxu0
    %v2368 = vadd.f32 %v2247, %v2367
    %v2369 = vpop.f32.mrb[0].mxu0
    %v2370 = vadd.f32 %v2249, %v2369
    %2371 = vmatprep.mubr.bf16.mxu0 %v1389
    %2372 = vmatmul.mubr.bf16.gmra.mrb[0].mxu0 %v1388
    %v2373 = vpop.f32.mrb[0].mxu0
    %v2374 = vadd.f32 %v2253, %v2373
    %v2375 = vpop.f32.mrb[0].mxu0
    %v2376 = vadd.f32 %v2255, %v2375
    %v2377 = vpop.f32.mrb[0].mxu0
    %v2378 = vadd.f32 %v2257, %v2377
    %v2379 = vpop.f32.mrb[0].mxu0
    %v2380 = vadd.f32 %v2259, %v2379
    %2381 = vmatprep.mubr.bf16.mxu0 %v1393
    %2382 = vmatmul.mubr.bf16.gmra.mrb[0].mxu0 %v1392
    %v2383 = vpop.f32.mrb[0].mxu0
    %v2384 = vadd.f32 %v2263, %v2383
    %v2385 = vpop.f32.mrb[0].mxu0
    %v2386 = vadd.f32 %v2265, %v2385
    %v2387 = vpop.f32.mrb[0].mxu0
    %v2388 = vadd.f32 %v2267, %v2387
    %v2389 = vpop.f32.mrb[0].mxu0
    %v2390 = vadd.f32 %v2269, %v2389
    %2391 = vmatprep.mubr.bf16.mxu0 %v1397
    %2392 = vmatmul.mubr.bf16.gmra.mrb[0].mxu0 %v1396
    %v2393 = vpop.f32.mrb[0].mxu0
    %v2394 = vadd.f32 %v2273, %v2393
    %v2395 = vpop.f32.mrb[0].mxu0
    %v2396 = vadd.f32 %v2275, %v2395
    %v2397 = vpop.f32.mrb[0].mxu0
    %v2398 = vadd.f32 %v2277, %v2397
    %v2399 = vpop.f32.mrb[0].mxu0
    %v2400 = vadd.f32 %v2279, %v2399
    %2401 = vmatprep.mubr.bf16.mxu0 %v1401
    %2402 = vmatmul.mubr.bf16.gmra.mrb[0].mxu0 %v1400
    %v2403 = vpop.f32.mrb[0].mxu0
    %v2404 = vadd.f32 %v2283, %v2403
    %v2405 = vpop.f32.mrb[0].mxu0
    %v2406 = vadd.f32 %v2285, %v2405
    %v2407 = vpop.f32.mrb[0].mxu0
    %v2408 = vadd.f32 %v2287, %v2407
    %v2409 = vpop.f32.mrb[0].mxu0
    %v2410 = vadd.f32 %v2289, %v2409
    %2411 = vmatprep.mubr.bf16.mxu0 %v1405
    %2412 = vmatmul.mubr.bf16.gmra.mrb[0].mxu0 %v1404
    %v2413 = vpop.f32.mrb[0].mxu0
    %v2414 = vadd.f32 %v2293, %v2413
    %v2415 = vpop.f32.mrb[0].mxu0
    %v2416 = vadd.f32 %v2295, %v2415
    %v2417 = vpop.f32.mrb[0].mxu0
    %v2418 = vadd.f32 %v2297, %v2417
    %v2419 = vpop.f32.mrb[0].mxu0
    %v2420 = vadd.f32 %v2299, %v2419
    %2421 = vmatprep.mubr.bf16.mxu0 %v1409
    %2422 = vmatmul.mubr.bf16.gmra.mrb[0].mxu0 %v1408
    %v2423 = vpop.f32.mrb[0].mxu0
    %v2424 = vadd.f32 %v2303, %v2423
    %v2425 = vpop.f32.mrb[0].mxu0
    %v2426 = vadd.f32 %v2305, %v2425
    %v2427 = vpop.f32.mrb[0].mxu0
    %v2428 = vadd.f32 %v2307, %v2427
    %v2429 = vpop.f32.mrb[0].mxu0
    %v2430 = vadd.f32 %v2309, %v2429
    %2431 = vmatprep.mubr.bf16.mxu0 %v1413
    %2432 = vmatmul.mubr.bf16.gmra.mrb[0].mxu0 %v1412
    %v2433 = vpop.f32.mrb[0].mxu0
    %v2434 = vadd.f32 %v2313, %v2433
    %v2435 = vpop.f32.mrb[0].mxu0
    %v2436 = vadd.f32 %v2315, %v2435
    %v2437 = vpop.f32.mrb[0].mxu0
    %v2438 = vadd.f32 %v2317, %v2437
    %v2439 = vpop.f32.mrb[0].mxu0
    %v2440 = vadd.f32 %v2319, %v2439
    %2441 = vmatprep.mubr.bf16.mxu0 %v1417
    %2442 = vmatmul.mubr.bf16.gmra.mrb[0].mxu0 %v1416
    %v2443 = vpop.f32.mrb[0].mxu0
    %v2444 = vadd.f32 %v2323, %v2443
    %v2445 = vpop.f32.mrb[0].mxu0
    %v2446 = vadd.f32 %v2325, %v2445
    %v2447 = vpop.f32.mrb[0].mxu0
    %v2448 = vpop.f32.mrb[0].mxu0
    %2449 = vdwg.mxu0
    %2450 = vmatprep.subr.bf16.mxu0 %v1955
    %2451 = vmatpush1.bf16.msra.mxu0 %v1954
    %2452 = vmatprep.subr.bf16.mxu0 %v1959
    %2453 = vmatpush1.bf16.msra.mxu0 %v1958
    %2454 = vmatprep.subr.bf16.mxu0 %v1963
    %2455 = vmatpush1.bf16.msra.mxu0 %v1962
    %2456 = vmatprep.subr.bf16.mxu0 %v1967
    %2457 = vmatpush1.bf16.msra.mxu0 %v1966
    %2458 = vmatprep.subr.bf16.mxu0 %v1971
    %2459 = vmatpush1.bf16.msra.mxu0 %v1970
    %2460 = vmatprep.subr.bf16.mxu0 %v1975
    %2461 = vmatpush1.bf16.msra.mxu0 %v1974
    %2462 = vmatprep.subr.bf16.mxu0 %v1979
    %2463 = vmatpush1.bf16.msra.mxu0 %v1978
    %2464 = vmatprep.subr.bf16.mxu0 %v1983
    %2465 = vmatpush1.bf16.msra.mxu0 %v1982
    %2466 = vmatprep.subr.bf16.mxu0 %v1987
    %2467 = vmatpush1.bf16.msra.mxu0 %v1986
    %2468 = vmatprep.subr.bf16.mxu0 %v1991
    %2469 = vmatpush1.bf16.msra.mxu0 %v1990
    %2470 = vmatprep.subr.bf16.mxu0 %v1995
    %2471 = vmatpush1.bf16.msra.mxu0 %v1994
    %2472 = vmatprep.subr.bf16.mxu0 %v1999
    %2473 = vmatpush1.bf16.msra.mxu0 %v1998
    %2474 = vmatprep.subr.bf16.mxu0 %v2003
    %2475 = vmatpush1.bf16.msra.mxu0 %v2002
    %2476 = vmatprep.subr.bf16.mxu0 %v2007
    %2477 = vmatpush1.bf16.msra.mxu0 %v2006
    %2478 = vmatprep.subr.bf16.mxu0 %v2011
    %2479 = vmatpush1.bf16.msra.mxu0 %v2010
    %2480 = vmatprep.subr.bf16.mxu0 %v2015
    %2481 = vmatpush1.bf16.msra.mxu0 %v2014
    %2482 = vmatprep.mubr.bf16.mxu0 %v1383
    %2483 = vmatmul.mubr.bf16.gmra.mrb[0].mxu0 %v1382
    %v2484 = vpop.f32.mrb[0].mxu0
    %v2485 = vadd.f32 %v1559, %v2484
    %v2486 = vpop.f32.mrb[0].mxu0
    %v2487 = vadd.f32 %v1563, %v2486
    %v2488 = vpop.f32.mrb[0].mxu0
    %v2489 = vadd.f32 %v1559, %v2488
    %v2490 = vpop.f32.mrb[0].mxu0
    %v2491 = vadd.f32 %v1563, %v2490
    %2492 = vmatprep.mubr.bf16.mxu0 %v1387
    %2493 = vmatmul.mubr.bf16.gmra.mrb[0].mxu0 %v1386
    %v2494 = vpop.f32.mrb[0].mxu0
    %v2495 = vadd.f32 %v1559, %v2494
    %v2496 = vpop.f32.mrb[0].mxu0
    %v2497 = vadd.f32 %v1563, %v2496
    %v2498 = vpop.f32.mrb[0].mxu0
    %v2499 = vadd.f32 %v1559, %v2498
    %v2500 = vpop.f32.mrb[0].mxu0
    %v2501 = vadd.f32 %v1563, %v2500
    %2502 = vmatprep.mubr.bf16.mxu0 %v1391
    %2503 = vmatmul.mubr.bf16.gmra.mrb[0].mxu0 %v1390
    %v2504 = vpop.f32.mrb[0].mxu0
    %v2505 = vadd.f32 %v1559, %v2504
    %v2506 = vpop.f32.mrb[0].mxu0
    %v2507 = vadd.f32 %v1563, %v2506
    %v2508 = vpop.f32.mrb[0].mxu0
    %v2509 = vadd.f32 %v1559, %v2508
    %v2510 = vpop.f32.mrb[0].mxu0
    %v2511 = vadd.f32 %v1563, %v2510
    %2512 = vmatprep.mubr.bf16.mxu0 %v1395
    %2513 = vmatmul.mubr.bf16.gmra.mrb[0].mxu0 %v1394
    %v2514 = vpop.f32.mrb[0].mxu0
    %v2515 = vadd.f32 %v1559, %v2514
    %v2516 = vpop.f32.mrb[0].mxu0
    %v2517 = vadd.f32 %v1563, %v2516
    %v2518 = vpop.f32.mrb[0].mxu0
    %v2519 = vadd.f32 %v1559, %v2518
    %v2520 = vpop.f32.mrb[0].mxu0
    %v2521 = vadd.f32 %v1563, %v2520
    %2522 = vmatprep.mubr.bf16.mxu0 %v1399
    %2523 = vmatmul.mubr.bf16.gmra.mrb[0].mxu0 %v1398
    %v2524 = vpop.f32.mrb[0].mxu0
    %v2525 = vadd.f32 %v1559, %v2524
    %v2526 = vpop.f32.mrb[0].mxu0
    %v2527 = vadd.f32 %v1563, %v2526
    %v2528 = vpop.f32.mrb[0].mxu0
    %v2529 = vadd.f32 %v1559, %v2528
    %v2530 = vpop.f32.mrb[0].mxu0
    %v2531 = vadd.f32 %v1563, %v2530
    %2532 = vmatprep.mubr.bf16.mxu0 %v1403
    %2533 = vmatmul.mubr.bf16.gmra.mrb[0].mxu0 %v1402
    %v2534 = vpop.f32.mrb[0].mxu0
    %v2535 = vadd.f32 %v1559, %v2534
    %v2536 = vpop.f32.mrb[0].mxu0
    %v2537 = vadd.f32 %v1563, %v2536
    %v2538 = vpop.f32.mrb[0].mxu0
    %v2539 = vadd.f32 %v1559, %v2538
    %v2540 = vpop.f32.mrb[0].mxu0
    %v2541 = vadd.f32 %v1563, %v2540
    %2542 = vmatprep.mubr.bf16.mxu0 %v1407
    %2543 = vmatmul.mubr.bf16.gmra.mrb[0].mxu0 %v1406
    %v2544 = vpop.f32.mrb[0].mxu0
    %v2545 = vadd.f32 %v1559, %v2544
    %v2546 = vpop.f32.mrb[0].mxu0
    %v2547 = vadd.f32 %v1563, %v2546
    %v2548 = vpop.f32.mrb[0].mxu0
    %v2549 = vadd.f32 %v1559, %v2548
    %v2550 = vpop.f32.mrb[0].mxu0
    %v2551 = vadd.f32 %v1563, %v2550
    %2552 = vmatprep.mubr.bf16.mxu0 %v1411
    %2553 = vmatmul.mubr.bf16.gmra.mrb[0].mxu0 %v1410
    %v2554 = vpop.f32.mrb[0].mxu0
    %v2555 = vadd.f32 %v1559, %v2554
    %v2556 = vpop.f32.mrb[0].mxu0
    %v2557 = vadd.f32 %v1563, %v2556
    %v2558 = vpop.f32.mrb[0].mxu0
    %v2559 = vadd.f32 %v1559, %v2558
    %v2560 = vpop.f32.mrb[0].mxu0
    %v2561 = vadd.f32 %v1563, %v2560
    %2562 = vmatprep.mubr.bf16.mxu0 %v1415
    %2563 = vmatmul.mubr.bf16.gmra.mrb[0].mxu0 %v1414
    %v2564 = vpop.f32.mrb[0].mxu0
    %v2565 = vadd.f32 %v1559, %v2564
    %v2566 = vpop.f32.mrb[0].mxu0
    %v2567 = vadd.f32 %v1563, %v2566
    %v2568 = vpop.f32.mrb[0].mxu0
    %v2569 = vpop.f32.mrb[0].mxu0
    %2570 = vdwg.mxu0
    %2571 = vmatprep.subr.bf16.mxu0 %v2019
    %2572 = vmatpush1.bf16.msra.mxu0 %v2018
    %2573 = vmatprep.subr.bf16.mxu0 %v2023
    %2574 = vmatpush1.bf16.msra.mxu0 %v2022
    %2575 = vmatprep.subr.bf16.mxu0 %v2027
    %2576 = vmatpush1.bf16.msra.mxu0 %v2026
    %2577 = vmatprep.subr.bf16.mxu0 %v2031
    %2578 = vmatpush1.bf16.msra.mxu0 %v2030
    %2579 = vmatprep.subr.bf16.mxu0 %v2035
    %2580 = vmatpush1.bf16.msra.mxu0 %v2034
    %2581 = vmatprep.subr.bf16.mxu0 %v2039
    %2582 = vmatpush1.bf16.msra.mxu0 %v2038
    %2583 = vmatprep.subr.bf16.mxu0 %v2043
    %2584 = vmatpush1.bf16.msra.mxu0 %v2042
    %2585 = vmatprep.subr.bf16.mxu0 %v2047
    %2586 = vmatpush1.bf16.msra.mxu0 %v2046
    %2587 = vmatprep.subr.bf16.mxu0 %v2051
    %2588 = vmatpush1.bf16.msra.mxu0 %v2050
    %2589 = vmatprep.subr.bf16.mxu0 %v2055
    %2590 = vmatpush1.bf16.msra.mxu0 %v2054
    %2591 = vmatprep.subr.bf16.mxu0 %v2059
    %2592 = vmatpush1.bf16.msra.mxu0 %v2058
    %2593 = vmatprep.subr.bf16.mxu0 %v2063
    %2594 = vmatpush1.bf16.msra.mxu0 %v2062
    %2595 = vmatprep.subr.bf16.mxu0 %v2067
    %2596 = vmatpush1.bf16.msra.mxu0 %v2066
    %2597 = vmatprep.subr.bf16.mxu0 %v2071
    %2598 = vmatpush1.bf16.msra.mxu0 %v2070
    %2599 = vmatprep.subr.bf16.mxu0 %v2075
    %2600 = vmatpush1.bf16.msra.mxu0 %v2074
    %2601 = vmatprep.subr.bf16.mxu0 %v2079
    %2602 = vmatpush1.bf16.msra.mxu0 %v2078
    %2603 = vmatprep.mubr.bf16.mxu0 %v1385
    %2604 = vmatmul.mubr.bf16.gmra.mrb[0].mxu0 %v1384
    %v2605 = vpop.f32.mrb[0].mxu0
    %v2606 = vadd.f32 %v2485, %v2605
    %v2607 = vpop.f32.mrb[0].mxu0
    %v2608 = vadd.f32 %v2487, %v2607
    %v2609 = vpop.f32.mrb[0].mxu0
    %v2610 = vadd.f32 %v2489, %v2609
    %v2611 = vpop.f32.mrb[0].mxu0
    %v2612 = vadd.f32 %v2491, %v2611
    %2613 = vmatprep.mubr.bf16.mxu0 %v1389
    %2614 = vmatmul.mubr.bf16.gmra.mrb[0].mxu0 %v1388
    %v2615 = vpop.f32.mrb[0].mxu0
    %v2616 = vadd.f32 %v2495, %v2615
    %v2617 = vpop.f32.mrb[0].mxu0
    %v2618 = vadd.f32 %v2497, %v2617
    %v2619 = vpop.f32.mrb[0].mxu0
    %v2620 = vadd.f32 %v2499, %v2619
    %v2621 = vpop.f32.mrb[0].mxu0
    %v2622 = vadd.f32 %v2501, %v2621
    %2623 = vmatprep.mubr.bf16.mxu0 %v1393
    %2624 = vmatmul.mubr.bf16.gmra.mrb[0].mxu0 %v1392
    %v2625 = vpop.f32.mrb[0].mxu0
    %v2626 = vadd.f32 %v2505, %v2625
    %v2627 = vpop.f32.mrb[0].mxu0
    %v2628 = vadd.f32 %v2507, %v2627
    %v2629 = vpop.f32.mrb[0].mxu0
    %v2630 = vadd.f32 %v2509, %v2629
    %v2631 = vpop.f32.mrb[0].mxu0
    %v2632 = vadd.f32 %v2511, %v2631
    %2633 = vmatprep.mubr.bf16.mxu0 %v1397
    %2634 = vmatmul.mubr.bf16.gmra.mrb[0].mxu0 %v1396
    %v2635 = vpop.f32.mrb[0].mxu0
    %v2636 = vadd.f32 %v2515, %v2635
    %v2637 = vpop.f32.mrb[0].mxu0
    %v2638 = vadd.f32 %v2517, %v2637
    %v2639 = vpop.f32.mrb[0].mxu0
    %v2640 = vadd.f32 %v2519, %v2639
    %v2641 = vpop.f32.mrb[0].mxu0
    %v2642 = vadd.f32 %v2521, %v2641
    %2643 = vmatprep.mubr.bf16.mxu0 %v1401
    %2644 = vmatmul.mubr.bf16.gmra.mrb[0].mxu0 %v1400
    %v2645 = vpop.f32.mrb[0].mxu0
    %v2646 = vadd.f32 %v2525, %v2645
    %v2647 = vpop.f32.mrb[0].mxu0
    %v2648 = vadd.f32 %v2527, %v2647
    %v2649 = vpop.f32.mrb[0].mxu0
    %v2650 = vadd.f32 %v2529, %v2649
    %v2651 = vpop.f32.mrb[0].mxu0
    %v2652 = vadd.f32 %v2531, %v2651
    %2653 = vmatprep.mubr.bf16.mxu0 %v1405
    %2654 = vmatmul.mubr.bf16.gmra.mrb[0].mxu0 %v1404
    %v2655 = vpop.f32.mrb[0].mxu0
    %v2656 = vadd.f32 %v2535, %v2655
    %v2657 = vpop.f32.mrb[0].mxu0
    %v2658 = vadd.f32 %v2537, %v2657
    %v2659 = vpop.f32.mrb[0].mxu0
    %v2660 = vadd.f32 %v2539, %v2659
    %v2661 = vpop.f32.mrb[0].mxu0
    %v2662 = vadd.f32 %v2541, %v2661
    %2663 = vmatprep.mubr.bf16.mxu0 %v1409
    %2664 = vmatmul.mubr.bf16.gmra.mrb[0].mxu0 %v1408
    %v2665 = vpop.f32.mrb[0].mxu0
    %v2666 = vadd.f32 %v2545, %v2665
    %v2667 = vpop.f32.mrb[0].mxu0
    %v2668 = vadd.f32 %v2547, %v2667
    %v2669 = vpop.f32.mrb[0].mxu0
    %v2670 = vadd.f32 %v2549, %v2669
    %v2671 = vpop.f32.mrb[0].mxu0
    %v2672 = vadd.f32 %v2551, %v2671
    %2673 = vmatprep.mubr.bf16.mxu0 %v1413
    %2674 = vmatmul.mubr.bf16.gmra.mrb[0].mxu0 %v1412
    %v2675 = vpop.f32.mrb[0].mxu0
    %v2676 = vadd.f32 %v2555, %v2675
    %v2677 = vpop.f32.mrb[0].mxu0
    %v2678 = vadd.f32 %v2557, %v2677
    %v2679 = vpop.f32.mrb[0].mxu0
    %v2680 = vadd.f32 %v2559, %v2679
    %v2681 = vpop.f32.mrb[0].mxu0
    %v2682 = vadd.f32 %v2561, %v2681
    %2683 = vmatprep.mubr.bf16.mxu0 %v1417
    %2684 = vmatmul.mubr.bf16.gmra.mrb[0].mxu0 %v1416
    %v2685 = vpop.f32.mrb[0].mxu0
    %v2686 = vadd.f32 %v2565, %v2685
    %v2687 = vpop.f32.mrb[0].mxu0
    %v2688 = vadd.f32 %v2567, %v2687
    %v2689 = vpop.f32.mrb[0].mxu0
    %v2690 = vpop.f32.mrb[0].mxu0
    %2691 = vdwg.mxu0
    %v2692 = vmax.f32 %v2364, 0.0
    %v2693 = vmax.f32 %v2366, 0.0
    %v2694 = vmax.f32 %v2606, 0.0
    %v2695 = vmax.f32 %v2608, 0.0
    %v2696 = vmax.f32 %v2368, 0.0
    %v2697 = vmax.f32 %v2370, 0.0
    %v2698 = vmax.f32 %v2610, 0.0
    %v2699 = vmax.f32 %v2612, 0.0
    %v2700 = vmax.f32 %v2374, 0.0
    %v2701 = vmax.f32 %v2376, 0.0
    %v2702 = vmax.f32 %v2616, 0.0
    %v2703 = vmax.f32 %v2618, 0.0
    %v2704 = vmax.f32 %v2378, 0.0
    %v2705 = vmax.f32 %v2380, 0.0
    %v2706 = vmax.f32 %v2620, 0.0
    %v2707 = vmax.f32 %v2622, 0.0
    %v2708 = vmax.f32 %v2384, 0.0
    %v2709 = vmax.f32 %v2386, 0.0
    %v2710 = vmax.f32 %v2626, 0.0
    %v2711 = vmax.f32 %v2628, 0.0
    %v2712 = vmax.f32 %v2388, 0.0
    %v2713 = vmax.f32 %v2390, 0.0
    %v2714 = vmax.f32 %v2630, 0.0
    %v2715 = vmax.f32 %v2632, 0.0
    %v2716 = vmax.f32 %v2394, 0.0
    %v2717 = vmax.f32 %v2396, 0.0
    %v2718 = vmax.f32 %v2636, 0.0
    %v2719 = vmax.f32 %v2638, 0.0
    %v2720 = vmax.f32 %v2398, 0.0
    %v2721 = vmax.f32 %v2400, 0.0
    %v2722 = vmax.f32 %v2640, 0.0
    %v2723 = vmax.f32 %v2642, 0.0
    %v2724 = vmax.f32 %v2404, 0.0
    %v2725 = vmax.f32 %v2406, 0.0
    %v2726 = vmax.f32 %v2646, 0.0
    %v2727 = vmax.f32 %v2648, 0.0
    %v2728 = vmax.f32 %v2408, 0.0
    %v2729 = vmax.f32 %v2410, 0.0
    %v2730 = vmax.f32 %v2650, 0.0
    %v2731 = vmax.f32 %v2652, 0.0
    %v2732 = vmax.f32 %v2414, 0.0
    %v2733 = vmax.f32 %v2416, 0.0
    %v2734 = vmax.f32 %v2656, 0.0
    %v2735 = vmax.f32 %v2658, 0.0
    %v2736 = vmax.f32 %v2418, 0.0
    %v2737 = vmax.f32 %v2420, 0.0
    %v2738 = vmax.f32 %v2660, 0.0
    %v2739 = vmax.f32 %v2662, 0.0
    %v2740 = vmax.f32 %v2424, 0.0
    %v2741 = vmax.f32 %v2426, 0.0
    %v2742 = vmax.f32 %v2666, 0.0
    %v2743 = vmax.f32 %v2668, 0.0
    %v2744 = vmax.f32 %v2428, 0.0
    %v2745 = vmax.f32 %v2430, 0.0
    %v2746 = vmax.f32 %v2670, 0.0
    %v2747 = vmax.f32 %v2672, 0.0
    %v2748 = vmax.f32 %v2434, 0.0
    %v2749 = vmax.f32 %v2436, 0.0
    %v2750 = vmax.f32 %v2676, 0.0
    %v2751 = vmax.f32 %v2678, 0.0
    %v2752 = vmax.f32 %v2438, 0.0
    %v2753 = vmax.f32 %v2440, 0.0
    %v2754 = vmax.f32 %v2680, 0.0
    %v2755 = vmax.f32 %v2682, 0.0
    %v2756 = vmax.f32 %v2444, 0.0
    %v2757 = vmax.f32 %v2446, 0.0
    %v2758 = vmax.f32 %v2686, 0.0
    %v2759 = vmax.f32 %v2688, 0.0
    %v2760 = vmul.f32 %v2692, %v2692
    %v2761 = vmul.f32 %v2693, %v2693
    %v2762 = vmul.f32 %v2694, %v2694
    %v2763 = vmul.f32 %v2695, %v2695
    %v2764 = vmul.f32 %v2696, %v2696
    %v2765 = vmul.f32 %v2697, %v2697
    %v2766 = vmul.f32 %v2698, %v2698
    %v2767 = vmul.f32 %v2699, %v2699
    %v2768 = vmul.f32 %v2700, %v2700
    %v2769 = vmul.f32 %v2701, %v2701
    %v2770 = vmul.f32 %v2702, %v2702
    %v2771 = vmul.f32 %v2703, %v2703
    %v2772 = vmul.f32 %v2704, %v2704
    %v2773 = vmul.f32 %v2705, %v2705
    %v2774 = vmul.f32 %v2706, %v2706
    %v2775 = vmul.f32 %v2707, %v2707
    %v2776 = vmul.f32 %v2708, %v2708
    %v2777 = vmul.f32 %v2709, %v2709
    %v2778 = vmul.f32 %v2710, %v2710
    %v2779 = vmul.f32 %v2711, %v2711
    %v2780 = vmul.f32 %v2712, %v2712
    %v2781 = vmul.f32 %v2713, %v2713
    %v2782 = vmul.f32 %v2714, %v2714
    %v2783 = vmul.f32 %v2715, %v2715
    %v2784 = vmul.f32 %v2716, %v2716
    %v2785 = vmul.f32 %v2717, %v2717
    %v2786 = vmul.f32 %v2718, %v2718
    %v2787 = vmul.f32 %v2719, %v2719
    %v2788 = vmul.f32 %v2720, %v2720
    %v2789 = vmul.f32 %v2721, %v2721
    %v2790 = vmul.f32 %v2722, %v2722
    %v2791 = vmul.f32 %v2723, %v2723
    %v2792 = vmul.f32 %v2724, %v2724
    %v2793 = vmul.f32 %v2725, %v2725
    %v2794 = vmul.f32 %v2726, %v2726
    %v2795 = vmul.f32 %v2727, %v2727
    %v2796 = vmul.f32 %v2728, %v2728
    %v2797 = vmul.f32 %v2729, %v2729
    %v2798 = vmul.f32 %v2730, %v2730
    %v2799 = vmul.f32 %v2731, %v2731
    %v2800 = vmul.f32 %v2732, %v2732
    %v2801 = vmul.f32 %v2733, %v2733
    %v2802 = vmul.f32 %v2734, %v2734
    %v2803 = vmul.f32 %v2735, %v2735
    %v2804 = vmul.f32 %v2736, %v2736
    %v2805 = vmul.f32 %v2737, %v2737
    %v2806 = vmul.f32 %v2738, %v2738
    %v2807 = vmul.f32 %v2739, %v2739
    %v2808 = vmul.f32 %v2740, %v2740
    %v2809 = vmul.f32 %v2741, %v2741
    %v2810 = vmul.f32 %v2742, %v2742
    %v2811 = vmul.f32 %v2743, %v2743
    %v2812 = vmul.f32 %v2744, %v2744
    %v2813 = vmul.f32 %v2745, %v2745
    %v2814 = vmul.f32 %v2746, %v2746
    %v2815 = vmul.f32 %v2747, %v2747
    %v2816 = vmul.f32 %v2748, %v2748
    %v2817 = vmul.f32 %v2749, %v2749
    %v2818 = vmul.f32 %v2750, %v2750
    %v2819 = vmul.f32 %v2751, %v2751
    %v2820 = vmul.f32 %v2752, %v2752
    %v2821 = vmul.f32 %v2753, %v2753
    %v2822 = vmul.f32 %v2754, %v2754
    %v2823 = vmul.f32 %v2755, %v2755
    %v2824 = vmul.f32 %v2756, %v2756
    %v2825 = vmul.f32 %v2757, %v2757
    %v2826 = vmul.f32 %v2758, %v2758
    %v2827 = vmul.f32 %v2759, %v2759
    %v2828 = vadd.f32 %v2760, %v2761
    %v2829 = vadd.f32 %v2828, %v2762
    %v2830 = vadd.f32 %v2829, %v2763
    %2831 = vadd.xlane.f32.xlu0 %v2830
    %v2832 = vpop.xlane.xlu0 %2831
    %v2833 = vadd.f32 %v2764, %v2765
    %v2834 = vadd.f32 %v2833, %v2766
    %v2835 = vadd.f32 %v2834, %v2767
    %2836 = vadd.xlane.f32.xlu0 %v2835
    %v2837 = vpop.xlane.xlu0 %2836
    %v2838 = vadd.f32 %v2768, %v2769
    %v2839 = vadd.f32 %v2838, %v2770
    %v2840 = vadd.f32 %v2839, %v2771
    %2841 = vadd.xlane.f32.xlu0 %v2840
    %v2842 = vpop.xlane.xlu0 %2841
    %v2843 = vadd.f32 %v2772, %v2773
    %v2844 = vadd.f32 %v2843, %v2774
    %v2845 = vadd.f32 %v2844, %v2775
    %2846 = vadd.xlane.f32.xlu0 %v2845
    %v2847 = vpop.xlane.xlu0 %2846
    %v2848 = vadd.f32 %v2776, %v2777
    %v2849 = vadd.f32 %v2848, %v2778
    %v2850 = vadd.f32 %v2849, %v2779
    %2851 = vadd.xlane.f32.xlu0 %v2850
    %v2852 = vpop.xlane.xlu0 %2851
    %v2853 = vadd.f32 %v2780, %v2781
    %v2854 = vadd.f32 %v2853, %v2782
    %v2855 = vadd.f32 %v2854, %v2783
    %2856 = vadd.xlane.f32.xlu0 %v2855
    %v2857 = vpop.xlane.xlu0 %2856
    %v2858 = vadd.f32 %v2784, %v2785
    %v2859 = vadd.f32 %v2858, %v2786
    %v2860 = vadd.f32 %v2859, %v2787
    %2861 = vadd.xlane.f32.xlu0 %v2860
    %v2862 = vpop.xlane.xlu0 %2861
    %v2863 = vadd.f32 %v2788, %v2789
    %v2864 = vadd.f32 %v2863, %v2790
    %v2865 = vadd.f32 %v2864, %v2791
    %2866 = vadd.xlane.f32.xlu0 %v2865
    %v2867 = vpop.xlane.xlu0 %2866
    %v2868 = vadd.f32 %v2792, %v2793
    %v2869 = vadd.f32 %v2868, %v2794
    %v2870 = vadd.f32 %v2869, %v2795
    %2871 = vadd.xlane.f32.xlu0 %v2870
    %v2872 = vpop.xlane.xlu0 %2871
    %v2873 = vadd.f32 %v2796, %v2797
    %v2874 = vadd.f32 %v2873, %v2798
    %v2875 = vadd.f32 %v2874, %v2799
    %2876 = vadd.xlane.f32.xlu0 %v2875
    %v2877 = vpop.xlane.xlu0 %2876
    %v2878 = vadd.f32 %v2800, %v2801
    %v2879 = vadd.f32 %v2878, %v2802
    %v2880 = vadd.f32 %v2879, %v2803
    %2881 = vadd.xlane.f32.xlu0 %v2880
    %v2882 = vpop.xlane.xlu0 %2881
    %v2883 = vadd.f32 %v2804, %v2805
    %v2884 = vadd.f32 %v2883, %v2806
    %v2885 = vadd.f32 %v2884, %v2807
    %2886 = vadd.xlane.f32.xlu0 %v2885
    %v2887 = vpop.xlane.xlu0 %2886
    %v2888 = vadd.f32 %v2808, %v2809
    %v2889 = vadd.f32 %v2888, %v2810
    %v2890 = vadd.f32 %v2889, %v2811
    %2891 = vadd.xlane.f32.xlu0 %v2890
    %v2892 = vpop.xlane.xlu0 %2891
    %v2893 = vadd.f32 %v2812, %v2813
    %v2894 = vadd.f32 %v2893, %v2814
    %v2895 = vadd.f32 %v2894, %v2815
    %2896 = vadd.xlane.f32.xlu0 %v2895
    %v2897 = vpop.xlane.xlu0 %2896
    %v2898 = vadd.f32 %v2816, %v2817
    %v2899 = vadd.f32 %v2898, %v2818
    %v2900 = vadd.f32 %v2899, %v2819
    %2901 = vadd.xlane.f32.xlu0 %v2900
    %v2902 = vpop.xlane.xlu0 %2901
    %v2903 = vadd.f32 %v2820, %v2821
    %v2904 = vadd.f32 %v2903, %v2822
    %v2905 = vadd.f32 %v2904, %v2823
    %2906 = vadd.xlane.f32.xlu0 %v2905
    %v2907 = vpop.xlane.xlu0 %2906
    %v2908 = vadd.f32 %v2824, %v2825
    %v2909 = vadd.f32 %v2908, %v2826
    %v2910 = vadd.f32 %v2909, %v2827
    %2911 = vadd.xlane.f32.xlu0 %v2910
    %v2912 = vpop.xlane.xlu0 %2911
    %v2913 = vmax.f32 %v2832, 1e-24
    %v2914 = vmax.f32 %v2837, 1e-24
    %v2915 = vmax.f32 %v2842, 1e-24
    %v2916 = vmax.f32 %v2847, 1e-24
    %v2917 = vmax.f32 %v2852, 1e-24
    %v2918 = vmax.f32 %v2857, 1e-24
    %v2919 = vmax.f32 %v2862, 1e-24
    %v2920 = vmax.f32 %v2867, 1e-24
    %v2921 = vmax.f32 %v2872, 1e-24
    %v2922 = vmax.f32 %v2877, 1e-24
    %v2923 = vmax.f32 %v2882, 1e-24
    %v2924 = vmax.f32 %v2887, 1e-24
    %v2925 = vmax.f32 %v2892, 1e-24
    %v2926 = vmax.f32 %v2897, 1e-24
    %v2927 = vmax.f32 %v2902, 1e-24
    %v2928 = vmax.f32 %v2907, 1e-24
    %v2929 = vmax.f32 %v2912, 1e-24
    %v2930 = vrsqrt.pop %v2913
    %v2931 = vrsqrt.pop %v2914
    %v2932 = vrsqrt.pop %v2915
    %v2933 = vrsqrt.pop %v2916
    %v2934 = vrsqrt.pop %v2917
    %v2935 = vrsqrt.pop %v2918
    %v2936 = vrsqrt.pop %v2919
    %v2937 = vrsqrt.pop %v2920
    %v2938 = vrsqrt.pop %v2921
    %v2939 = vrsqrt.pop %v2922
    %v2940 = vrsqrt.pop %v2923
    %v2941 = vrsqrt.pop %v2924
    %v2942 = vrsqrt.pop %v2925
    %v2943 = vrsqrt.pop %v2926
    %v2944 = vrsqrt.pop %v2927
    %v2945 = vrsqrt.pop %v2928
    %v2946 = vrsqrt.pop %v2929
    %v2947 = vmul.f32 %v2692, %v2930
    %v2948 = vmul.f32 %v2693, %v2930
    %v2949 = vmul.f32 %v2694, %v2930
    %v2950 = vmul.f32 %v2695, %v2930
    %v2951 = vmul.f32 %v2696, %v2931
    %v2952 = vmul.f32 %v2697, %v2931
    %v2953 = vmul.f32 %v2698, %v2931
    %v2954 = vmul.f32 %v2699, %v2931
    %v2955 = vmul.f32 %v2700, %v2932
    %v2956 = vmul.f32 %v2701, %v2932
    %v2957 = vmul.f32 %v2702, %v2932
    %v2958 = vmul.f32 %v2703, %v2932
    %v2959 = vmul.f32 %v2704, %v2933
    %v2960 = vmul.f32 %v2705, %v2933
    %v2961 = vmul.f32 %v2706, %v2933
    %v2962 = vmul.f32 %v2707, %v2933
    %v2963 = vmul.f32 %v2708, %v2934
    %v2964 = vmul.f32 %v2709, %v2934
    %v2965 = vmul.f32 %v2710, %v2934
    %v2966 = vmul.f32 %v2711, %v2934
    %v2967 = vmul.f32 %v2712, %v2935
    %v2968 = vmul.f32 %v2713, %v2935
    %v2969 = vmul.f32 %v2714, %v2935
    %v2970 = vmul.f32 %v2715, %v2935
    %v2971 = vmul.f32 %v2716, %v2936
    %v2972 = vmul.f32 %v2717, %v2936
    %v2973 = vmul.f32 %v2718, %v2936
    %v2974 = vmul.f32 %v2719, %v2936
    %v2975 = vmul.f32 %v2720, %v2937
    %v2976 = vmul.f32 %v2721, %v2937
    %v2977 = vmul.f32 %v2722, %v2937
    %v2978 = vmul.f32 %v2723, %v2937
    %v2979 = vmul.f32 %v2724, %v2938
    %v2980 = vmul.f32 %v2725, %v2938
    %v2981 = vmul.f32 %v2726, %v2938
    %v2982 = vmul.f32 %v2727, %v2938
    %v2983 = vmul.f32 %v2728, %v2939
    %v2984 = vmul.f32 %v2729, %v2939
    %v2985 = vmul.f32 %v2730, %v2939
    %v2986 = vmul.f32 %v2731, %v2939
    %v2987 = vmul.f32 %v2732, %v2940
    %v2988 = vmul.f32 %v2733, %v2940
    %v2989 = vmul.f32 %v2734, %v2940
    %v2990 = vmul.f32 %v2735, %v2940
    %v2991 = vmul.f32 %v2736, %v2941
    %v2992 = vmul.f32 %v2737, %v2941
    %v2993 = vmul.f32 %v2738, %v2941
    %v2994 = vmul.f32 %v2739, %v2941
    %v2995 = vmul.f32 %v2740, %v2942
    %v2996 = vmul.f32 %v2741, %v2942
    %v2997 = vmul.f32 %v2742, %v2942
    %v2998 = vmul.f32 %v2743, %v2942
    %v2999 = vmul.f32 %v2744, %v2943
    %v3000 = vmul.f32 %v2745, %v2943
    %v3001 = vmul.f32 %v2746, %v2943
    %v3002 = vmul.f32 %v2747, %v2943
    %v3003 = vmul.f32 %v2748, %v2944
    %v3004 = vmul.f32 %v2749, %v2944
    %v3005 = vmul.f32 %v2750, %v2944
    %v3006 = vmul.f32 %v2751, %v2944
    %v3007 = vmul.f32 %v2752, %v2945
    %v3008 = vmul.f32 %v2753, %v2945
    %v3009 = vmul.f32 %v2754, %v2945
    %v3010 = vmul.f32 %v2755, %v2945
    %v3011 = vmul.f32 %v2756, %v2946
    %v3012 = vmul.f32 %v2757, %v2946
    %v3013 = vmul.f32 %v2758, %v2946
    %v3014 = vmul.f32 %v2759, %v2946
    %3015 = vmatprep.subr.mxu0 %v2952
    %3016 = vmatpush1.xpose.msra.mxu0 %v2951
    %3017 = vmatprep.subr.mxu0 %v2956
    %3018 = vmatpush1.xpose.msra.mxu0 %v2955
    %3019 = vmatprep.subr.mxu0 %v2960
    %3020 = vmatpush1.xpose.msra.mxu0 %v2959
    %3021 = vmatprep.subr.mxu0 %v2964
    %3022 = vmatpush1.xpose.msra.mxu0 %v2963
    %3023 = vmatprep.subr.mxu0 %v2968
    %3024 = vmatpush1.xpose.msra.mxu0 %v2967
    %3025 = vmatprep.subr.mxu0 %v2972
    %3026 = vmatpush1.xpose.msra.mxu0 %v2971
    %3027 = vmatprep.subr.mxu0 %v2976
    %3028 = vmatpush1.xpose.msra.mxu0 %v2975
    %3029 = vmatprep.subr.mxu0 %v2980
    %3030 = vmatpush1.xpose.msra.mxu0 %v2979
    %3031 = vmatprep.subr.mxu0 %v2984
    %3032 = vmatpush1.xpose.msra.mxu0 %v2983
    %3033 = vmatprep.subr.mxu0 %v2988
    %3034 = vmatpush1.xpose.msra.mxu0 %v2987
    %3035 = vmatprep.subr.mxu0 %v2992
    %3036 = vmatpush1.xpose.msra.mxu0 %v2991
    %3037 = vmatprep.subr.mxu0 %v2996
    %3038 = vmatpush1.xpose.msra.mxu0 %v2995
    %3039 = vmatprep.subr.mxu0 %v3000
    %3040 = vmatpush1.xpose.msra.mxu0 %v2999
    %3041 = vmatprep.subr.mxu0 %v3004
    %3042 = vmatpush1.xpose.msra.mxu0 %v3003
    %3043 = vmatprep.subr.mxu0 %v3008
    %3044 = vmatpush1.xpose.msra.mxu0 %v3007
    %3045 = vmatprep.subr.mxu0 %v3012
    %3046 = vmatpush1.xpose.msra.mxu0 %v3011
    %3047 = vmatprep.subr.mxu0 0.0
    %3048 = vmatpush1.xpose.msra.mxu0 0.0
    %3049 = vmatprep.subr.mxu0 0.0
    %3050 = vmatpush1.xpose.msra.mxu0 0.0
    %3051 = vmatprep.subr.mxu0 0.0
    %3052 = vmatpush1.xpose.msra.mxu0 0.0
    %3053 = vmatprep.subr.mxu0 0.0
    %3054 = vmatpush1.xpose.msra.mxu0 0.0
    %3055 = vmatprep.subr.mxu0 0.0
    %3056 = vmatpush1.xpose.msra.mxu0 0.0
    %3057 = vmatprep.subr.mxu0 0.0
    %3058 = vmatpush1.xpose.msra.mxu0 0.0
    %3059 = vmatprep.subr.mxu0 0.0
    %3060 = vmatpush1.xpose.msra.mxu0 0.0
    %3061 = vmatprep.subr.mxu0 0.0
    %3062 = vmatpush1.xpose.msra.mxu0 0.0
    %3063 = vmatprep.subr.mxu0 0.0
    %3064 = vmatpush1.xpose.msra.mxu0 0.0
    %3065 = vmatprep.subr.mxu0 0.0
    %3066 = vmatpush1.xpose.msra.mxu0 0.0
    %3067 = vmatprep.subr.mxu0 0.0
    %3068 = vmatpush1.xpose.msra.mxu0 0.0
    %3069 = vmatprep.subr.mxu0 0.0
    %3070 = vmatpush1.xpose.msra.mxu0 0.0
    %3071 = vmatprep.subr.mxu0 0.0
    %3072 = vmatpush1.xpose.msra.mxu0 0.0
    %3073 = vmatprep.subr.mxu0 0.0
    %3074 = vmatpush1.xpose.msra.mxu0 0.0
    %3075 = vmatprep.subr.mxu0 0.0
    %3076 = vmatpush1.xpose.msra.mxu0 0.0
    %3077 = vmatprep.subr.mxu0 0.0
    %3078 = vmatpush1.xpose.msra.mxu0 0.0
    %3079 = vmatprep.mubr.f32.mxu0 %v2948
    %3080 = vmatmul.mubr.f32.gmra.mrb[0].mxu0 %v2947
    %v3081 = vpop.f32.mrb[0].mxu0
    %v3082 = vadd.f32 0.0, %v3081
    %v3083 = vpop.f32.mrb[0].mxu0
    %3084 = vdwg.mxu0
    %3085 = vmatprep.subr.mxu0 %v2954
    %3086 = vmatpush1.xpose.msra.mxu0 %v2953
    %3087 = vmatprep.subr.mxu0 %v2958
    %3088 = vmatpush1.xpose.msra.mxu0 %v2957
    %3089 = vmatprep.subr.mxu0 %v2962
    %3090 = vmatpush1.xpose.msra.mxu0 %v2961
    %3091 = vmatprep.subr.mxu0 %v2966
    %3092 = vmatpush1.xpose.msra.mxu0 %v2965
    %3093 = vmatprep.subr.mxu0 %v2970
    %3094 = vmatpush1.xpose.msra.mxu0 %v2969
    %3095 = vmatprep.subr.mxu0 %v2974
    %3096 = vmatpush1.xpose.msra.mxu0 %v2973
    %3097 = vmatprep.subr.mxu0 %v2978
    %3098 = vmatpush1.xpose.msra.mxu0 %v2977
    %3099 = vmatprep.subr.mxu0 %v2982
    %3100 = vmatpush1.xpose.msra.mxu0 %v2981
    %3101 = vmatprep.subr.mxu0 %v2986
    %3102 = vmatpush1.xpose.msra.mxu0 %v2985
    %3103 = vmatprep.subr.mxu0 %v2990
    %3104 = vmatpush1.xpose.msra.mxu0 %v2989
    %3105 = vmatprep.subr.mxu0 %v2994
    %3106 = vmatpush1.xpose.msra.mxu0 %v2993
    %3107 = vmatprep.subr.mxu0 %v2998
    %3108 = vmatpush1.xpose.msra.mxu0 %v2997
    %3109 = vmatprep.subr.mxu0 %v3002
    %3110 = vmatpush1.xpose.msra.mxu0 %v3001
    %3111 = vmatprep.subr.mxu0 %v3006
    %3112 = vmatpush1.xpose.msra.mxu0 %v3005
    %3113 = vmatprep.subr.mxu0 %v3010
    %3114 = vmatpush1.xpose.msra.mxu0 %v3009
    %3115 = vmatprep.subr.mxu0 %v3014
    %3116 = vmatpush1.xpose.msra.mxu0 %v3013
    %3117 = vmatprep.subr.mxu0 0.0
    %3118 = vmatpush1.xpose.msra.mxu0 0.0
    %3119 = vmatprep.subr.mxu0 0.0
    %3120 = vmatpush1.xpose.msra.mxu0 0.0
    %3121 = vmatprep.subr.mxu0 0.0
    %3122 = vmatpush1.xpose.msra.mxu0 0.0
    %3123 = vmatprep.subr.mxu0 0.0
    %3124 = vmatpush1.xpose.msra.mxu0 0.0
    %3125 = vmatprep.subr.mxu0 0.0
    %3126 = vmatpush1.xpose.msra.mxu0 0.0
    %3127 = vmatprep.subr.mxu0 0.0
    %3128 = vmatpush1.xpose.msra.mxu0 0.0
    %3129 = vmatprep.subr.mxu0 0.0
    %3130 = vmatpush1.xpose.msra.mxu0 0.0
    %3131 = vmatprep.subr.mxu0 0.0
    %3132 = vmatpush1.xpose.msra.mxu0 0.0
    %3133 = vmatprep.subr.mxu0 0.0
    %3134 = vmatpush1.xpose.msra.mxu0 0.0
    %3135 = vmatprep.subr.mxu0 0.0
    %3136 = vmatpush1.xpose.msra.mxu0 0.0
    %3137 = vmatprep.subr.mxu0 0.0
    %3138 = vmatpush1.xpose.msra.mxu0 0.0
    %3139 = vmatprep.subr.mxu0 0.0
    %3140 = vmatpush1.xpose.msra.mxu0 0.0
    %3141 = vmatprep.subr.mxu0 0.0
    %3142 = vmatpush1.xpose.msra.mxu0 0.0
    %3143 = vmatprep.subr.mxu0 0.0
    %3144 = vmatpush1.xpose.msra.mxu0 0.0
    %3145 = vmatprep.subr.mxu0 0.0
    %3146 = vmatpush1.xpose.msra.mxu0 0.0
    %3147 = vmatprep.subr.mxu0 0.0
    %3148 = vmatpush1.xpose.msra.mxu0 0.0
    %3149 = vmatprep.mubr.f32.mxu0 %v2950
    %3150 = vmatmul.mubr.f32.gmra.mrb[0].mxu0 %v2949
    %v3151 = vpop.f32.mrb[0].mxu0
    %v3152 = vadd.f32 %v3082, %v3151
    %v3153 = vpop.f32.mrb[0].mxu0
    %3154 = vdwg.mxu0
    %s3155 = sld [smem:[#allocation2]]
    %v3156 = vld [vmem:[%s4] sm:$0xff]
    %vm3157 = vcmp.eq.f32.partialorder %v3156, -1.0
    %vm3158 = vcmp.eq.f32.partialorder %v101, 0.0
    %vm3159 = vmor %vm3157, %vm3158
    %v3160 = vstv %s3155
    %vm3161 = vcmp.lt.f32.partialorder %v3152, %v3160
    %vm3162 = vmor %vm3159, %vm3161
    %3163 = vst [vmem:[#allocation3] sm:$0xff] %v3152
    %v3164 = vsel %vm3162, 1, 0
    %v3165 = vcvt.s32.f32 %v3164
    %3166 = vst [vmem:[#allocation5] sm:$0xff] %v3165
    %3167 = vst [vmem:[#allocation7] sm:$0xff] %v2947
    %3168 = vst [vmem:[#allocation7 + $0x8] sm:$0xff] %v2948
    %3169 = vst [vmem:[#allocation7 + $0x10] sm:$0xff] %v2949
    %3170 = vst [vmem:[#allocation7 + $0x18] sm:$0xff] %v2950
    %3171 = vst [vmem:[%s10] sm:$0xff] %v2951
    %3172 = vst [vmem:[%s10 + $0x8] sm:$0xff] %v2952
    %3173 = vst [vmem:[%s10 + $0x10] sm:$0xff] %v2953
    %3174 = vst [vmem:[%s10 + $0x18] sm:$0xff] %v2954
    %3175 = vst [vmem:[%s10 + $0x20] sm:$0xff] %v2955
    %3176 = vst [vmem:[%s10 + $0x28] sm:$0xff] %v2956
    %3177 = vst [vmem:[%s10 + $0x30] sm:$0xff] %v2957
    %3178 = vst [vmem:[%s10 + $0x38] sm:$0xff] %v2958
    %3179 = vst [vmem:[%s10 + $0x40] sm:$0xff] %v2959
    %3180 = vst [vmem:[%s10 + $0x48] sm:$0xff] %v2960
    %3181 = vst [vmem:[%s10 + $0x50] sm:$0xff] %v2961
    %3182 = vst [vmem:[%s10 + $0x58] sm:$0xff] %v2962
    %3183 = vst [vmem:[%s10 + $0x60] sm:$0xff] %v2963
    %3184 = vst [vmem:[%s10 + $0x68] sm:$0xff] %v2964
    %3185 = vst [vmem:[%s10 + $0x70] sm:$0xff] %v2965
    %3186 = vst [vmem:[%s10 + $0x78] sm:$0xff] %v2966
    %3187 = vst [vmem:[%s10 + $0x80] sm:$0xff] %v2967
    %3188 = vst [vmem:[%s10 + $0x88] sm:$0xff] %v2968
    %3189 = vst [vmem:[%s10 + $0x90] sm:$0xff] %v2969
    %3190 = vst [vmem:[%s10 + $0x98] sm:$0xff] %v2970
    %3191 = vst [vmem:[%s10 + $0xa0] sm:$0xff] %v2971
    %3192 = vst [vmem:[%s10 + $0xa8] sm:$0xff] %v2972
    %3193 = vst [vmem:[%s10 + $0xb0] sm:$0xff] %v2973
    %3194 = vst [vmem:[%s10 + $0xb8] sm:$0xff] %v2974
    %3195 = vst [vmem:[%s10 + $0xc0] sm:$0xff] %v2975
    %3196 = vst [vmem:[%s10 + $0xc8] sm:$0xff] %v2976
    %3197 = vst [vmem:[%s10 + $0xd0] sm:$0xff] %v2977
    %3198 = vst [vmem:[%s10 + $0xd8] sm:$0xff] %v2978
    %3199 = vst [vmem:[%s10 + $0xe0] sm:$0xff] %v2979
    %3200 = vst [vmem:[%s10 + $0xe8] sm:$0xff] %v2980
    %3201 = vst [vmem:[%s10 + $0xf0] sm:$0xff] %v2981
    %3202 = vst [vmem:[%s10 + $0xf8] sm:$0xff] %v2982
    %3203 = vst [vmem:[%s10 + $0x100] sm:$0xff] %v2983
    %3204 = vst [vmem:[%s10 + $0x108] sm:$0xff] %v2984
    %3205 = vst [vmem:[%s10 + $0x110] sm:$0xff] %v2985
    %3206 = vst [vmem:[%s10 + $0x118] sm:$0xff] %v2986
    %3207 = vst [vmem:[%s10 + $0x120] sm:$0xff] %v2987
    %3208 = vst [vmem:[%s10 + $0x128] sm:$0xff] %v2988
    %3209 = vst [vmem:[%s10 + $0x130] sm:$0xff] %v2989
    %3210 = vst [vmem:[%s10 + $0x138] sm:$0xff] %v2990
    %3211 = vst [vmem:[%s10 + $0x140] sm:$0xff] %v2991
    %3212 = vst [vmem:[%s10 + $0x148] sm:$0xff] %v2992
    %3213 = vst [vmem:[%s10 + $0x150] sm:$0xff] %v2993
    %3214 = vst [vmem:[%s10 + $0x158] sm:$0xff] %v2994
    %3215 = vst [vmem:[%s10 + $0x160] sm:$0xff] %v2995
    %3216 = vst [vmem:[%s10 + $0x168] sm:$0xff] %v2996
    %3217 = vst [vmem:[%s10 + $0x170] sm:$0xff] %v2997
    %3218 = vst [vmem:[%s10 + $0x178] sm:$0xff] %v2998
    %3219 = vst [vmem:[%s10 + $0x180] sm:$0xff] %v2999
    %3220 = vst [vmem:[%s10 + $0x188] sm:$0xff] %v3000
    %3221 = vst [vmem:[%s10 + $0x190] sm:$0xff] %v3001
    %3222 = vst [vmem:[%s10 + $0x198] sm:$0xff] %v3002
    %3223 = vst [vmem:[%s10 + $0x1a0] sm:$0xff] %v3003
    %3224 = vst [vmem:[%s10 + $0x1a8] sm:$0xff] %v3004
    %3225 = vst [vmem:[%s10 + $0x1b0] sm:$0xff] %v3005
    %3226 = vst [vmem:[%s10 + $0x1b8] sm:$0xff] %v3006
    %3227 = vst [vmem:[%s10 + $0x1c0] sm:$0xff] %v3007
    %3228 = vst [vmem:[%s10 + $0x1c8] sm:$0xff] %v3008
    %3229 = vst [vmem:[%s10 + $0x1d0] sm:$0xff] %v3009
    %3230 = vst [vmem:[%s10 + $0x1d8] sm:$0xff] %v3010
    %3231 = vst [vmem:[%s10 + $0x1e0] sm:$0xff] %v3011
    %3232 = vst [vmem:[%s10 + $0x1e8] sm:$0xff] %v3012
    %3233 = vst [vmem:[%s10 + $0x1f0] sm:$0xff] %v3013
    %3234 = vst [vmem:[%s10 + $0x1f8] sm:$0xff] %v3014
    // Predicated region
    $region30: #{graphnet_forward.1} parent=1 // pred_check
      _
    $region31: #{graphnet_forward.1} parent=1 // pred_check_branch
      %3236 = sbr.rel (0) target = $region33
    $region32: #{graphnet_forward.1} parent=1 // pred_region
      %s3238 = ssub.s32 128, 128
      %3239 = vsyncadd [#allocation4], %s3238
      %s3241 = sshll.u32 [#allocation3], 4
      %s3242 = int_to_ptr.vmem [resolvable:$true] %s3241
      %3244 = dma.vmem_to_hbm [thread:$0]  %s3242, 128, %s7, [#allocation4]
    $region33: #{graphnet_forward.1} parent=1 // pred_fallthru
      _
    // Predicated region
    $region34: #{graphnet_forward.1} parent=1 // pred_check
      _
    $region35: #{graphnet_forward.1} parent=1 // pred_check_branch
      %3246 = sbr.rel (0) target = $region37
    $region36: #{graphnet_forward.1} parent=1 // pred_region
      %s3248 = ssub.s32 128, 128
      %3249 = vsyncadd [#allocation6], %s3248
      %s3251 = sshll.u32 [#allocation5], 4
      %s3252 = int_to_ptr.vmem [resolvable:$true] %s3251
      %3254 = dma.vmem_to_hbm [thread:$0]  %s3252, 128, %s8, [#allocation6]
    $region37: #{graphnet_forward.1} parent=1 // pred_fallthru
      _
    // Predicated region
    $region38: #{graphnet_forward.1} parent=1 // pred_check
      _
    $region39: #{graphnet_forward.1} parent=1 // pred_check_branch
      %3256 = sbr.rel (0) target = $region41
    $region40: #{graphnet_forward.1} parent=1 // pred_region
      %s3258 = ssub.s32 512, 512
      %3259 = vsyncadd [#allocation6], %s3258
      %s3261 = sshll.u32 [#allocation7], 4
      %s3262 = int_to_ptr.vmem [resolvable:$true] %s3261
      %3264 = dma.vmem_to_hbm [thread:$0]  %s3262, 512, %s9, [#allocation6]
    $region41: #{graphnet_forward.1} parent=1 // pred_fallthru
      _
    // Predicated region
    $region42: #{graphnet_forward.1} parent=1 // pred_check
      _
    $region43: #{graphnet_forward.1} parent=1 // pred_check_branch
      %3266 = sbr.rel (0) target = $region45
    $region44: #{graphnet_forward.1} parent=1 // pred_region
      _
    $region45: #{graphnet_forward.1} parent=1 // pred_fallthru
      _
    // Predicated region
    $region46: #{graphnet_forward.1} parent=1 // pred_check
      _
    $region47: #{graphnet_forward.1} parent=1 // pred_check_branch
      %3268 = sbr.rel (0) target = $region49
    $region48: #{graphnet_forward.1} parent=1 // pred_region
      %3269 = dma.done [#allocation4], 128
    $region49: #{graphnet_forward.1} parent=1 // pred_fallthru
      _
    // Predicated region
    $region50: #{graphnet_forward.1} parent=1 // pred_check
      _
    $region51: #{graphnet_forward.1} parent=1 // pred_check_branch
      %3271 = sbr.rel (0) target = $region53
    $region52: #{graphnet_forward.1} parent=1 // pred_region
      %3272 = dma.done [#allocation6], 128
    $region53: #{graphnet_forward.1} parent=1 // pred_fallthru
      _
    // Predicated region
    $region54: #{graphnet_forward.1} parent=1 // pred_check
      _
    $region55: #{graphnet_forward.1} parent=1 // pred_check_branch
      %3274 = sbr.rel (0) target = $region57
    $region56: #{graphnet_forward.1} parent=1 // pred_region
      %3275 = dma.done [#allocation6], 512
    $region57: #{graphnet_forward.1} parent=1 // pred_fallthru
      _
    // Predicated region
    $region58: #{graphnet_forward.1} parent=1 // pred_check
      _
    $region59: #{graphnet_forward.1} parent=1 // pred_check_branch
      %3277 = sbr.rel (0) target = $region61
    $region60: #{graphnet_forward.1} parent=1 // pred_region
      _
    $region61: #{graphnet_forward.1} parent=1 // pred_fallthru
      _
    %3278 = vsyncpa [#allocation4], 1
    %3279 = vsyncpa [#allocation6], 1

</llo_original>
